<compile_context>
chip_gen: v7x
topology: tpu7x:2x2x1
jax: 0.10.0
libtpu: 0.0.40
codegen_flags: <defaults>
</compile_context>

<pallas_src>
import jax
import jax.numpy as jnp
from jax import lax
from jax.experimental import pallas as pl
from jax.experimental.pallas import tpu as pltpu


# ----------------------------------------------------------------------------
# Fused Seq2Vec kernel (2-layer bidirectional LSTM + embedding + FC head).
# ----------------------------------------------------------------------------
def _make_seq2vec_kernel(T, B, V, E, H):
    H4, H8 = 4 * H, 8 * H

    def lstm_cell(g, h, c, m):
        # g: (B, 4H) pre-activation gates, PyTorch order i, f, g, o
        i_g = jax.nn.sigmoid(g[:, 0 * H:1 * H])
        f_g = jax.nn.sigmoid(g[:, 1 * H:2 * H])
        g_g = jnp.tanh(g[:, 2 * H:3 * H])
        o_g = jax.nn.sigmoid(g[:, 3 * H:4 * H])
        c_new = f_g * c + i_g * g_g
        h_new = o_g * jnp.tanh(c_new)
        # pack_padded_sequence semantics: state frozen past each row's length.
        c_out = jnp.where(m, c_new, c)
        h_out = jnp.where(m, h_new, h)
        seq_out = jnp.where(m, h_out, 0.0)   # packed output is zero when padded
        return h_out, c_out, seq_out

    def bilstm_layer(x_flat, valid, wih, whh_f, whh_b, b, need_seq):
        # Hoisted input projection for BOTH directions in one wide matmul:
        # (T*B, D_in) @ (D_in, 8H) -> (T*B, 8H); only h @ W_hh stays in the loop.
        gx = jnp.dot(x_flat, wih, preferred_element_type=jnp.float32) + b
        h_f = jnp.zeros((B, H), jnp.float32)
        c_f = jnp.zeros((B, H), jnp.float32)
        h_b = jnp.zeros((B, H), jnp.float32)
        c_b = jnp.zeros((B, H), jnp.float32)
        outs_f = [None] * T
        outs_b = [None] * T
        # Static Python loop: T is small & static -> fully unrolled; the two
        # independent recurrences give the scheduler MXU/EUP/VPU overlap.
        for t in range(T):
            tb = T - 1 - t
            g_f = gx[t * B:(t + 1) * B, 0:H4] + jnp.dot(
                h_f, whh_f, preferred_element_type=jnp.float32)
            g_b = gx[tb * B:(tb + 1) * B, H4:H8] + jnp.dot(
                h_b, whh_b, preferred_element_type=jnp.float32)
            h_f, c_f, o_f = lstm_cell(g_f, h_f, c_f, valid[t])
            h_b, c_b, o_b = lstm_cell(g_b, h_b, c_b, valid[tb])
            if need_seq:
                outs_f[t] = o_f
                outs_b[tb] = o_b
        if need_seq:
            rows = [jnp.concatenate([outs_f[t], outs_b[t]], axis=-1)
                    for t in range(T)]                      # each (B, 2H)
            seq = jnp.concatenate(rows, axis=0)             # (T*B, 2H), time-major
        else:
            seq = None
        return seq, h_f, h_b

    def kernel(text_ref, len_ref, emb_ref,
               wih0_ref, whh0f_ref, whh0b_ref, b0_ref,
               wih1_ref, whh1f_ref, whh1b_ref, b1_ref,
               fc1w_ref, fc1b_ref, fc2w_ref, fc2b_ref,
               out_ref):
        # --- Embedding gather as a one-hot MXU matmul (table is tiny -> VMEM).
        #     padding_idx is handled by the zeroed embedding row.
        ids3 = text_ref[...][:, :, None]                              # (T, B, 1)
        onehot = (ids3 == lax.broadcasted_iota(jnp.int32, (T, B, V), 2)
                  ).astype(jnp.float32)                               # (T, B, V)
        x0 = jnp.dot(onehot.reshape(T * B, V), emb_ref[...],
                     preferred_element_type=jnp.float32)              # (T*B, E)

        # --- Validity mask built ONCE, shaped so per-step slices need no relayout.
        valid = lax.broadcasted_iota(jnp.int32, (T, B, 1), 0) < len_ref[...]

        # --- Layer 0 (bidirectional): sequence output feeds layer 1.
        seq0, _, _ = bilstm_layer(x0, valid, wih0_ref[...],
                                  whh0f_ref[...], whh0b_ref[...],
                                  b0_ref[...], need_seq=True)
        # TODO(synk): inter-layer LSTM dropout is identity in eval mode; omitted.

        # --- Layer 1 (bidirectional): only final hidden states are needed.
        _, h_f1, h_b1 = bilstm_layer(seq0, valid, wih1_ref[...],
                                     whh1f_ref[...], whh1b_ref[...],
                                     b1_ref[...], need_seq=False)

        # --- FC head fused: concat(hidden[-2], hidden[-1]) -> fc1 -> fc2.
        hcat = jnp.concatenate([h_f1, h_b1], axis=-1)                 # (B, 2H)
        hid = jnp.dot(hcat, fc1w_ref[...],
                      preferred_element_type=jnp.float32) + fc1b_ref[...]
        out_ref[...] = (jnp.dot(hid, fc2w_ref[...],
                                preferred_element_type=jnp.float32)
                        + fc2b_ref[...])

    return kernel


def seq2vec_forward(params, text, text_lengths, n_layers=2):
    assert n_layers == 2, "fused kernel is specialized for the 2-layer config"
    T, B = text.shape
    V, E = params['embedding'].shape
    H = params['l0'][1].shape[0]
    kernel = _make_seq2vec_kernel(T, B, V, E, H)
    lengths2d = text_lengths.reshape(B, 1).astype(jnp.int32)

    def vspec(shape):
        nd = len(shape)
        return pl.BlockSpec(shape, lambda i, nd=nd: (0,) * nd)

    wih0, whh0f, whh0b, b0 = params['l0']
    wih1, whh1f, whh1b, b1 = params['l1']
    args = (text.astype(jnp.int32), lengths2d, params['embedding'],
            wih0, whh0f, whh0b, b0,
            wih1, whh1f, whh1b, b1,
            params['fc1_w'], params['fc1_b'], params['fc2_w'], params['fc2_b'])

    return pl.pallas_call(
        kernel,
        out_shape=jax.ShapeDtypeStruct((B, 1), jnp.float32),
        grid=(1,),
        in_specs=[vspec(a.shape) for a in args],
        out_specs=vspec((B, 1)),
        compiler_params=pltpu.CompilerParams(
            dimension_semantics=("arbitrary",)),
    )(*args)


# ----------------------------------------------------------------------------
# Parameters (deterministic, PyTorch-style uniform init), pre-stacked per layer
# so the kernel sees W_ih/bias for both directions as one (D, 8H)/(1, 8H) block.
# ----------------------------------------------------------------------------
def init_params(key, vocab_size, embedding_dim, hidden_dim, n_layers, pad_idx):
    keys = iter(jax.random.split(key, 64))
    k = 1.0 / float(hidden_dim) ** 0.5
    params = {}
    emb = jax.random.normal(next(keys), (vocab_size, embedding_dim), jnp.float32)
    emb = emb.at[pad_idx].set(0.0)          # nn.Embedding padding_idx row is zero
    params['embedding'] = emb
    for layer in range(n_layers):
        d_in = embedding_dim if layer == 0 else 2 * hidden_dim
        per_dir = {}
        for direction in ('fwd', 'bwd'):
            w_ih = jax.random.uniform(next(keys), (d_in, 4 * hidden_dim), jnp.float32, -k, k)
            w_hh = jax.random.uniform(next(keys), (hidden_dim, 4 * hidden_dim), jnp.float32, -k, k)
            b_ih = jax.random.uniform(next(keys), (1, 4 * hidden_dim), jnp.float32, -k, k)
            b_hh = jax.random.uniform(next(keys), (1, 4 * hidden_dim), jnp.float32, -k, k)
            per_dir[direction] = (w_ih, w_hh, b_ih + b_hh)
        wih_stacked = jnp.concatenate([per_dir['fwd'][0], per_dir['bwd'][0]], axis=1)  # (D, 8H)
        b_stacked = jnp.concatenate([per_dir['fwd'][2], per_dir['bwd'][2]], axis=1)    # (1, 8H)
        params[f'l{layer}'] = (wih_stacked, per_dir['fwd'][1], per_dir['bwd'][1], b_stacked)
    k1 = 1.0 / float(2 * hidden_dim) ** 0.5
    params['fc1_w'] = jax.random.uniform(next(keys), (2 * hidden_dim, hidden_dim), jnp.float32, -k1, k1)
    params['fc1_b'] = jax.random.uniform(next(keys), (1, hidden_dim), jnp.float32, -k1, k1)
    k2 = 1.0 / float(hidden_dim) ** 0.5
    params['fc2_w'] = jax.random.uniform(next(keys), (hidden_dim, 1), jnp.float32, -k2, k2)
    params['fc2_b'] = jax.random.uniform(next(keys), (1, 1), jnp.float32, -k2, k2)
    return params


if __name__ == "__main__":
    VOCAB, EMB, HID, N_LAYERS, PAD = 50, 32, 32, 2, 0
    T, B = 8, 8
    key = jax.random.PRNGKey(0)
    k_param, k_text = jax.random.split(key)
    params = init_params(k_param, VOCAB, EMB, HID, N_LAYERS, PAD)

    # lengths sorted descending, as pack_padded_sequence(enforce_sorted=True) requires.
    lengths = jnp.array([8, 8, 7, 6, 5, 4, 3, 2], dtype=jnp.int32)
    tok = jax.random.randint(k_text, (T, B), 1, VOCAB, dtype=jnp.int32)
    t_idx = jnp.arange(T)[:, None]
    text = jnp.where(t_idx < lengths[None, :], tok, PAD)       # (T, B), pad beyond lengths

    fwd = jax.jit(lambda p, t, l: seq2vec_forward(p, t, l, N_LAYERS))
    out = fwd(params, text, lengths)
    jax.block_until_ready(out)
    assert out.shape == (B, 1) and out.dtype == jnp.float32
    print("KERNEL_OK")
</pallas_src>

<mosaic_0001>
module attributes {stable_mosaic.version = 11 : i64} {
  func.func @kernel(%arg0: i32, %arg1: memref<8x8xi32, #tpu.memory_space<vmem>>, %arg2: memref<8x1xi32, #tpu.memory_space<vmem>>, %arg3: memref<50x32xf32, #tpu.memory_space<vmem>>, %arg4: memref<32x256xf32, #tpu.memory_space<vmem>>, %arg5: memref<32x128xf32, #tpu.memory_space<vmem>>, %arg6: memref<32x128xf32, #tpu.memory_space<vmem>>, %arg7: memref<1x256xf32, #tpu.memory_space<vmem>>, %arg8: memref<64x256xf32, #tpu.memory_space<vmem>>, %arg9: memref<32x128xf32, #tpu.memory_space<vmem>>, %arg10: memref<32x128xf32, #tpu.memory_space<vmem>>, %arg11: memref<1x256xf32, #tpu.memory_space<vmem>>, %arg12: memref<64x32xf32, #tpu.memory_space<vmem>>, %arg13: memref<1x32xf32, #tpu.memory_space<vmem>>, %arg14: memref<32x1xf32, #tpu.memory_space<vmem>>, %arg15: memref<1x1xf32, #tpu.memory_space<vmem>>, %arg16: memref<8x1xf32, #tpu.memory_space<vmem>>) attributes {dimension_semantics = [#tpu.dimension_semantics<arbitrary>], iteration_bounds = array<i64: 1>, scalar_prefetch = 0 : i64, scratch_operands = 0 : i64, tpu.core_type = #tpu.core_type<tc>, window_params = [{pipeline_mode = #tpu.pipeline_mode<synchronous>, transform_indices = @transform_0, window_bounds = array<i64: 8, 8>}, {pipeline_mode = #tpu.pipeline_mode<synchronous>, transform_indices = @transform_1, window_bounds = array<i64: 8, 1>}, {pipeline_mode = #tpu.pipeline_mode<synchronous>, transform_indices = @transform_2, window_bounds = array<i64: 50, 32>}, {pipeline_mode = #tpu.pipeline_mode<synchronous>, transform_indices = @transform_3, window_bounds = array<i64: 32, 256>}, {pipeline_mode = #tpu.pipeline_mode<synchronous>, transform_indices = @transform_4, window_bounds = array<i64: 32, 128>}, {pipeline_mode = #tpu.pipeline_mode<synchronous>, transform_indices = @transform_5, window_bounds = array<i64: 32, 128>}, {pipeline_mode = #tpu.pipeline_mode<synchronous>, transform_indices = @transform_6, window_bounds = array<i64: 1, 256>}, {pipeline_mode = #tpu.pipeline_mode<synchronous>, transform_indices = @transform_7, window_bounds = array<i64: 64, 256>}, {pipeline_mode = #tpu.pipeline_mode<synchronous>, transform_indices = @transform_8, window_bounds = array<i64: 32, 128>}, {pipeline_mode = #tpu.pipeline_mode<synchronous>, transform_indices = @transform_9, window_bounds = array<i64: 32, 128>}, {pipeline_mode = #tpu.pipeline_mode<synchronous>, transform_indices = @transform_10, window_bounds = array<i64: 1, 256>}, {pipeline_mode = #tpu.pipeline_mode<synchronous>, transform_indices = @transform_11, window_bounds = array<i64: 64, 32>}, {pipeline_mode = #tpu.pipeline_mode<synchronous>, transform_indices = @transform_12, window_bounds = array<i64: 1, 32>}, {pipeline_mode = #tpu.pipeline_mode<synchronous>, transform_indices = @transform_13, window_bounds = array<i64: 32, 1>}, {pipeline_mode = #tpu.pipeline_mode<synchronous>, transform_indices = @transform_14, window_bounds = array<i64: 1, 1>}, {pipeline_mode = #tpu.pipeline_mode<synchronous>, transform_indices = @transform_15, window_bounds = array<i64: 8, 1>}]} {
    %c0 = arith.constant 0 : index
    %c0_0 = arith.constant 0 : index
    %0 = vector.load %arg1[%c0, %c0_0] : memref<8x8xi32, #tpu.memory_space<vmem>>, vector<8x8xi32>
    %1 = vector.shape_cast %0 : vector<8x8xi32> to vector<8x8x1xi32>
    %2 = tpu.iota {dimensions = array<i32: 2>} : vector<8x8x50xi32>
    %3 = vector.broadcast %1 : vector<8x8x1xi32> to vector<8x8x50xi32>
    %4 = arith.cmpi eq, %3, %2 : vector<8x8x50xi32>
    %5 = arith.extui %4 : vector<8x8x50xi1> to vector<8x8x50xi32>
    %6 = arith.sitofp %5 : vector<8x8x50xi32> to vector<8x8x50xf32>
    %7 = vector.shape_cast %6 : vector<8x8x50xf32> to vector<64x50xf32>
    %c0_1 = arith.constant 0 : index
    %c0_2 = arith.constant 0 : index
    %8 = vector.load %arg3[%c0_1, %c0_2] : memref<50x32xf32, #tpu.memory_space<vmem>>, vector<50x32xf32>
    %cst = arith.constant dense<0.000000e+00> : vector<64x32xf32>
    %9 = tpu.matmul %7, %8, %cst {dimension_numbers = #tpu.dot_dimension_numbers<[1], [0], [0], [1], [0, 0, 1, 1], [], []>} : vector<64x50xf32>, vector<50x32xf32>, vector<64x32xf32> -> vector<64x32xf32>
    %10 = tpu.iota {dimensions = array<i32: 0>} : vector<8x8x1xi32>
    %c0_3 = arith.constant 0 : index
    %c0_4 = arith.constant 0 : index
    %11 = vector.load %arg2[%c0_3, %c0_4] : memref<8x1xi32, #tpu.memory_space<vmem>>, vector<8x1xi32>
    %12 = vector.shape_cast %11 : vector<8x1xi32> to vector<1x8x1xi32>
    %13 = vector.broadcast %12 : vector<1x8x1xi32> to vector<8x8x1xi32>
    %14 = arith.cmpi slt, %10, %13 : vector<8x8x1xi32>
    %c0_5 = arith.constant 0 : index
    %c0_6 = arith.constant 0 : index
    %15 = vector.load %arg4[%c0_5, %c0_6] : memref<32x256xf32, #tpu.memory_space<vmem>>, vector<32x256xf32>
    %c0_7 = arith.constant 0 : index
    %c0_8 = arith.constant 0 : index
    %16 = vector.load %arg5[%c0_7, %c0_8] : memref<32x128xf32, #tpu.memory_space<vmem>>, vector<32x128xf32>
    %c0_9 = arith.constant 0 : index
    %c0_10 = arith.constant 0 : index
    %17 = vector.load %arg6[%c0_9, %c0_10] : memref<32x128xf32, #tpu.memory_space<vmem>>, vector<32x128xf32>
    %c0_11 = arith.constant 0 : index
    %c0_12 = arith.constant 0 : index
    %18 = vector.load %arg7[%c0_11, %c0_12] : memref<1x256xf32, #tpu.memory_space<vmem>>, vector<1x256xf32>
    %cst_13 = arith.constant dense<0.000000e+00> : vector<64x256xf32>
    %19 = tpu.matmul %9, %15, %cst_13 {dimension_numbers = #tpu.dot_dimension_numbers<[1], [0], [0], [1], [0, 0, 1, 1], [], []>} : vector<64x32xf32>, vector<32x256xf32>, vector<64x256xf32> -> vector<64x256xf32>
    %20 = vector.broadcast %18 : vector<1x256xf32> to vector<64x256xf32>
    %21 = arith.addf %19, %20 : vector<64x256xf32>
    %cst_14 = arith.constant 0.000000e+00 : f32
    %22 = vector.broadcast %cst_14 : f32 to vector<8x32xf32>
    %cst_15 = arith.constant 0.000000e+00 : f32
    %23 = vector.broadcast %cst_15 : f32 to vector<8x32xf32>
    %cst_16 = arith.constant 0.000000e+00 : f32
    %24 = vector.broadcast %cst_16 : f32 to vector<8x32xf32>
    %cst_17 = arith.constant 0.000000e+00 : f32
    %25 = vector.broadcast %cst_17 : f32 to vector<8x32xf32>
    %26 = vector.extract_strided_slice %21 {offsets = [0, 0], sizes = [8, 128], strides = [1, 1]} : vector<64x256xf32> to vector<8x128xf32>
    %cst_18 = arith.constant dense<0.000000e+00> : vector<8x128xf32>
    %27 = tpu.matmul %22, %16, %cst_18 {dimension_numbers = #tpu.dot_dimension_numbers<[1], [0], [0], [1], [0, 0, 1, 1], [], []>} : vector<8x32xf32>, vector<32x128xf32>, vector<8x128xf32> -> vector<8x128xf32>
    %28 = arith.addf %26, %27 : vector<8x128xf32>
    %29 = vector.extract_strided_slice %21 {offsets = [56, 128], sizes = [8, 128], strides = [1, 1]} : vector<64x256xf32> to vector<8x128xf32>
    %cst_19 = arith.constant dense<0.000000e+00> : vector<8x128xf32>
    %30 = tpu.matmul %24, %17, %cst_19 {dimension_numbers = #tpu.dot_dimension_numbers<[1], [0], [0], [1], [0, 0, 1, 1], [], []>} : vector<8x32xf32>, vector<32x128xf32>, vector<8x128xf32> -> vector<8x128xf32>
    %31 = arith.addf %29, %30 : vector<8x128xf32>
    %32 = vector.extract_strided_slice %14 {offsets = [0, 0, 0], sizes = [1, 8, 1], strides = [1, 1, 1]} : vector<8x8x1xi1> to vector<1x8x1xi1>
    %33 = vector.shape_cast %32 : vector<1x8x1xi1> to vector<8x1xi1>
    %34 = vector.extract_strided_slice %28 {offsets = [0, 0], sizes = [8, 32], strides = [1, 1]} : vector<8x128xf32> to vector<8x32xf32>
    %35 = arith.negf %34 : vector<8x32xf32>
    %36 = math.exp %35 : vector<8x32xf32>
    %cst_20 = arith.constant 1.000000e+00 : f32
    %37 = vector.broadcast %cst_20 : f32 to vector<8x32xf32>
    %38 = arith.addf %37, %36 : vector<8x32xf32>
    %39 = arith.divf %37, %38 : vector<8x32xf32>
    %40 = vector.extract_strided_slice %28 {offsets = [0, 32], sizes = [8, 32], strides = [1, 1]} : vector<8x128xf32> to vector<8x32xf32>
    %41 = arith.negf %40 : vector<8x32xf32>
    %42 = math.exp %41 : vector<8x32xf32>
    %cst_21 = arith.constant 1.000000e+00 : f32
    %43 = vector.broadcast %cst_21 : f32 to vector<8x32xf32>
    %44 = arith.addf %43, %42 : vector<8x32xf32>
    %45 = arith.divf %43, %44 : vector<8x32xf32>
    %46 = vector.extract_strided_slice %28 {offsets = [0, 64], sizes = [8, 32], strides = [1, 1]} : vector<8x128xf32> to vector<8x32xf32>
    %47 = math.tanh %46 : vector<8x32xf32>
    %48 = vector.extract_strided_slice %28 {offsets = [0, 96], sizes = [8, 32], strides = [1, 1]} : vector<8x128xf32> to vector<8x32xf32>
    %49 = arith.negf %48 : vector<8x32xf32>
    %50 = math.exp %49 : vector<8x32xf32>
    %cst_22 = arith.constant 1.000000e+00 : f32
    %51 = vector.broadcast %cst_22 : f32 to vector<8x32xf32>
    %52 = arith.addf %51, %50 : vector<8x32xf32>
    %53 = arith.divf %51, %52 : vector<8x32xf32>
    %54 = arith.mulf %45, %23 : vector<8x32xf32>
    %55 = arith.mulf %39, %47 : vector<8x32xf32>
    %56 = arith.addf %54, %55 : vector<8x32xf32>
    %57 = math.tanh %56 : vector<8x32xf32>
    %58 = arith.mulf %53, %57 : vector<8x32xf32>
    %59 = vector.shape_cast %33 : vector<8x1xi1> to vector<8x1xi1>
    %60 = vector.broadcast %59 : vector<8x1xi1> to vector<8x32xi1>
    %61 = arith.select %60, %56, %23 : vector<8x32xi1>, vector<8x32xf32>
    %62 = vector.shape_cast %33 : vector<8x1xi1> to vector<8x1xi1>
    %63 = vector.broadcast %62 : vector<8x1xi1> to vector<8x32xi1>
    %64 = arith.select %63, %58, %22 : vector<8x32xi1>, vector<8x32xf32>
    %cst_23 = arith.constant 0.000000e+00 : f32
    %65 = vector.shape_cast %33 : vector<8x1xi1> to vector<8x1xi1>
    %66 = vector.broadcast %65 : vector<8x1xi1> to vector<8x32xi1>
    %67 = vector.broadcast %cst_23 : f32 to vector<8x32xf32>
    %68 = arith.select %66, %64, %67 : vector<8x32xi1>, vector<8x32xf32>
    %69 = vector.extract_strided_slice %14 {offsets = [7, 0, 0], sizes = [1, 8, 1], strides = [1, 1, 1]} : vector<8x8x1xi1> to vector<1x8x1xi1>
    %70 = vector.shape_cast %69 : vector<1x8x1xi1> to vector<8x1xi1>
    %71 = vector.extract_strided_slice %31 {offsets = [0, 0], sizes = [8, 32], strides = [1, 1]} : vector<8x128xf32> to vector<8x32xf32>
    %72 = arith.negf %71 : vector<8x32xf32>
    %73 = math.exp %72 : vector<8x32xf32>
    %cst_24 = arith.constant 1.000000e+00 : f32
    %74 = vector.broadcast %cst_24 : f32 to vector<8x32xf32>
    %75 = arith.addf %74, %73 : vector<8x32xf32>
    %76 = arith.divf %74, %75 : vector<8x32xf32>
    %77 = vector.extract_strided_slice %31 {offsets = [0, 32], sizes = [8, 32], strides = [1, 1]} : vector<8x128xf32> to vector<8x32xf32>
    %78 = arith.negf %77 : vector<8x32xf32>
    %79 = math.exp %78 : vector<8x32xf32>
    %cst_25 = arith.constant 1.000000e+00 : f32
    %80 = vector.broadcast %cst_25 : f32 to vector<8x32xf32>
    %81 = arith.addf %80, %79 : vector<8x32xf32>
    %82 = arith.divf %80, %81 : vector<8x32xf32>
    %83 = vector.extract_strided_slice %31 {offsets = [0, 64], sizes = [8, 32], strides = [1, 1]} : vector<8x128xf32> to vector<8x32xf32>
    %84 = math.tanh %83 : vector<8x32xf32>
    %85 = vector.extract_strided_slice %31 {offsets = [0, 96], sizes = [8, 32], strides = [1, 1]} : vector<8x128xf32> to vector<8x32xf32>
    %86 = arith.negf %85 : vector<8x32xf32>
    %87 = math.exp %86 : vector<8x32xf32>
    %cst_26 = arith.constant 1.000000e+00 : f32
    %88 = vector.broadcast %cst_26 : f32 to vector<8x32xf32>
    %89 = arith.addf %88, %87 : vector<8x32xf32>
    %90 = arith.divf %88, %89 : vector<8x32xf32>
    %91 = arith.mulf %82, %25 : vector<8x32xf32>
    %92 = arith.mulf %76, %84 : vector<8x32xf32>
    %93 = arith.addf %91, %92 : vector<8x32xf32>
    %94 = math.tanh %93 : vector<8x32xf32>
    %95 = arith.mulf %90, %94 : vector<8x32xf32>
    %96 = vector.shape_cast %70 : vector<8x1xi1> to vector<8x1xi1>
    %97 = vector.broadcast %96 : vector<8x1xi1> to vector<8x32xi1>
    %98 = arith.select %97, %93, %25 : vector<8x32xi1>, vector<8x32xf32>
    %99 = vector.shape_cast %70 : vector<8x1xi1> to vector<8x1xi1>
    %100 = vector.broadcast %99 : vector<8x1xi1> to vector<8x32xi1>
    %101 = arith.select %100, %95, %24 : vector<8x32xi1>, vector<8x32xf32>
    %cst_27 = arith.constant 0.000000e+00 : f32
    %102 = vector.shape_cast %70 : vector<8x1xi1> to vector<8x1xi1>
    %103 = vector.broadcast %102 : vector<8x1xi1> to vector<8x32xi1>
    %104 = vector.broadcast %cst_27 : f32 to vector<8x32xf32>
    %105 = arith.select %103, %101, %104 : vector<8x32xi1>, vector<8x32xf32>
    %106 = vector.extract_strided_slice %21 {offsets = [8, 0], sizes = [8, 128], strides = [1, 1]} : vector<64x256xf32> to vector<8x128xf32>
    %cst_28 = arith.constant dense<0.000000e+00> : vector<8x128xf32>
    %107 = tpu.matmul %64, %16, %cst_28 {dimension_numbers = #tpu.dot_dimension_numbers<[1], [0], [0], [1], [0, 0, 1, 1], [], []>} : vector<8x32xf32>, vector<32x128xf32>, vector<8x128xf32> -> vector<8x128xf32>
    %108 = arith.addf %106, %107 : vector<8x128xf32>
    %109 = vector.extract_strided_slice %21 {offsets = [48, 128], sizes = [8, 128], strides = [1, 1]} : vector<64x256xf32> to vector<8x128xf32>
    %cst_29 = arith.constant dense<0.000000e+00> : vector<8x128xf32>
    %110 = tpu.matmul %101, %17, %cst_29 {dimension_numbers = #tpu.dot_dimension_numbers<[1], [0], [0], [1], [0, 0, 1, 1], [], []>} : vector<8x32xf32>, vector<32x128xf32>, vector<8x128xf32> -> vector<8x128xf32>
    %111 = arith.addf %109, %110 : vector<8x128xf32>
    %112 = vector.extract_strided_slice %14 {offsets = [1, 0, 0], sizes = [1, 8, 1], strides = [1, 1, 1]} : vector<8x8x1xi1> to vector<1x8x1xi1>
    %113 = vector.shape_cast %112 : vector<1x8x1xi1> to vector<8x1xi1>
    %114 = vector.extract_strided_slice %108 {offsets = [0, 0], sizes = [8, 32], strides = [1, 1]} : vector<8x128xf32> to vector<8x32xf32>
    %115 = arith.negf %114 : vector<8x32xf32>
    %116 = math.exp %115 : vector<8x32xf32>
    %cst_30 = arith.constant 1.000000e+00 : f32
    %117 = vector.broadcast %cst_30 : f32 to vector<8x32xf32>
    %118 = arith.addf %117, %116 : vector<8x32xf32>
    %119 = arith.divf %117, %118 : vector<8x32xf32>
    %120 = vector.extract_strided_slice %108 {offsets = [0, 32], sizes = [8, 32], strides = [1, 1]} : vector<8x128xf32> to vector<8x32xf32>
    %121 = arith.negf %120 : vector<8x32xf32>
    %122 = math.exp %121 : vector<8x32xf32>
    %cst_31 = arith.constant 1.000000e+00 : f32
    %123 = vector.broadcast %cst_31 : f32 to vector<8x32xf32>
    %124 = arith.addf %123, %122 : vector<8x32xf32>
    %125 = arith.divf %123, %124 : vector<8x32xf32>
    %126 = vector.extract_strided_slice %108 {offsets = [0, 64], sizes = [8, 32], strides = [1, 1]} : vector<8x128xf32> to vector<8x32xf32>
    %127 = math.tanh %126 : vector<8x32xf32>
    %128 = vector.extract_strided_slice %108 {offsets = [0, 96], sizes = [8, 32], strides = [1, 1]} : vector<8x128xf32> to vector<8x32xf32>
    %129 = arith.negf %128 : vector<8x32xf32>
    %130 = math.exp %129 : vector<8x32xf32>
    %cst_32 = arith.constant 1.000000e+00 : f32
    %131 = vector.broadcast %cst_32 : f32 to vector<8x32xf32>
    %132 = arith.addf %131, %130 : vector<8x32xf32>
    %133 = arith.divf %131, %132 : vector<8x32xf32>
    %134 = arith.mulf %125, %61 : vector<8x32xf32>
    %135 = arith.mulf %119, %127 : vector<8x32xf32>
    %136 = arith.addf %134, %135 : vector<8x32xf32>
    %137 = math.tanh %136 : vector<8x32xf32>
    %138 = arith.mulf %133, %137 : vector<8x32xf32>
    %139 = vector.shape_cast %113 : vector<8x1xi1> to vector<8x1xi1>
    %140 = vector.broadcast %139 : vector<8x1xi1> to vector<8x32xi1>
    %141 = arith.select %140, %136, %61 : vector<8x32xi1>, vector<8x32xf32>
    %142 = vector.shape_cast %113 : vector<8x1xi1> to vector<8x1xi1>
    %143 = vector.broadcast %142 : vector<8x1xi1> to vector<8x32xi1>
    %144 = arith.select %143, %138, %64 : vector<8x32xi1>, vector<8x32xf32>
    %cst_33 = arith.constant 0.000000e+00 : f32
    %145 = vector.shape_cast %113 : vector<8x1xi1> to vector<8x1xi1>
    %146 = vector.broadcast %145 : vector<8x1xi1> to vector<8x32xi1>
    %147 = vector.broadcast %cst_33 : f32 to vector<8x32xf32>
    %148 = arith.select %146, %144, %147 : vector<8x32xi1>, vector<8x32xf32>
    %149 = vector.extract_strided_slice %14 {offsets = [6, 0, 0], sizes = [1, 8, 1], strides = [1, 1, 1]} : vector<8x8x1xi1> to vector<1x8x1xi1>
    %150 = vector.shape_cast %149 : vector<1x8x1xi1> to vector<8x1xi1>
    %151 = vector.extract_strided_slice %111 {offsets = [0, 0], sizes = [8, 32], strides = [1, 1]} : vector<8x128xf32> to vector<8x32xf32>
    %152 = arith.negf %151 : vector<8x32xf32>
    %153 = math.exp %152 : vector<8x32xf32>
    %cst_34 = arith.constant 1.000000e+00 : f32
    %154 = vector.broadcast %cst_34 : f32 to vector<8x32xf32>
    %155 = arith.addf %154, %153 : vector<8x32xf32>
    %156 = arith.divf %154, %155 : vector<8x32xf32>
    %157 = vector.extract_strided_slice %111 {offsets = [0, 32], sizes = [8, 32], strides = [1, 1]} : vector<8x128xf32> to vector<8x32xf32>
    %158 = arith.negf %157 : vector<8x32xf32>
    %159 = math.exp %158 : vector<8x32xf32>
    %cst_35 = arith.constant 1.000000e+00 : f32
    %160 = vector.broadcast %cst_35 : f32 to vector<8x32xf32>
    %161 = arith.addf %160, %159 : vector<8x32xf32>
    %162 = arith.divf %160, %161 : vector<8x32xf32>
    %163 = vector.extract_strided_slice %111 {offsets = [0, 64], sizes = [8, 32], strides = [1, 1]} : vector<8x128xf32> to vector<8x32xf32>
    %164 = math.tanh %163 : vector<8x32xf32>
    %165 = vector.extract_strided_slice %111 {offsets = [0, 96], sizes = [8, 32], strides = [1, 1]} : vector<8x128xf32> to vector<8x32xf32>
    %166 = arith.negf %165 : vector<8x32xf32>
    %167 = math.exp %166 : vector<8x32xf32>
    %cst_36 = arith.constant 1.000000e+00 : f32
    %168 = vector.broadcast %cst_36 : f32 to vector<8x32xf32>
    %169 = arith.addf %168, %167 : vector<8x32xf32>
    %170 = arith.divf %168, %169 : vector<8x32xf32>
    %171 = arith.mulf %162, %98 : vector<8x32xf32>
    %172 = arith.mulf %156, %164 : vector<8x32xf32>
    %173 = arith.addf %171, %172 : vector<8x32xf32>
    %174 = math.tanh %173 : vector<8x32xf32>
    %175 = arith.mulf %170, %174 : vector<8x32xf32>
    %176 = vector.shape_cast %150 : vector<8x1xi1> to vector<8x1xi1>
    %177 = vector.broadcast %176 : vector<8x1xi1> to vector<8x32xi1>
    %178 = arith.select %177, %173, %98 : vector<8x32xi1>, vector<8x32xf32>
    %179 = vector.shape_cast %150 : vector<8x1xi1> to vector<8x1xi1>
    %180 = vector.broadcast %179 : vector<8x1xi1> to vector<8x32xi1>
    %181 = arith.select %180, %175, %101 : vector<8x32xi1>, vector<8x32xf32>
    %cst_37 = arith.constant 0.000000e+00 : f32
    %182 = vector.shape_cast %150 : vector<8x1xi1> to vector<8x1xi1>
    %183 = vector.broadcast %182 : vector<8x1xi1> to vector<8x32xi1>
    %184 = vector.broadcast %cst_37 : f32 to vector<8x32xf32>
    %185 = arith.select %183, %181, %184 : vector<8x32xi1>, vector<8x32xf32>
    %186 = vector.extract_strided_slice %21 {offsets = [16, 0], sizes = [8, 128], strides = [1, 1]} : vector<64x256xf32> to vector<8x128xf32>
    %cst_38 = arith.constant dense<0.000000e+00> : vector<8x128xf32>
    %187 = tpu.matmul %144, %16, %cst_38 {dimension_numbers = #tpu.dot_dimension_numbers<[1], [0], [0], [1], [0, 0, 1, 1], [], []>} : vector<8x32xf32>, vector<32x128xf32>, vector<8x128xf32> -> vector<8x128xf32>
    %188 = arith.addf %186, %187 : vector<8x128xf32>
    %189 = vector.extract_strided_slice %21 {offsets = [40, 128], sizes = [8, 128], strides = [1, 1]} : vector<64x256xf32> to vector<8x128xf32>
    %cst_39 = arith.constant dense<0.000000e+00> : vector<8x128xf32>
    %190 = tpu.matmul %181, %17, %cst_39 {dimension_numbers = #tpu.dot_dimension_numbers<[1], [0], [0], [1], [0, 0, 1, 1], [], []>} : vector<8x32xf32>, vector<32x128xf32>, vector<8x128xf32> -> vector<8x128xf32>
    %191 = arith.addf %189, %190 : vector<8x128xf32>
    %192 = vector.extract_strided_slice %14 {offsets = [2, 0, 0], sizes = [1, 8, 1], strides = [1, 1, 1]} : vector<8x8x1xi1> to vector<1x8x1xi1>
    %193 = vector.shape_cast %192 : vector<1x8x1xi1> to vector<8x1xi1>
    %194 = vector.extract_strided_slice %188 {offsets = [0, 0], sizes = [8, 32], strides = [1, 1]} : vector<8x128xf32> to vector<8x32xf32>
    %195 = arith.negf %194 : vector<8x32xf32>
    %196 = math.exp %195 : vector<8x32xf32>
    %cst_40 = arith.constant 1.000000e+00 : f32
    %197 = vector.broadcast %cst_40 : f32 to vector<8x32xf32>
    %198 = arith.addf %197, %196 : vector<8x32xf32>
    %199 = arith.divf %197, %198 : vector<8x32xf32>
    %200 = vector.extract_strided_slice %188 {offsets = [0, 32], sizes = [8, 32], strides = [1, 1]} : vector<8x128xf32> to vector<8x32xf32>
    %201 = arith.negf %200 : vector<8x32xf32>
    %202 = math.exp %201 : vector<8x32xf32>
    %cst_41 = arith.constant 1.000000e+00 : f32
    %203 = vector.broadcast %cst_41 : f32 to vector<8x32xf32>
    %204 = arith.addf %203, %202 : vector<8x32xf32>
    %205 = arith.divf %203, %204 : vector<8x32xf32>
    %206 = vector.extract_strided_slice %188 {offsets = [0, 64], sizes = [8, 32], strides = [1, 1]} : vector<8x128xf32> to vector<8x32xf32>
    %207 = math.tanh %206 : vector<8x32xf32>
    %208 = vector.extract_strided_slice %188 {offsets = [0, 96], sizes = [8, 32], strides = [1, 1]} : vector<8x128xf32> to vector<8x32xf32>
    %209 = arith.negf %208 : vector<8x32xf32>
    %210 = math.exp %209 : vector<8x32xf32>
    %cst_42 = arith.constant 1.000000e+00 : f32
    %211 = vector.broadcast %cst_42 : f32 to vector<8x32xf32>
    %212 = arith.addf %211, %210 : vector<8x32xf32>
    %213 = arith.divf %211, %212 : vector<8x32xf32>
    %214 = arith.mulf %205, %141 : vector<8x32xf32>
    %215 = arith.mulf %199, %207 : vector<8x32xf32>
    %216 = arith.addf %214, %215 : vector<8x32xf32>
    %217 = math.tanh %216 : vector<8x32xf32>
    %218 = arith.mulf %213, %217 : vector<8x32xf32>
    %219 = vector.shape_cast %193 : vector<8x1xi1> to vector<8x1xi1>
    %220 = vector.broadcast %219 : vector<8x1xi1> to vector<8x32xi1>
    %221 = arith.select %220, %216, %141 : vector<8x32xi1>, vector<8x32xf32>
    %222 = vector.shape_cast %193 : vector<8x1xi1> to vector<8x1xi1>
    %223 = vector.broadcast %222 : vector<8x1xi1> to vector<8x32xi1>
    %224 = arith.select %223, %218, %144 : vector<8x32xi1>, vector<8x32xf32>
    %cst_43 = arith.constant 0.000000e+00 : f32
    %225 = vector.shape_cast %193 : vector<8x1xi1> to vector<8x1xi1>
    %226 = vector.broadcast %225 : vector<8x1xi1> to vector<8x32xi1>
    %227 = vector.broadcast %cst_43 : f32 to vector<8x32xf32>
    %228 = arith.select %226, %224, %227 : vector<8x32xi1>, vector<8x32xf32>
    %229 = vector.extract_strided_slice %14 {offsets = [5, 0, 0], sizes = [1, 8, 1], strides = [1, 1, 1]} : vector<8x8x1xi1> to vector<1x8x1xi1>
    %230 = vector.shape_cast %229 : vector<1x8x1xi1> to vector<8x1xi1>
    %231 = vector.extract_strided_slice %191 {offsets = [0, 0], sizes = [8, 32], strides = [1, 1]} : vector<8x128xf32> to vector<8x32xf32>
    %232 = arith.negf %231 : vector<8x32xf32>
    %233 = math.exp %232 : vector<8x32xf32>
    %cst_44 = arith.constant 1.000000e+00 : f32
    %234 = vector.broadcast %cst_44 : f32 to vector<8x32xf32>
    %235 = arith.addf %234, %233 : vector<8x32xf32>
    %236 = arith.divf %234, %235 : vector<8x32xf32>
    %237 = vector.extract_strided_slice %191 {offsets = [0, 32], sizes = [8, 32], strides = [1, 1]} : vector<8x128xf32> to vector<8x32xf32>
    %238 = arith.negf %237 : vector<8x32xf32>
    %239 = math.exp %238 : vector<8x32xf32>
    %cst_45 = arith.constant 1.000000e+00 : f32
    %240 = vector.broadcast %cst_45 : f32 to vector<8x32xf32>
    %241 = arith.addf %240, %239 : vector<8x32xf32>
    %242 = arith.divf %240, %241 : vector<8x32xf32>
    %243 = vector.extract_strided_slice %191 {offsets = [0, 64], sizes = [8, 32], strides = [1, 1]} : vector<8x128xf32> to vector<8x32xf32>
    %244 = math.tanh %243 : vector<8x32xf32>
    %245 = vector.extract_strided_slice %191 {offsets = [0, 96], sizes = [8, 32], strides = [1, 1]} : vector<8x128xf32> to vector<8x32xf32>
    %246 = arith.negf %245 : vector<8x32xf32>
    %247 = math.exp %246 : vector<8x32xf32>
    %cst_46 = arith.constant 1.000000e+00 : f32
    %248 = vector.broadcast %cst_46 : f32 to vector<8x32xf32>
    %249 = arith.addf %248, %247 : vector<8x32xf32>
    %250 = arith.divf %248, %249 : vector<8x32xf32>
    %251 = arith.mulf %242, %178 : vector<8x32xf32>
    %252 = arith.mulf %236, %244 : vector<8x32xf32>
    %253 = arith.addf %251, %252 : vector<8x32xf32>
    %254 = math.tanh %253 : vector<8x32xf32>
    %255 = arith.mulf %250, %254 : vector<8x32xf32>
    %256 = vector.shape_cast %230 : vector<8x1xi1> to vector<8x1xi1>
    %257 = vector.broadcast %256 : vector<8x1xi1> to vector<8x32xi1>
    %258 = arith.select %257, %253, %178 : vector<8x32xi1>, vector<8x32xf32>
    %259 = vector.shape_cast %230 : vector<8x1xi1> to vector<8x1xi1>
    %260 = vector.broadcast %259 : vector<8x1xi1> to vector<8x32xi1>
    %261 = arith.select %260, %255, %181 : vector<8x32xi1>, vector<8x32xf32>
    %cst_47 = arith.constant 0.000000e+00 : f32
    %262 = vector.shape_cast %230 : vector<8x1xi1> to vector<8x1xi1>
    %263 = vector.broadcast %262 : vector<8x1xi1> to vector<8x32xi1>
    %264 = vector.broadcast %cst_47 : f32 to vector<8x32xf32>
    %265 = arith.select %263, %261, %264 : vector<8x32xi1>, vector<8x32xf32>
    %266 = vector.extract_strided_slice %21 {offsets = [24, 0], sizes = [8, 128], strides = [1, 1]} : vector<64x256xf32> to vector<8x128xf32>
    %cst_48 = arith.constant dense<0.000000e+00> : vector<8x128xf32>
    %267 = tpu.matmul %224, %16, %cst_48 {dimension_numbers = #tpu.dot_dimension_numbers<[1], [0], [0], [1], [0, 0, 1, 1], [], []>} : vector<8x32xf32>, vector<32x128xf32>, vector<8x128xf32> -> vector<8x128xf32>
    %268 = arith.addf %266, %267 : vector<8x128xf32>
    %269 = vector.extract_strided_slice %21 {offsets = [32, 128], sizes = [8, 128], strides = [1, 1]} : vector<64x256xf32> to vector<8x128xf32>
    %cst_49 = arith.constant dense<0.000000e+00> : vector<8x128xf32>
    %270 = tpu.matmul %261, %17, %cst_49 {dimension_numbers = #tpu.dot_dimension_numbers<[1], [0], [0], [1], [0, 0, 1, 1], [], []>} : vector<8x32xf32>, vector<32x128xf32>, vector<8x128xf32> -> vector<8x128xf32>
    %271 = arith.addf %269, %270 : vector<8x128xf32>
    %272 = vector.extract_strided_slice %14 {offsets = [3, 0, 0], sizes = [1, 8, 1], strides = [1, 1, 1]} : vector<8x8x1xi1> to vector<1x8x1xi1>
    %273 = vector.shape_cast %272 : vector<1x8x1xi1> to vector<8x1xi1>
    %274 = vector.extract_strided_slice %268 {offsets = [0, 0], sizes = [8, 32], strides = [1, 1]} : vector<8x128xf32> to vector<8x32xf32>
    %275 = arith.negf %274 : vector<8x32xf32>
    %276 = math.exp %275 : vector<8x32xf32>
    %cst_50 = arith.constant 1.000000e+00 : f32
    %277 = vector.broadcast %cst_50 : f32 to vector<8x32xf32>
    %278 = arith.addf %277, %276 : vector<8x32xf32>
    %279 = arith.divf %277, %278 : vector<8x32xf32>
    %280 = vector.extract_strided_slice %268 {offsets = [0, 32], sizes = [8, 32], strides = [1, 1]} : vector<8x128xf32> to vector<8x32xf32>
    %281 = arith.negf %280 : vector<8x32xf32>
    %282 = math.exp %281 : vector<8x32xf32>
    %cst_51 = arith.constant 1.000000e+00 : f32
    %283 = vector.broadcast %cst_51 : f32 to vector<8x32xf32>
    %284 = arith.addf %283, %282 : vector<8x32xf32>
    %285 = arith.divf %283, %284 : vector<8x32xf32>
    %286 = vector.extract_strided_slice %268 {offsets = [0, 64], sizes = [8, 32], strides = [1, 1]} : vector<8x128xf32> to vector<8x32xf32>
    %287 = math.tanh %286 : vector<8x32xf32>
    %288 = vector.extract_strided_slice %268 {offsets = [0, 96], sizes = [8, 32], strides = [1, 1]} : vector<8x128xf32> to vector<8x32xf32>
    %289 = arith.negf %288 : vector<8x32xf32>
    %290 = math.exp %289 : vector<8x32xf32>
    %cst_52 = arith.constant 1.000000e+00 : f32
    %291 = vector.broadcast %cst_52 : f32 to vector<8x32xf32>
    %292 = arith.addf %291, %290 : vector<8x32xf32>
    %293 = arith.divf %291, %292 : vector<8x32xf32>
    %294 = arith.mulf %285, %221 : vector<8x32xf32>
    %295 = arith.mulf %279, %287 : vector<8x32xf32>
    %296 = arith.addf %294, %295 : vector<8x32xf32>
    %297 = math.tanh %296 : vector<8x32xf32>
    %298 = arith.mulf %293, %297 : vector<8x32xf32>
    %299 = vector.shape_cast %273 : vector<8x1xi1> to vector<8x1xi1>
    %300 = vector.broadcast %299 : vector<8x1xi1> to vector<8x32xi1>
    %301 = arith.select %300, %296, %221 : vector<8x32xi1>, vector<8x32xf32>
    %302 = vector.shape_cast %273 : vector<8x1xi1> to vector<8x1xi1>
    %303 = vector.broadcast %302 : vector<8x1xi1> to vector<8x32xi1>
    %304 = arith.select %303, %298, %224 : vector<8x32xi1>, vector<8x32xf32>
    %cst_53 = arith.constant 0.000000e+00 : f32
    %305 = vector.shape_cast %273 : vector<8x1xi1> to vector<8x1xi1>
    %306 = vector.broadcast %305 : vector<8x1xi1> to vector<8x32xi1>
    %307 = vector.broadcast %cst_53 : f32 to vector<8x32xf32>
    %308 = arith.select %306, %304, %307 : vector<8x32xi1>, vector<8x32xf32>
    %309 = vector.extract_strided_slice %14 {offsets = [4, 0, 0], sizes = [1, 8, 1], strides = [1, 1, 1]} : vector<8x8x1xi1> to vector<1x8x1xi1>
    %310 = vector.shape_cast %309 : vector<1x8x1xi1> to vector<8x1xi1>
    %311 = vector.extract_strided_slice %271 {offsets = [0, 0], sizes = [8, 32], strides = [1, 1]} : vector<8x128xf32> to vector<8x32xf32>
    %312 = arith.negf %311 : vector<8x32xf32>
    %313 = math.exp %312 : vector<8x32xf32>
    %cst_54 = arith.constant 1.000000e+00 : f32
    %314 = vector.broadcast %cst_54 : f32 to vector<8x32xf32>
    %315 = arith.addf %314, %313 : vector<8x32xf32>
    %316 = arith.divf %314, %315 : vector<8x32xf32>
    %317 = vector.extract_strided_slice %271 {offsets = [0, 32], sizes = [8, 32], strides = [1, 1]} : vector<8x128xf32> to vector<8x32xf32>
    %318 = arith.negf %317 : vector<8x32xf32>
    %319 = math.exp %318 : vector<8x32xf32>
    %cst_55 = arith.constant 1.000000e+00 : f32
    %320 = vector.broadcast %cst_55 : f32 to vector<8x32xf32>
    %321 = arith.addf %320, %319 : vector<8x32xf32>
    %322 = arith.divf %320, %321 : vector<8x32xf32>
    %323 = vector.extract_strided_slice %271 {offsets = [0, 64], sizes = [8, 32], strides = [1, 1]} : vector<8x128xf32> to vector<8x32xf32>
    %324 = math.tanh %323 : vector<8x32xf32>
    %325 = vector.extract_strided_slice %271 {offsets = [0, 96], sizes = [8, 32], strides = [1, 1]} : vector<8x128xf32> to vector<8x32xf32>
    %326 = arith.negf %325 : vector<8x32xf32>
    %327 = math.exp %326 : vector<8x32xf32>
    %cst_56 = arith.constant 1.000000e+00 : f32
    %328 = vector.broadcast %cst_56 : f32 to vector<8x32xf32>
    %329 = arith.addf %328, %327 : vector<8x32xf32>
    %330 = arith.divf %328, %329 : vector<8x32xf32>
    %331 = arith.mulf %322, %258 : vector<8x32xf32>
    %332 = arith.mulf %316, %324 : vector<8x32xf32>
    %333 = arith.addf %331, %332 : vector<8x32xf32>
    %334 = math.tanh %333 : vector<8x32xf32>
    %335 = arith.mulf %330, %334 : vector<8x32xf32>
    %336 = vector.shape_cast %310 : vector<8x1xi1> to vector<8x1xi1>
    %337 = vector.broadcast %336 : vector<8x1xi1> to vector<8x32xi1>
    %338 = arith.select %337, %333, %258 : vector<8x32xi1>, vector<8x32xf32>
    %339 = vector.shape_cast %310 : vector<8x1xi1> to vector<8x1xi1>
    %340 = vector.broadcast %339 : vector<8x1xi1> to vector<8x32xi1>
    %341 = arith.select %340, %335, %261 : vector<8x32xi1>, vector<8x32xf32>
    %cst_57 = arith.constant 0.000000e+00 : f32
    %342 = vector.shape_cast %310 : vector<8x1xi1> to vector<8x1xi1>
    %343 = vector.broadcast %342 : vector<8x1xi1> to vector<8x32xi1>
    %344 = vector.broadcast %cst_57 : f32 to vector<8x32xf32>
    %345 = arith.select %343, %341, %344 : vector<8x32xi1>, vector<8x32xf32>
    %346 = vector.extract_strided_slice %21 {offsets = [32, 0], sizes = [8, 128], strides = [1, 1]} : vector<64x256xf32> to vector<8x128xf32>
    %cst_58 = arith.constant dense<0.000000e+00> : vector<8x128xf32>
    %347 = tpu.matmul %304, %16, %cst_58 {dimension_numbers = #tpu.dot_dimension_numbers<[1], [0], [0], [1], [0, 0, 1, 1], [], []>} : vector<8x32xf32>, vector<32x128xf32>, vector<8x128xf32> -> vector<8x128xf32>
    %348 = arith.addf %346, %347 : vector<8x128xf32>
    %349 = vector.extract_strided_slice %21 {offsets = [24, 128], sizes = [8, 128], strides = [1, 1]} : vector<64x256xf32> to vector<8x128xf32>
    %cst_59 = arith.constant dense<0.000000e+00> : vector<8x128xf32>
    %350 = tpu.matmul %341, %17, %cst_59 {dimension_numbers = #tpu.dot_dimension_numbers<[1], [0], [0], [1], [0, 0, 1, 1], [], []>} : vector<8x32xf32>, vector<32x128xf32>, vector<8x128xf32> -> vector<8x128xf32>
    %351 = arith.addf %349, %350 : vector<8x128xf32>
    %352 = vector.extract_strided_slice %14 {offsets = [4, 0, 0], sizes = [1, 8, 1], strides = [1, 1, 1]} : vector<8x8x1xi1> to vector<1x8x1xi1>
    %353 = vector.shape_cast %352 : vector<1x8x1xi1> to vector<8x1xi1>
    %354 = vector.extract_strided_slice %348 {offsets = [0, 0], sizes = [8, 32], strides = [1, 1]} : vector<8x128xf32> to vector<8x32xf32>
    %355 = arith.negf %354 : vector<8x32xf32>
    %356 = math.exp %355 : vector<8x32xf32>
    %cst_60 = arith.constant 1.000000e+00 : f32
    %357 = vector.broadcast %cst_60 : f32 to vector<8x32xf32>
    %358 = arith.addf %357, %356 : vector<8x32xf32>
    %359 = arith.divf %357, %358 : vector<8x32xf32>
    %360 = vector.extract_strided_slice %348 {offsets = [0, 32], sizes = [8, 32], strides = [1, 1]} : vector<8x128xf32> to vector<8x32xf32>
    %361 = arith.negf %360 : vector<8x32xf32>
    %362 = math.exp %361 : vector<8x32xf32>
    %cst_61 = arith.constant 1.000000e+00 : f32
    %363 = vector.broadcast %cst_61 : f32 to vector<8x32xf32>
    %364 = arith.addf %363, %362 : vector<8x32xf32>
    %365 = arith.divf %363, %364 : vector<8x32xf32>
    %366 = vector.extract_strided_slice %348 {offsets = [0, 64], sizes = [8, 32], strides = [1, 1]} : vector<8x128xf32> to vector<8x32xf32>
    %367 = math.tanh %366 : vector<8x32xf32>
    %368 = vector.extract_strided_slice %348 {offsets = [0, 96], sizes = [8, 32], strides = [1, 1]} : vector<8x128xf32> to vector<8x32xf32>
    %369 = arith.negf %368 : vector<8x32xf32>
    %370 = math.exp %369 : vector<8x32xf32>
    %cst_62 = arith.constant 1.000000e+00 : f32
    %371 = vector.broadcast %cst_62 : f32 to vector<8x32xf32>
    %372 = arith.addf %371, %370 : vector<8x32xf32>
    %373 = arith.divf %371, %372 : vector<8x32xf32>
    %374 = arith.mulf %365, %301 : vector<8x32xf32>
    %375 = arith.mulf %359, %367 : vector<8x32xf32>
    %376 = arith.addf %374, %375 : vector<8x32xf32>
    %377 = math.tanh %376 : vector<8x32xf32>
    %378 = arith.mulf %373, %377 : vector<8x32xf32>
    %379 = vector.shape_cast %353 : vector<8x1xi1> to vector<8x1xi1>
    %380 = vector.broadcast %379 : vector<8x1xi1> to vector<8x32xi1>
    %381 = arith.select %380, %376, %301 : vector<8x32xi1>, vector<8x32xf32>
    %382 = vector.shape_cast %353 : vector<8x1xi1> to vector<8x1xi1>
    %383 = vector.broadcast %382 : vector<8x1xi1> to vector<8x32xi1>
    %384 = arith.select %383, %378, %304 : vector<8x32xi1>, vector<8x32xf32>
    %cst_63 = arith.constant 0.000000e+00 : f32
    %385 = vector.shape_cast %353 : vector<8x1xi1> to vector<8x1xi1>
    %386 = vector.broadcast %385 : vector<8x1xi1> to vector<8x32xi1>
    %387 = vector.broadcast %cst_63 : f32 to vector<8x32xf32>
    %388 = arith.select %386, %384, %387 : vector<8x32xi1>, vector<8x32xf32>
    %389 = vector.extract_strided_slice %14 {offsets = [3, 0, 0], sizes = [1, 8, 1], strides = [1, 1, 1]} : vector<8x8x1xi1> to vector<1x8x1xi1>
    %390 = vector.shape_cast %389 : vector<1x8x1xi1> to vector<8x1xi1>
    %391 = vector.extract_strided_slice %351 {offsets = [0, 0], sizes = [8, 32], strides = [1, 1]} : vector<8x128xf32> to vector<8x32xf32>
    %392 = arith.negf %391 : vector<8x32xf32>
    %393 = math.exp %392 : vector<8x32xf32>
    %cst_64 = arith.constant 1.000000e+00 : f32
    %394 = vector.broadcast %cst_64 : f32 to vector<8x32xf32>
    %395 = arith.addf %394, %393 : vector<8x32xf32>
    %396 = arith.divf %394, %395 : vector<8x32xf32>
    %397 = vector.extract_strided_slice %351 {offsets = [0, 32], sizes = [8, 32], strides = [1, 1]} : vector<8x128xf32> to vector<8x32xf32>
    %398 = arith.negf %397 : vector<8x32xf32>
    %399 = math.exp %398 : vector<8x32xf32>
    %cst_65 = arith.constant 1.000000e+00 : f32
    %400 = vector.broadcast %cst_65 : f32 to vector<8x32xf32>
    %401 = arith.addf %400, %399 : vector<8x32xf32>
    %402 = arith.divf %400, %401 : vector<8x32xf32>
    %403 = vector.extract_strided_slice %351 {offsets = [0, 64], sizes = [8, 32], strides = [1, 1]} : vector<8x128xf32> to vector<8x32xf32>
    %404 = math.tanh %403 : vector<8x32xf32>
    %405 = vector.extract_strided_slice %351 {offsets = [0, 96], sizes = [8, 32], strides = [1, 1]} : vector<8x128xf32> to vector<8x32xf32>
    %406 = arith.negf %405 : vector<8x32xf32>
    %407 = math.exp %406 : vector<8x32xf32>
    %cst_66 = arith.constant 1.000000e+00 : f32
    %408 = vector.broadcast %cst_66 : f32 to vector<8x32xf32>
    %409 = arith.addf %408, %407 : vector<8x32xf32>
    %410 = arith.divf %408, %409 : vector<8x32xf32>
    %411 = arith.mulf %402, %338 : vector<8x32xf32>
    %412 = arith.mulf %396, %404 : vector<8x32xf32>
    %413 = arith.addf %411, %412 : vector<8x32xf32>
    %414 = math.tanh %413 : vector<8x32xf32>
    %415 = arith.mulf %410, %414 : vector<8x32xf32>
    %416 = vector.shape_cast %390 : vector<8x1xi1> to vector<8x1xi1>
    %417 = vector.broadcast %416 : vector<8x1xi1> to vector<8x32xi1>
    %418 = arith.select %417, %413, %338 : vector<8x32xi1>, vector<8x32xf32>
    %419 = vector.shape_cast %390 : vector<8x1xi1> to vector<8x1xi1>
    %420 = vector.broadcast %419 : vector<8x1xi1> to vector<8x32xi1>
    %421 = arith.select %420, %415, %341 : vector<8x32xi1>, vector<8x32xf32>
    %cst_67 = arith.constant 0.000000e+00 : f32
    %422 = vector.shape_cast %390 : vector<8x1xi1> to vector<8x1xi1>
    %423 = vector.broadcast %422 : vector<8x1xi1> to vector<8x32xi1>
    %424 = vector.broadcast %cst_67 : f32 to vector<8x32xf32>
    %425 = arith.select %423, %421, %424 : vector<8x32xi1>, vector<8x32xf32>
    %426 = vector.extract_strided_slice %21 {offsets = [40, 0], sizes = [8, 128], strides = [1, 1]} : vector<64x256xf32> to vector<8x128xf32>
    %cst_68 = arith.constant dense<0.000000e+00> : vector<8x128xf32>
    %427 = tpu.matmul %384, %16, %cst_68 {dimension_numbers = #tpu.dot_dimension_numbers<[1], [0], [0], [1], [0, 0, 1, 1], [], []>} : vector<8x32xf32>, vector<32x128xf32>, vector<8x128xf32> -> vector<8x128xf32>
    %428 = arith.addf %426, %427 : vector<8x128xf32>
    %429 = vector.extract_strided_slice %21 {offsets = [16, 128], sizes = [8, 128], strides = [1, 1]} : vector<64x256xf32> to vector<8x128xf32>
    %cst_69 = arith.constant dense<0.000000e+00> : vector<8x128xf32>
    %430 = tpu.matmul %421, %17, %cst_69 {dimension_numbers = #tpu.dot_dimension_numbers<[1], [0], [0], [1], [0, 0, 1, 1], [], []>} : vector<8x32xf32>, vector<32x128xf32>, vector<8x128xf32> -> vector<8x128xf32>
    %431 = arith.addf %429, %430 : vector<8x128xf32>
    %432 = vector.extract_strided_slice %14 {offsets = [5, 0, 0], sizes = [1, 8, 1], strides = [1, 1, 1]} : vector<8x8x1xi1> to vector<1x8x1xi1>
    %433 = vector.shape_cast %432 : vector<1x8x1xi1> to vector<8x1xi1>
    %434 = vector.extract_strided_slice %428 {offsets = [0, 0], sizes = [8, 32], strides = [1, 1]} : vector<8x128xf32> to vector<8x32xf32>
    %435 = arith.negf %434 : vector<8x32xf32>
    %436 = math.exp %435 : vector<8x32xf32>
    %cst_70 = arith.constant 1.000000e+00 : f32
    %437 = vector.broadcast %cst_70 : f32 to vector<8x32xf32>
    %438 = arith.addf %437, %436 : vector<8x32xf32>
    %439 = arith.divf %437, %438 : vector<8x32xf32>
    %440 = vector.extract_strided_slice %428 {offsets = [0, 32], sizes = [8, 32], strides = [1, 1]} : vector<8x128xf32> to vector<8x32xf32>
    %441 = arith.negf %440 : vector<8x32xf32>
    %442 = math.exp %441 : vector<8x32xf32>
    %cst_71 = arith.constant 1.000000e+00 : f32
    %443 = vector.broadcast %cst_71 : f32 to vector<8x32xf32>
    %444 = arith.addf %443, %442 : vector<8x32xf32>
    %445 = arith.divf %443, %444 : vector<8x32xf32>
    %446 = vector.extract_strided_slice %428 {offsets = [0, 64], sizes = [8, 32], strides = [1, 1]} : vector<8x128xf32> to vector<8x32xf32>
    %447 = math.tanh %446 : vector<8x32xf32>
    %448 = vector.extract_strided_slice %428 {offsets = [0, 96], sizes = [8, 32], strides = [1, 1]} : vector<8x128xf32> to vector<8x32xf32>
    %449 = arith.negf %448 : vector<8x32xf32>
    %450 = math.exp %449 : vector<8x32xf32>
    %cst_72 = arith.constant 1.000000e+00 : f32
    %451 = vector.broadcast %cst_72 : f32 to vector<8x32xf32>
    %452 = arith.addf %451, %450 : vector<8x32xf32>
    %453 = arith.divf %451, %452 : vector<8x32xf32>
    %454 = arith.mulf %445, %381 : vector<8x32xf32>
    %455 = arith.mulf %439, %447 : vector<8x32xf32>
    %456 = arith.addf %454, %455 : vector<8x32xf32>
    %457 = math.tanh %456 : vector<8x32xf32>
    %458 = arith.mulf %453, %457 : vector<8x32xf32>
    %459 = vector.shape_cast %433 : vector<8x1xi1> to vector<8x1xi1>
    %460 = vector.broadcast %459 : vector<8x1xi1> to vector<8x32xi1>
    %461 = arith.select %460, %456, %381 : vector<8x32xi1>, vector<8x32xf32>
    %462 = vector.shape_cast %433 : vector<8x1xi1> to vector<8x1xi1>
    %463 = vector.broadcast %462 : vector<8x1xi1> to vector<8x32xi1>
    %464 = arith.select %463, %458, %384 : vector<8x32xi1>, vector<8x32xf32>
    %cst_73 = arith.constant 0.000000e+00 : f32
    %465 = vector.shape_cast %433 : vector<8x1xi1> to vector<8x1xi1>
    %466 = vector.broadcast %465 : vector<8x1xi1> to vector<8x32xi1>
    %467 = vector.broadcast %cst_73 : f32 to vector<8x32xf32>
    %468 = arith.select %466, %464, %467 : vector<8x32xi1>, vector<8x32xf32>
    %469 = vector.extract_strided_slice %14 {offsets = [2, 0, 0], sizes = [1, 8, 1], strides = [1, 1, 1]} : vector<8x8x1xi1> to vector<1x8x1xi1>
    %470 = vector.shape_cast %469 : vector<1x8x1xi1> to vector<8x1xi1>
    %471 = vector.extract_strided_slice %431 {offsets = [0, 0], sizes = [8, 32], strides = [1, 1]} : vector<8x128xf32> to vector<8x32xf32>
    %472 = arith.negf %471 : vector<8x32xf32>
    %473 = math.exp %472 : vector<8x32xf32>
    %cst_74 = arith.constant 1.000000e+00 : f32
    %474 = vector.broadcast %cst_74 : f32 to vector<8x32xf32>
    %475 = arith.addf %474, %473 : vector<8x32xf32>
    %476 = arith.divf %474, %475 : vector<8x32xf32>
    %477 = vector.extract_strided_slice %431 {offsets = [0, 32], sizes = [8, 32], strides = [1, 1]} : vector<8x128xf32> to vector<8x32xf32>
    %478 = arith.negf %477 : vector<8x32xf32>
    %479 = math.exp %478 : vector<8x32xf32>
    %cst_75 = arith.constant 1.000000e+00 : f32
    %480 = vector.broadcast %cst_75 : f32 to vector<8x32xf32>
    %481 = arith.addf %480, %479 : vector<8x32xf32>
    %482 = arith.divf %480, %481 : vector<8x32xf32>
    %483 = vector.extract_strided_slice %431 {offsets = [0, 64], sizes = [8, 32], strides = [1, 1]} : vector<8x128xf32> to vector<8x32xf32>
    %484 = math.tanh %483 : vector<8x32xf32>
    %485 = vector.extract_strided_slice %431 {offsets = [0, 96], sizes = [8, 32], strides = [1, 1]} : vector<8x128xf32> to vector<8x32xf32>
    %486 = arith.negf %485 : vector<8x32xf32>
    %487 = math.exp %486 : vector<8x32xf32>
    %cst_76 = arith.constant 1.000000e+00 : f32
    %488 = vector.broadcast %cst_76 : f32 to vector<8x32xf32>
    %489 = arith.addf %488, %487 : vector<8x32xf32>
    %490 = arith.divf %488, %489 : vector<8x32xf32>
    %491 = arith.mulf %482, %418 : vector<8x32xf32>
    %492 = arith.mulf %476, %484 : vector<8x32xf32>
    %493 = arith.addf %491, %492 : vector<8x32xf32>
    %494 = math.tanh %493 : vector<8x32xf32>
    %495 = arith.mulf %490, %494 : vector<8x32xf32>
    %496 = vector.shape_cast %470 : vector<8x1xi1> to vector<8x1xi1>
    %497 = vector.broadcast %496 : vector<8x1xi1> to vector<8x32xi1>
    %498 = arith.select %497, %493, %418 : vector<8x32xi1>, vector<8x32xf32>
    %499 = vector.shape_cast %470 : vector<8x1xi1> to vector<8x1xi1>
    %500 = vector.broadcast %499 : vector<8x1xi1> to vector<8x32xi1>
    %501 = arith.select %500, %495, %421 : vector<8x32xi1>, vector<8x32xf32>
    %cst_77 = arith.constant 0.000000e+00 : f32
    %502 = vector.shape_cast %470 : vector<8x1xi1> to vector<8x1xi1>
    %503 = vector.broadcast %502 : vector<8x1xi1> to vector<8x32xi1>
    %504 = vector.broadcast %cst_77 : f32 to vector<8x32xf32>
    %505 = arith.select %503, %501, %504 : vector<8x32xi1>, vector<8x32xf32>
    %506 = vector.extract_strided_slice %21 {offsets = [48, 0], sizes = [8, 128], strides = [1, 1]} : vector<64x256xf32> to vector<8x128xf32>
    %cst_78 = arith.constant dense<0.000000e+00> : vector<8x128xf32>
    %507 = tpu.matmul %464, %16, %cst_78 {dimension_numbers = #tpu.dot_dimension_numbers<[1], [0], [0], [1], [0, 0, 1, 1], [], []>} : vector<8x32xf32>, vector<32x128xf32>, vector<8x128xf32> -> vector<8x128xf32>
    %508 = arith.addf %506, %507 : vector<8x128xf32>
    %509 = vector.extract_strided_slice %21 {offsets = [8, 128], sizes = [8, 128], strides = [1, 1]} : vector<64x256xf32> to vector<8x128xf32>
    %cst_79 = arith.constant dense<0.000000e+00> : vector<8x128xf32>
    %510 = tpu.matmul %501, %17, %cst_79 {dimension_numbers = #tpu.dot_dimension_numbers<[1], [0], [0], [1], [0, 0, 1, 1], [], []>} : vector<8x32xf32>, vector<32x128xf32>, vector<8x128xf32> -> vector<8x128xf32>
    %511 = arith.addf %509, %510 : vector<8x128xf32>
    %512 = vector.extract_strided_slice %14 {offsets = [6, 0, 0], sizes = [1, 8, 1], strides = [1, 1, 1]} : vector<8x8x1xi1> to vector<1x8x1xi1>
    %513 = vector.shape_cast %512 : vector<1x8x1xi1> to vector<8x1xi1>
    %514 = vector.extract_strided_slice %508 {offsets = [0, 0], sizes = [8, 32], strides = [1, 1]} : vector<8x128xf32> to vector<8x32xf32>
    %515 = arith.negf %514 : vector<8x32xf32>
    %516 = math.exp %515 : vector<8x32xf32>
    %cst_80 = arith.constant 1.000000e+00 : f32
    %517 = vector.broadcast %cst_80 : f32 to vector<8x32xf32>
    %518 = arith.addf %517, %516 : vector<8x32xf32>
    %519 = arith.divf %517, %518 : vector<8x32xf32>
    %520 = vector.extract_strided_slice %508 {offsets = [0, 32], sizes = [8, 32], strides = [1, 1]} : vector<8x128xf32> to vector<8x32xf32>
    %521 = arith.negf %520 : vector<8x32xf32>
    %522 = math.exp %521 : vector<8x32xf32>
    %cst_81 = arith.constant 1.000000e+00 : f32
    %523 = vector.broadcast %cst_81 : f32 to vector<8x32xf32>
    %524 = arith.addf %523, %522 : vector<8x32xf32>
    %525 = arith.divf %523, %524 : vector<8x32xf32>
    %526 = vector.extract_strided_slice %508 {offsets = [0, 64], sizes = [8, 32], strides = [1, 1]} : vector<8x128xf32> to vector<8x32xf32>
    %527 = math.tanh %526 : vector<8x32xf32>
    %528 = vector.extract_strided_slice %508 {offsets = [0, 96], sizes = [8, 32], strides = [1, 1]} : vector<8x128xf32> to vector<8x32xf32>
    %529 = arith.negf %528 : vector<8x32xf32>
    %530 = math.exp %529 : vector<8x32xf32>
    %cst_82 = arith.constant 1.000000e+00 : f32
    %531 = vector.broadcast %cst_82 : f32 to vector<8x32xf32>
    %532 = arith.addf %531, %530 : vector<8x32xf32>
    %533 = arith.divf %531, %532 : vector<8x32xf32>
    %534 = arith.mulf %525, %461 : vector<8x32xf32>
    %535 = arith.mulf %519, %527 : vector<8x32xf32>
    %536 = arith.addf %534, %535 : vector<8x32xf32>
    %537 = math.tanh %536 : vector<8x32xf32>
    %538 = arith.mulf %533, %537 : vector<8x32xf32>
    %539 = vector.shape_cast %513 : vector<8x1xi1> to vector<8x1xi1>
    %540 = vector.broadcast %539 : vector<8x1xi1> to vector<8x32xi1>
    %541 = arith.select %540, %536, %461 : vector<8x32xi1>, vector<8x32xf32>
    %542 = vector.shape_cast %513 : vector<8x1xi1> to vector<8x1xi1>
    %543 = vector.broadcast %542 : vector<8x1xi1> to vector<8x32xi1>
    %544 = arith.select %543, %538, %464 : vector<8x32xi1>, vector<8x32xf32>
    %cst_83 = arith.constant 0.000000e+00 : f32
    %545 = vector.shape_cast %513 : vector<8x1xi1> to vector<8x1xi1>
    %546 = vector.broadcast %545 : vector<8x1xi1> to vector<8x32xi1>
    %547 = vector.broadcast %cst_83 : f32 to vector<8x32xf32>
    %548 = arith.select %546, %544, %547 : vector<8x32xi1>, vector<8x32xf32>
    %549 = vector.extract_strided_slice %14 {offsets = [1, 0, 0], sizes = [1, 8, 1], strides = [1, 1, 1]} : vector<8x8x1xi1> to vector<1x8x1xi1>
    %550 = vector.shape_cast %549 : vector<1x8x1xi1> to vector<8x1xi1>
    %551 = vector.extract_strided_slice %511 {offsets = [0, 0], sizes = [8, 32], strides = [1, 1]} : vector<8x128xf32> to vector<8x32xf32>
    %552 = arith.negf %551 : vector<8x32xf32>
    %553 = math.exp %552 : vector<8x32xf32>
    %cst_84 = arith.constant 1.000000e+00 : f32
    %554 = vector.broadcast %cst_84 : f32 to vector<8x32xf32>
    %555 = arith.addf %554, %553 : vector<8x32xf32>
    %556 = arith.divf %554, %555 : vector<8x32xf32>
    %557 = vector.extract_strided_slice %511 {offsets = [0, 32], sizes = [8, 32], strides = [1, 1]} : vector<8x128xf32> to vector<8x32xf32>
    %558 = arith.negf %557 : vector<8x32xf32>
    %559 = math.exp %558 : vector<8x32xf32>
    %cst_85 = arith.constant 1.000000e+00 : f32
    %560 = vector.broadcast %cst_85 : f32 to vector<8x32xf32>
    %561 = arith.addf %560, %559 : vector<8x32xf32>
    %562 = arith.divf %560, %561 : vector<8x32xf32>
    %563 = vector.extract_strided_slice %511 {offsets = [0, 64], sizes = [8, 32], strides = [1, 1]} : vector<8x128xf32> to vector<8x32xf32>
    %564 = math.tanh %563 : vector<8x32xf32>
    %565 = vector.extract_strided_slice %511 {offsets = [0, 96], sizes = [8, 32], strides = [1, 1]} : vector<8x128xf32> to vector<8x32xf32>
    %566 = arith.negf %565 : vector<8x32xf32>
    %567 = math.exp %566 : vector<8x32xf32>
    %cst_86 = arith.constant 1.000000e+00 : f32
    %568 = vector.broadcast %cst_86 : f32 to vector<8x32xf32>
    %569 = arith.addf %568, %567 : vector<8x32xf32>
    %570 = arith.divf %568, %569 : vector<8x32xf32>
    %571 = arith.mulf %562, %498 : vector<8x32xf32>
    %572 = arith.mulf %556, %564 : vector<8x32xf32>
    %573 = arith.addf %571, %572 : vector<8x32xf32>
    %574 = math.tanh %573 : vector<8x32xf32>
    %575 = arith.mulf %570, %574 : vector<8x32xf32>
    %576 = vector.shape_cast %550 : vector<8x1xi1> to vector<8x1xi1>
    %577 = vector.broadcast %576 : vector<8x1xi1> to vector<8x32xi1>
    %578 = arith.select %577, %573, %498 : vector<8x32xi1>, vector<8x32xf32>
    %579 = vector.shape_cast %550 : vector<8x1xi1> to vector<8x1xi1>
    %580 = vector.broadcast %579 : vector<8x1xi1> to vector<8x32xi1>
    %581 = arith.select %580, %575, %501 : vector<8x32xi1>, vector<8x32xf32>
    %cst_87 = arith.constant 0.000000e+00 : f32
    %582 = vector.shape_cast %550 : vector<8x1xi1> to vector<8x1xi1>
    %583 = vector.broadcast %582 : vector<8x1xi1> to vector<8x32xi1>
    %584 = vector.broadcast %cst_87 : f32 to vector<8x32xf32>
    %585 = arith.select %583, %581, %584 : vector<8x32xi1>, vector<8x32xf32>
    %586 = vector.extract_strided_slice %21 {offsets = [56, 0], sizes = [8, 128], strides = [1, 1]} : vector<64x256xf32> to vector<8x128xf32>
    %cst_88 = arith.constant dense<0.000000e+00> : vector<8x128xf32>
    %587 = tpu.matmul %544, %16, %cst_88 {dimension_numbers = #tpu.dot_dimension_numbers<[1], [0], [0], [1], [0, 0, 1, 1], [], []>} : vector<8x32xf32>, vector<32x128xf32>, vector<8x128xf32> -> vector<8x128xf32>
    %588 = arith.addf %586, %587 : vector<8x128xf32>
    %589 = vector.extract_strided_slice %21 {offsets = [0, 128], sizes = [8, 128], strides = [1, 1]} : vector<64x256xf32> to vector<8x128xf32>
    %cst_89 = arith.constant dense<0.000000e+00> : vector<8x128xf32>
    %590 = tpu.matmul %581, %17, %cst_89 {dimension_numbers = #tpu.dot_dimension_numbers<[1], [0], [0], [1], [0, 0, 1, 1], [], []>} : vector<8x32xf32>, vector<32x128xf32>, vector<8x128xf32> -> vector<8x128xf32>
    %591 = arith.addf %589, %590 : vector<8x128xf32>
    %592 = vector.extract_strided_slice %14 {offsets = [7, 0, 0], sizes = [1, 8, 1], strides = [1, 1, 1]} : vector<8x8x1xi1> to vector<1x8x1xi1>
    %593 = vector.shape_cast %592 : vector<1x8x1xi1> to vector<8x1xi1>
    %594 = vector.extract_strided_slice %588 {offsets = [0, 0], sizes = [8, 32], strides = [1, 1]} : vector<8x128xf32> to vector<8x32xf32>
    %595 = arith.negf %594 : vector<8x32xf32>
    %596 = math.exp %595 : vector<8x32xf32>
    %cst_90 = arith.constant 1.000000e+00 : f32
    %597 = vector.broadcast %cst_90 : f32 to vector<8x32xf32>
    %598 = arith.addf %597, %596 : vector<8x32xf32>
    %599 = arith.divf %597, %598 : vector<8x32xf32>
    %600 = vector.extract_strided_slice %588 {offsets = [0, 32], sizes = [8, 32], strides = [1, 1]} : vector<8x128xf32> to vector<8x32xf32>
    %601 = arith.negf %600 : vector<8x32xf32>
    %602 = math.exp %601 : vector<8x32xf32>
    %cst_91 = arith.constant 1.000000e+00 : f32
    %603 = vector.broadcast %cst_91 : f32 to vector<8x32xf32>
    %604 = arith.addf %603, %602 : vector<8x32xf32>
    %605 = arith.divf %603, %604 : vector<8x32xf32>
    %606 = vector.extract_strided_slice %588 {offsets = [0, 64], sizes = [8, 32], strides = [1, 1]} : vector<8x128xf32> to vector<8x32xf32>
    %607 = math.tanh %606 : vector<8x32xf32>
    %608 = vector.extract_strided_slice %588 {offsets = [0, 96], sizes = [8, 32], strides = [1, 1]} : vector<8x128xf32> to vector<8x32xf32>
    %609 = arith.negf %608 : vector<8x32xf32>
    %610 = math.exp %609 : vector<8x32xf32>
    %cst_92 = arith.constant 1.000000e+00 : f32
    %611 = vector.broadcast %cst_92 : f32 to vector<8x32xf32>
    %612 = arith.addf %611, %610 : vector<8x32xf32>
    %613 = arith.divf %611, %612 : vector<8x32xf32>
    %614 = arith.mulf %605, %541 : vector<8x32xf32>
    %615 = arith.mulf %599, %607 : vector<8x32xf32>
    %616 = arith.addf %614, %615 : vector<8x32xf32>
    %617 = math.tanh %616 : vector<8x32xf32>
    %618 = arith.mulf %613, %617 : vector<8x32xf32>
    %619 = vector.shape_cast %593 : vector<8x1xi1> to vector<8x1xi1>
    %620 = vector.broadcast %619 : vector<8x1xi1> to vector<8x32xi1>
    %621 = arith.select %620, %618, %544 : vector<8x32xi1>, vector<8x32xf32>
    %cst_93 = arith.constant 0.000000e+00 : f32
    %622 = vector.shape_cast %593 : vector<8x1xi1> to vector<8x1xi1>
    %623 = vector.broadcast %622 : vector<8x1xi1> to vector<8x32xi1>
    %624 = vector.broadcast %cst_93 : f32 to vector<8x32xf32>
    %625 = arith.select %623, %621, %624 : vector<8x32xi1>, vector<8x32xf32>
    %626 = vector.extract_strided_slice %14 {offsets = [0, 0, 0], sizes = [1, 8, 1], strides = [1, 1, 1]} : vector<8x8x1xi1> to vector<1x8x1xi1>
    %627 = vector.shape_cast %626 : vector<1x8x1xi1> to vector<8x1xi1>
    %628 = vector.extract_strided_slice %591 {offsets = [0, 0], sizes = [8, 32], strides = [1, 1]} : vector<8x128xf32> to vector<8x32xf32>
    %629 = arith.negf %628 : vector<8x32xf32>
    %630 = math.exp %629 : vector<8x32xf32>
    %cst_94 = arith.constant 1.000000e+00 : f32
    %631 = vector.broadcast %cst_94 : f32 to vector<8x32xf32>
    %632 = arith.addf %631, %630 : vector<8x32xf32>
    %633 = arith.divf %631, %632 : vector<8x32xf32>
    %634 = vector.extract_strided_slice %591 {offsets = [0, 32], sizes = [8, 32], strides = [1, 1]} : vector<8x128xf32> to vector<8x32xf32>
    %635 = arith.negf %634 : vector<8x32xf32>
    %636 = math.exp %635 : vector<8x32xf32>
    %cst_95 = arith.constant 1.000000e+00 : f32
    %637 = vector.broadcast %cst_95 : f32 to vector<8x32xf32>
    %638 = arith.addf %637, %636 : vector<8x32xf32>
    %639 = arith.divf %637, %638 : vector<8x32xf32>
    %640 = vector.extract_strided_slice %591 {offsets = [0, 64], sizes = [8, 32], strides = [1, 1]} : vector<8x128xf32> to vector<8x32xf32>
    %641 = math.tanh %640 : vector<8x32xf32>
    %642 = vector.extract_strided_slice %591 {offsets = [0, 96], sizes = [8, 32], strides = [1, 1]} : vector<8x128xf32> to vector<8x32xf32>
    %643 = arith.negf %642 : vector<8x32xf32>
    %644 = math.exp %643 : vector<8x32xf32>
    %cst_96 = arith.constant 1.000000e+00 : f32
    %645 = vector.broadcast %cst_96 : f32 to vector<8x32xf32>
    %646 = arith.addf %645, %644 : vector<8x32xf32>
    %647 = arith.divf %645, %646 : vector<8x32xf32>
    %648 = arith.mulf %639, %578 : vector<8x32xf32>
    %649 = arith.mulf %633, %641 : vector<8x32xf32>
    %650 = arith.addf %648, %649 : vector<8x32xf32>
    %651 = math.tanh %650 : vector<8x32xf32>
    %652 = arith.mulf %647, %651 : vector<8x32xf32>
    %653 = vector.shape_cast %627 : vector<8x1xi1> to vector<8x1xi1>
    %654 = vector.broadcast %653 : vector<8x1xi1> to vector<8x32xi1>
    %655 = arith.select %654, %652, %581 : vector<8x32xi1>, vector<8x32xf32>
    %cst_97 = arith.constant 0.000000e+00 : f32
    %656 = vector.shape_cast %627 : vector<8x1xi1> to vector<8x1xi1>
    %657 = vector.broadcast %656 : vector<8x1xi1> to vector<8x32xi1>
    %658 = vector.broadcast %cst_97 : f32 to vector<8x32xf32>
    %659 = arith.select %657, %655, %658 : vector<8x32xi1>, vector<8x32xf32>
    %660 = tpu.concatenate %68, %659 in 1 : vector<8x32xf32>, vector<8x32xf32> -> vector<8x64xf32>
    %661 = tpu.concatenate %148, %585 in 1 : vector<8x32xf32>, vector<8x32xf32> -> vector<8x64xf32>
    %662 = tpu.concatenate %228, %505 in 1 : vector<8x32xf32>, vector<8x32xf32> -> vector<8x64xf32>
    %663 = tpu.concatenate %308, %425 in 1 : vector<8x32xf32>, vector<8x32xf32> -> vector<8x64xf32>
    %664 = tpu.concatenate %388, %345 in 1 : vector<8x32xf32>, vector<8x32xf32> -> vector<8x64xf32>
    %665 = tpu.concatenate %468, %265 in 1 : vector<8x32xf32>, vector<8x32xf32> -> vector<8x64xf32>
    %666 = tpu.concatenate %548, %185 in 1 : vector<8x32xf32>, vector<8x32xf32> -> vector<8x64xf32>
    %667 = tpu.concatenate %625, %105 in 1 : vector<8x32xf32>, vector<8x32xf32> -> vector<8x64xf32>
    %668 = tpu.concatenate %660, %661, %662, %663, %664, %665, %666, %667 in 0 : vector<8x64xf32>, vector<8x64xf32>, vector<8x64xf32>, vector<8x64xf32>, vector<8x64xf32>, vector<8x64xf32>, vector<8x64xf32>, vector<8x64xf32> -> vector<64x64xf32>
    %c0_98 = arith.constant 0 : index
    %c0_99 = arith.constant 0 : index
    %669 = vector.load %arg8[%c0_98, %c0_99] : memref<64x256xf32, #tpu.memory_space<vmem>>, vector<64x256xf32>
    %c0_100 = arith.constant 0 : index
    %c0_101 = arith.constant 0 : index
    %670 = vector.load %arg9[%c0_100, %c0_101] : memref<32x128xf32, #tpu.memory_space<vmem>>, vector<32x128xf32>
    %c0_102 = arith.constant 0 : index
    %c0_103 = arith.constant 0 : index
    %671 = vector.load %arg10[%c0_102, %c0_103] : memref<32x128xf32, #tpu.memory_space<vmem>>, vector<32x128xf32>
    %c0_104 = arith.constant 0 : index
    %c0_105 = arith.constant 0 : index
    %672 = vector.load %arg11[%c0_104, %c0_105] : memref<1x256xf32, #tpu.memory_space<vmem>>, vector<1x256xf32>
    %cst_106 = arith.constant dense<0.000000e+00> : vector<64x256xf32>
    %673 = tpu.matmul %668, %669, %cst_106 {dimension_numbers = #tpu.dot_dimension_numbers<[1], [0], [0], [1], [0, 0, 1, 1], [], []>} : vector<64x64xf32>, vector<64x256xf32>, vector<64x256xf32> -> vector<64x256xf32>
    %674 = vector.broadcast %672 : vector<1x256xf32> to vector<64x256xf32>
    %675 = arith.addf %673, %674 : vector<64x256xf32>
    %cst_107 = arith.constant 0.000000e+00 : f32
    %676 = vector.broadcast %cst_107 : f32 to vector<8x32xf32>
    %cst_108 = arith.constant 0.000000e+00 : f32
    %677 = vector.broadcast %cst_108 : f32 to vector<8x32xf32>
    %cst_109 = arith.constant 0.000000e+00 : f32
    %678 = vector.broadcast %cst_109 : f32 to vector<8x32xf32>
    %cst_110 = arith.constant 0.000000e+00 : f32
    %679 = vector.broadcast %cst_110 : f32 to vector<8x32xf32>
    %680 = vector.extract_strided_slice %675 {offsets = [0, 0], sizes = [8, 128], strides = [1, 1]} : vector<64x256xf32> to vector<8x128xf32>
    %cst_111 = arith.constant dense<0.000000e+00> : vector<8x128xf32>
    %681 = tpu.matmul %676, %670, %cst_111 {dimension_numbers = #tpu.dot_dimension_numbers<[1], [0], [0], [1], [0, 0, 1, 1], [], []>} : vector<8x32xf32>, vector<32x128xf32>, vector<8x128xf32> -> vector<8x128xf32>
    %682 = arith.addf %680, %681 : vector<8x128xf32>
    %683 = vector.extract_strided_slice %675 {offsets = [56, 128], sizes = [8, 128], strides = [1, 1]} : vector<64x256xf32> to vector<8x128xf32>
    %cst_112 = arith.constant dense<0.000000e+00> : vector<8x128xf32>
    %684 = tpu.matmul %678, %671, %cst_112 {dimension_numbers = #tpu.dot_dimension_numbers<[1], [0], [0], [1], [0, 0, 1, 1], [], []>} : vector<8x32xf32>, vector<32x128xf32>, vector<8x128xf32> -> vector<8x128xf32>
    %685 = arith.addf %683, %684 : vector<8x128xf32>
    %686 = vector.extract_strided_slice %14 {offsets = [0, 0, 0], sizes = [1, 8, 1], strides = [1, 1, 1]} : vector<8x8x1xi1> to vector<1x8x1xi1>
    %687 = vector.shape_cast %686 : vector<1x8x1xi1> to vector<8x1xi1>
    %688 = vector.extract_strided_slice %682 {offsets = [0, 0], sizes = [8, 32], strides = [1, 1]} : vector<8x128xf32> to vector<8x32xf32>
    %689 = arith.negf %688 : vector<8x32xf32>
    %690 = math.exp %689 : vector<8x32xf32>
    %cst_113 = arith.constant 1.000000e+00 : f32
    %691 = vector.broadcast %cst_113 : f32 to vector<8x32xf32>
    %692 = arith.addf %691, %690 : vector<8x32xf32>
    %693 = arith.divf %691, %692 : vector<8x32xf32>
    %694 = vector.extract_strided_slice %682 {offsets = [0, 32], sizes = [8, 32], strides = [1, 1]} : vector<8x128xf32> to vector<8x32xf32>
    %695 = arith.negf %694 : vector<8x32xf32>
    %696 = math.exp %695 : vector<8x32xf32>
    %cst_114 = arith.constant 1.000000e+00 : f32
    %697 = vector.broadcast %cst_114 : f32 to vector<8x32xf32>
    %698 = arith.addf %697, %696 : vector<8x32xf32>
    %699 = arith.divf %697, %698 : vector<8x32xf32>
    %700 = vector.extract_strided_slice %682 {offsets = [0, 64], sizes = [8, 32], strides = [1, 1]} : vector<8x128xf32> to vector<8x32xf32>
    %701 = math.tanh %700 : vector<8x32xf32>
    %702 = vector.extract_strided_slice %682 {offsets = [0, 96], sizes = [8, 32], strides = [1, 1]} : vector<8x128xf32> to vector<8x32xf32>
    %703 = arith.negf %702 : vector<8x32xf32>
    %704 = math.exp %703 : vector<8x32xf32>
    %cst_115 = arith.constant 1.000000e+00 : f32
    %705 = vector.broadcast %cst_115 : f32 to vector<8x32xf32>
    %706 = arith.addf %705, %704 : vector<8x32xf32>
    %707 = arith.divf %705, %706 : vector<8x32xf32>
    %708 = arith.mulf %699, %677 : vector<8x32xf32>
    %709 = arith.mulf %693, %701 : vector<8x32xf32>
    %710 = arith.addf %708, %709 : vector<8x32xf32>
    %711 = math.tanh %710 : vector<8x32xf32>
    %712 = arith.mulf %707, %711 : vector<8x32xf32>
    %713 = vector.shape_cast %687 : vector<8x1xi1> to vector<8x1xi1>
    %714 = vector.broadcast %713 : vector<8x1xi1> to vector<8x32xi1>
    %715 = arith.select %714, %710, %677 : vector<8x32xi1>, vector<8x32xf32>
    %716 = vector.shape_cast %687 : vector<8x1xi1> to vector<8x1xi1>
    %717 = vector.broadcast %716 : vector<8x1xi1> to vector<8x32xi1>
    %718 = arith.select %717, %712, %676 : vector<8x32xi1>, vector<8x32xf32>
    %719 = vector.extract_strided_slice %14 {offsets = [7, 0, 0], sizes = [1, 8, 1], strides = [1, 1, 1]} : vector<8x8x1xi1> to vector<1x8x1xi1>
    %720 = vector.shape_cast %719 : vector<1x8x1xi1> to vector<8x1xi1>
    %721 = vector.extract_strided_slice %685 {offsets = [0, 0], sizes = [8, 32], strides = [1, 1]} : vector<8x128xf32> to vector<8x32xf32>
    %722 = arith.negf %721 : vector<8x32xf32>
    %723 = math.exp %722 : vector<8x32xf32>
    %cst_116 = arith.constant 1.000000e+00 : f32
    %724 = vector.broadcast %cst_116 : f32 to vector<8x32xf32>
    %725 = arith.addf %724, %723 : vector<8x32xf32>
    %726 = arith.divf %724, %725 : vector<8x32xf32>
    %727 = vector.extract_strided_slice %685 {offsets = [0, 32], sizes = [8, 32], strides = [1, 1]} : vector<8x128xf32> to vector<8x32xf32>
    %728 = arith.negf %727 : vector<8x32xf32>
    %729 = math.exp %728 : vector<8x32xf32>
    %cst_117 = arith.constant 1.000000e+00 : f32
    %730 = vector.broadcast %cst_117 : f32 to vector<8x32xf32>
    %731 = arith.addf %730, %729 : vector<8x32xf32>
    %732 = arith.divf %730, %731 : vector<8x32xf32>
    %733 = vector.extract_strided_slice %685 {offsets = [0, 64], sizes = [8, 32], strides = [1, 1]} : vector<8x128xf32> to vector<8x32xf32>
    %734 = math.tanh %733 : vector<8x32xf32>
    %735 = vector.extract_strided_slice %685 {offsets = [0, 96], sizes = [8, 32], strides = [1, 1]} : vector<8x128xf32> to vector<8x32xf32>
    %736 = arith.negf %735 : vector<8x32xf32>
    %737 = math.exp %736 : vector<8x32xf32>
    %cst_118 = arith.constant 1.000000e+00 : f32
    %738 = vector.broadcast %cst_118 : f32 to vector<8x32xf32>
    %739 = arith.addf %738, %737 : vector<8x32xf32>
    %740 = arith.divf %738, %739 : vector<8x32xf32>
    %741 = arith.mulf %732, %679 : vector<8x32xf32>
    %742 = arith.mulf %726, %734 : vector<8x32xf32>
    %743 = arith.addf %741, %742 : vector<8x32xf32>
    %744 = math.tanh %743 : vector<8x32xf32>
    %745 = arith.mulf %740, %744 : vector<8x32xf32>
    %746 = vector.shape_cast %720 : vector<8x1xi1> to vector<8x1xi1>
    %747 = vector.broadcast %746 : vector<8x1xi1> to vector<8x32xi1>
    %748 = arith.select %747, %743, %679 : vector<8x32xi1>, vector<8x32xf32>
    %749 = vector.shape_cast %720 : vector<8x1xi1> to vector<8x1xi1>
    %750 = vector.broadcast %749 : vector<8x1xi1> to vector<8x32xi1>
    %751 = arith.select %750, %745, %678 : vector<8x32xi1>, vector<8x32xf32>
    %752 = vector.extract_strided_slice %675 {offsets = [8, 0], sizes = [8, 128], strides = [1, 1]} : vector<64x256xf32> to vector<8x128xf32>
    %cst_119 = arith.constant dense<0.000000e+00> : vector<8x128xf32>
    %753 = tpu.matmul %718, %670, %cst_119 {dimension_numbers = #tpu.dot_dimension_numbers<[1], [0], [0], [1], [0, 0, 1, 1], [], []>} : vector<8x32xf32>, vector<32x128xf32>, vector<8x128xf32> -> vector<8x128xf32>
    %754 = arith.addf %752, %753 : vector<8x128xf32>
    %755 = vector.extract_strided_slice %675 {offsets = [48, 128], sizes = [8, 128], strides = [1, 1]} : vector<64x256xf32> to vector<8x128xf32>
    %cst_120 = arith.constant dense<0.000000e+00> : vector<8x128xf32>
    %756 = tpu.matmul %751, %671, %cst_120 {dimension_numbers = #tpu.dot_dimension_numbers<[1], [0], [0], [1], [0, 0, 1, 1], [], []>} : vector<8x32xf32>, vector<32x128xf32>, vector<8x128xf32> -> vector<8x128xf32>
    %757 = arith.addf %755, %756 : vector<8x128xf32>
    %758 = vector.extract_strided_slice %14 {offsets = [1, 0, 0], sizes = [1, 8, 1], strides = [1, 1, 1]} : vector<8x8x1xi1> to vector<1x8x1xi1>
    %759 = vector.shape_cast %758 : vector<1x8x1xi1> to vector<8x1xi1>
    %760 = vector.extract_strided_slice %754 {offsets = [0, 0], sizes = [8, 32], strides = [1, 1]} : vector<8x128xf32> to vector<8x32xf32>
    %761 = arith.negf %760 : vector<8x32xf32>
    %762 = math.exp %761 : vector<8x32xf32>
    %cst_121 = arith.constant 1.000000e+00 : f32
    %763 = vector.broadcast %cst_121 : f32 to vector<8x32xf32>
    %764 = arith.addf %763, %762 : vector<8x32xf32>
    %765 = arith.divf %763, %764 : vector<8x32xf32>
    %766 = vector.extract_strided_slice %754 {offsets = [0, 32], sizes = [8, 32], strides = [1, 1]} : vector<8x128xf32> to vector<8x32xf32>
    %767 = arith.negf %766 : vector<8x32xf32>
    %768 = math.exp %767 : vector<8x32xf32>
    %cst_122 = arith.constant 1.000000e+00 : f32
    %769 = vector.broadcast %cst_122 : f32 to vector<8x32xf32>
    %770 = arith.addf %769, %768 : vector<8x32xf32>
    %771 = arith.divf %769, %770 : vector<8x32xf32>
    %772 = vector.extract_strided_slice %754 {offsets = [0, 64], sizes = [8, 32], strides = [1, 1]} : vector<8x128xf32> to vector<8x32xf32>
    %773 = math.tanh %772 : vector<8x32xf32>
    %774 = vector.extract_strided_slice %754 {offsets = [0, 96], sizes = [8, 32], strides = [1, 1]} : vector<8x128xf32> to vector<8x32xf32>
    %775 = arith.negf %774 : vector<8x32xf32>
    %776 = math.exp %775 : vector<8x32xf32>
    %cst_123 = arith.constant 1.000000e+00 : f32
    %777 = vector.broadcast %cst_123 : f32 to vector<8x32xf32>
    %778 = arith.addf %777, %776 : vector<8x32xf32>
    %779 = arith.divf %777, %778 : vector<8x32xf32>
    %780 = arith.mulf %771, %715 : vector<8x32xf32>
    %781 = arith.mulf %765, %773 : vector<8x32xf32>
    %782 = arith.addf %780, %781 : vector<8x32xf32>
    %783 = math.tanh %782 : vector<8x32xf32>
    %784 = arith.mulf %779, %783 : vector<8x32xf32>
    %785 = vector.shape_cast %759 : vector<8x1xi1> to vector<8x1xi1>
    %786 = vector.broadcast %785 : vector<8x1xi1> to vector<8x32xi1>
    %787 = arith.select %786, %782, %715 : vector<8x32xi1>, vector<8x32xf32>
    %788 = vector.shape_cast %759 : vector<8x1xi1> to vector<8x1xi1>
    %789 = vector.broadcast %788 : vector<8x1xi1> to vector<8x32xi1>
    %790 = arith.select %789, %784, %718 : vector<8x32xi1>, vector<8x32xf32>
    %791 = vector.extract_strided_slice %14 {offsets = [6, 0, 0], sizes = [1, 8, 1], strides = [1, 1, 1]} : vector<8x8x1xi1> to vector<1x8x1xi1>
    %792 = vector.shape_cast %791 : vector<1x8x1xi1> to vector<8x1xi1>
    %793 = vector.extract_strided_slice %757 {offsets = [0, 0], sizes = [8, 32], strides = [1, 1]} : vector<8x128xf32> to vector<8x32xf32>
    %794 = arith.negf %793 : vector<8x32xf32>
    %795 = math.exp %794 : vector<8x32xf32>
    %cst_124 = arith.constant 1.000000e+00 : f32
    %796 = vector.broadcast %cst_124 : f32 to vector<8x32xf32>
    %797 = arith.addf %796, %795 : vector<8x32xf32>
    %798 = arith.divf %796, %797 : vector<8x32xf32>
    %799 = vector.extract_strided_slice %757 {offsets = [0, 32], sizes = [8, 32], strides = [1, 1]} : vector<8x128xf32> to vector<8x32xf32>
    %800 = arith.negf %799 : vector<8x32xf32>
    %801 = math.exp %800 : vector<8x32xf32>
    %cst_125 = arith.constant 1.000000e+00 : f32
    %802 = vector.broadcast %cst_125 : f32 to vector<8x32xf32>
    %803 = arith.addf %802, %801 : vector<8x32xf32>
    %804 = arith.divf %802, %803 : vector<8x32xf32>
    %805 = vector.extract_strided_slice %757 {offsets = [0, 64], sizes = [8, 32], strides = [1, 1]} : vector<8x128xf32> to vector<8x32xf32>
    %806 = math.tanh %805 : vector<8x32xf32>
    %807 = vector.extract_strided_slice %757 {offsets = [0, 96], sizes = [8, 32], strides = [1, 1]} : vector<8x128xf32> to vector<8x32xf32>
    %808 = arith.negf %807 : vector<8x32xf32>
    %809 = math.exp %808 : vector<8x32xf32>
    %cst_126 = arith.constant 1.000000e+00 : f32
    %810 = vector.broadcast %cst_126 : f32 to vector<8x32xf32>
    %811 = arith.addf %810, %809 : vector<8x32xf32>
    %812 = arith.divf %810, %811 : vector<8x32xf32>
    %813 = arith.mulf %804, %748 : vector<8x32xf32>
    %814 = arith.mulf %798, %806 : vector<8x32xf32>
    %815 = arith.addf %813, %814 : vector<8x32xf32>
    %816 = math.tanh %815 : vector<8x32xf32>
    %817 = arith.mulf %812, %816 : vector<8x32xf32>
    %818 = vector.shape_cast %792 : vector<8x1xi1> to vector<8x1xi1>
    %819 = vector.broadcast %818 : vector<8x1xi1> to vector<8x32xi1>
    %820 = arith.select %819, %815, %748 : vector<8x32xi1>, vector<8x32xf32>
    %821 = vector.shape_cast %792 : vector<8x1xi1> to vector<8x1xi1>
    %822 = vector.broadcast %821 : vector<8x1xi1> to vector<8x32xi1>
    %823 = arith.select %822, %817, %751 : vector<8x32xi1>, vector<8x32xf32>
    %824 = vector.extract_strided_slice %675 {offsets = [16, 0], sizes = [8, 128], strides = [1, 1]} : vector<64x256xf32> to vector<8x128xf32>
    %cst_127 = arith.constant dense<0.000000e+00> : vector<8x128xf32>
    %825 = tpu.matmul %790, %670, %cst_127 {dimension_numbers = #tpu.dot_dimension_numbers<[1], [0], [0], [1], [0, 0, 1, 1], [], []>} : vector<8x32xf32>, vector<32x128xf32>, vector<8x128xf32> -> vector<8x128xf32>
    %826 = arith.addf %824, %825 : vector<8x128xf32>
    %827 = vector.extract_strided_slice %675 {offsets = [40, 128], sizes = [8, 128], strides = [1, 1]} : vector<64x256xf32> to vector<8x128xf32>
    %cst_128 = arith.constant dense<0.000000e+00> : vector<8x128xf32>
    %828 = tpu.matmul %823, %671, %cst_128 {dimension_numbers = #tpu.dot_dimension_numbers<[1], [0], [0], [1], [0, 0, 1, 1], [], []>} : vector<8x32xf32>, vector<32x128xf32>, vector<8x128xf32> -> vector<8x128xf32>
    %829 = arith.addf %827, %828 : vector<8x128xf32>
    %830 = vector.extract_strided_slice %14 {offsets = [2, 0, 0], sizes = [1, 8, 1], strides = [1, 1, 1]} : vector<8x8x1xi1> to vector<1x8x1xi1>
    %831 = vector.shape_cast %830 : vector<1x8x1xi1> to vector<8x1xi1>
    %832 = vector.extract_strided_slice %826 {offsets = [0, 0], sizes = [8, 32], strides = [1, 1]} : vector<8x128xf32> to vector<8x32xf32>
    %833 = arith.negf %832 : vector<8x32xf32>
    %834 = math.exp %833 : vector<8x32xf32>
    %cst_129 = arith.constant 1.000000e+00 : f32
    %835 = vector.broadcast %cst_129 : f32 to vector<8x32xf32>
    %836 = arith.addf %835, %834 : vector<8x32xf32>
    %837 = arith.divf %835, %836 : vector<8x32xf32>
    %838 = vector.extract_strided_slice %826 {offsets = [0, 32], sizes = [8, 32], strides = [1, 1]} : vector<8x128xf32> to vector<8x32xf32>
    %839 = arith.negf %838 : vector<8x32xf32>
    %840 = math.exp %839 : vector<8x32xf32>
    %cst_130 = arith.constant 1.000000e+00 : f32
    %841 = vector.broadcast %cst_130 : f32 to vector<8x32xf32>
    %842 = arith.addf %841, %840 : vector<8x32xf32>
    %843 = arith.divf %841, %842 : vector<8x32xf32>
    %844 = vector.extract_strided_slice %826 {offsets = [0, 64], sizes = [8, 32], strides = [1, 1]} : vector<8x128xf32> to vector<8x32xf32>
    %845 = math.tanh %844 : vector<8x32xf32>
    %846 = vector.extract_strided_slice %826 {offsets = [0, 96], sizes = [8, 32], strides = [1, 1]} : vector<8x128xf32> to vector<8x32xf32>
    %847 = arith.negf %846 : vector<8x32xf32>
    %848 = math.exp %847 : vector<8x32xf32>
    %cst_131 = arith.constant 1.000000e+00 : f32
    %849 = vector.broadcast %cst_131 : f32 to vector<8x32xf32>
    %850 = arith.addf %849, %848 : vector<8x32xf32>
    %851 = arith.divf %849, %850 : vector<8x32xf32>
    %852 = arith.mulf %843, %787 : vector<8x32xf32>
    %853 = arith.mulf %837, %845 : vector<8x32xf32>
    %854 = arith.addf %852, %853 : vector<8x32xf32>
    %855 = math.tanh %854 : vector<8x32xf32>
    %856 = arith.mulf %851, %855 : vector<8x32xf32>
    %857 = vector.shape_cast %831 : vector<8x1xi1> to vector<8x1xi1>
    %858 = vector.broadcast %857 : vector<8x1xi1> to vector<8x32xi1>
    %859 = arith.select %858, %854, %787 : vector<8x32xi1>, vector<8x32xf32>
    %860 = vector.shape_cast %831 : vector<8x1xi1> to vector<8x1xi1>
    %861 = vector.broadcast %860 : vector<8x1xi1> to vector<8x32xi1>
    %862 = arith.select %861, %856, %790 : vector<8x32xi1>, vector<8x32xf32>
    %863 = vector.extract_strided_slice %14 {offsets = [5, 0, 0], sizes = [1, 8, 1], strides = [1, 1, 1]} : vector<8x8x1xi1> to vector<1x8x1xi1>
    %864 = vector.shape_cast %863 : vector<1x8x1xi1> to vector<8x1xi1>
    %865 = vector.extract_strided_slice %829 {offsets = [0, 0], sizes = [8, 32], strides = [1, 1]} : vector<8x128xf32> to vector<8x32xf32>
    %866 = arith.negf %865 : vector<8x32xf32>
    %867 = math.exp %866 : vector<8x32xf32>
    %cst_132 = arith.constant 1.000000e+00 : f32
    %868 = vector.broadcast %cst_132 : f32 to vector<8x32xf32>
    %869 = arith.addf %868, %867 : vector<8x32xf32>
    %870 = arith.divf %868, %869 : vector<8x32xf32>
    %871 = vector.extract_strided_slice %829 {offsets = [0, 32], sizes = [8, 32], strides = [1, 1]} : vector<8x128xf32> to vector<8x32xf32>
    %872 = arith.negf %871 : vector<8x32xf32>
    %873 = math.exp %872 : vector<8x32xf32>
    %cst_133 = arith.constant 1.000000e+00 : f32
    %874 = vector.broadcast %cst_133 : f32 to vector<8x32xf32>
    %875 = arith.addf %874, %873 : vector<8x32xf32>
    %876 = arith.divf %874, %875 : vector<8x32xf32>
    %877 = vector.extract_strided_slice %829 {offsets = [0, 64], sizes = [8, 32], strides = [1, 1]} : vector<8x128xf32> to vector<8x32xf32>
    %878 = math.tanh %877 : vector<8x32xf32>
    %879 = vector.extract_strided_slice %829 {offsets = [0, 96], sizes = [8, 32], strides = [1, 1]} : vector<8x128xf32> to vector<8x32xf32>
    %880 = arith.negf %879 : vector<8x32xf32>
    %881 = math.exp %880 : vector<8x32xf32>
    %cst_134 = arith.constant 1.000000e+00 : f32
    %882 = vector.broadcast %cst_134 : f32 to vector<8x32xf32>
    %883 = arith.addf %882, %881 : vector<8x32xf32>
    %884 = arith.divf %882, %883 : vector<8x32xf32>
    %885 = arith.mulf %876, %820 : vector<8x32xf32>
    %886 = arith.mulf %870, %878 : vector<8x32xf32>
    %887 = arith.addf %885, %886 : vector<8x32xf32>
    %888 = math.tanh %887 : vector<8x32xf32>
    %889 = arith.mulf %884, %888 : vector<8x32xf32>
    %890 = vector.shape_cast %864 : vector<8x1xi1> to vector<8x1xi1>
    %891 = vector.broadcast %890 : vector<8x1xi1> to vector<8x32xi1>
    %892 = arith.select %891, %887, %820 : vector<8x32xi1>, vector<8x32xf32>
    %893 = vector.shape_cast %864 : vector<8x1xi1> to vector<8x1xi1>
    %894 = vector.broadcast %893 : vector<8x1xi1> to vector<8x32xi1>
    %895 = arith.select %894, %889, %823 : vector<8x32xi1>, vector<8x32xf32>
    %896 = vector.extract_strided_slice %675 {offsets = [24, 0], sizes = [8, 128], strides = [1, 1]} : vector<64x256xf32> to vector<8x128xf32>
    %cst_135 = arith.constant dense<0.000000e+00> : vector<8x128xf32>
    %897 = tpu.matmul %862, %670, %cst_135 {dimension_numbers = #tpu.dot_dimension_numbers<[1], [0], [0], [1], [0, 0, 1, 1], [], []>} : vector<8x32xf32>, vector<32x128xf32>, vector<8x128xf32> -> vector<8x128xf32>
    %898 = arith.addf %896, %897 : vector<8x128xf32>
    %899 = vector.extract_strided_slice %675 {offsets = [32, 128], sizes = [8, 128], strides = [1, 1]} : vector<64x256xf32> to vector<8x128xf32>
    %cst_136 = arith.constant dense<0.000000e+00> : vector<8x128xf32>
    %900 = tpu.matmul %895, %671, %cst_136 {dimension_numbers = #tpu.dot_dimension_numbers<[1], [0], [0], [1], [0, 0, 1, 1], [], []>} : vector<8x32xf32>, vector<32x128xf32>, vector<8x128xf32> -> vector<8x128xf32>
    %901 = arith.addf %899, %900 : vector<8x128xf32>
    %902 = vector.extract_strided_slice %14 {offsets = [3, 0, 0], sizes = [1, 8, 1], strides = [1, 1, 1]} : vector<8x8x1xi1> to vector<1x8x1xi1>
    %903 = vector.shape_cast %902 : vector<1x8x1xi1> to vector<8x1xi1>
    %904 = vector.extract_strided_slice %898 {offsets = [0, 0], sizes = [8, 32], strides = [1, 1]} : vector<8x128xf32> to vector<8x32xf32>
    %905 = arith.negf %904 : vector<8x32xf32>
    %906 = math.exp %905 : vector<8x32xf32>
    %cst_137 = arith.constant 1.000000e+00 : f32
    %907 = vector.broadcast %cst_137 : f32 to vector<8x32xf32>
    %908 = arith.addf %907, %906 : vector<8x32xf32>
    %909 = arith.divf %907, %908 : vector<8x32xf32>
    %910 = vector.extract_strided_slice %898 {offsets = [0, 32], sizes = [8, 32], strides = [1, 1]} : vector<8x128xf32> to vector<8x32xf32>
    %911 = arith.negf %910 : vector<8x32xf32>
    %912 = math.exp %911 : vector<8x32xf32>
    %cst_138 = arith.constant 1.000000e+00 : f32
    %913 = vector.broadcast %cst_138 : f32 to vector<8x32xf32>
    %914 = arith.addf %913, %912 : vector<8x32xf32>
    %915 = arith.divf %913, %914 : vector<8x32xf32>
    %916 = vector.extract_strided_slice %898 {offsets = [0, 64], sizes = [8, 32], strides = [1, 1]} : vector<8x128xf32> to vector<8x32xf32>
    %917 = math.tanh %916 : vector<8x32xf32>
    %918 = vector.extract_strided_slice %898 {offsets = [0, 96], sizes = [8, 32], strides = [1, 1]} : vector<8x128xf32> to vector<8x32xf32>
    %919 = arith.negf %918 : vector<8x32xf32>
    %920 = math.exp %919 : vector<8x32xf32>
    %cst_139 = arith.constant 1.000000e+00 : f32
    %921 = vector.broadcast %cst_139 : f32 to vector<8x32xf32>
    %922 = arith.addf %921, %920 : vector<8x32xf32>
    %923 = arith.divf %921, %922 : vector<8x32xf32>
    %924 = arith.mulf %915, %859 : vector<8x32xf32>
    %925 = arith.mulf %909, %917 : vector<8x32xf32>
    %926 = arith.addf %924, %925 : vector<8x32xf32>
    %927 = math.tanh %926 : vector<8x32xf32>
    %928 = arith.mulf %923, %927 : vector<8x32xf32>
    %929 = vector.shape_cast %903 : vector<8x1xi1> to vector<8x1xi1>
    %930 = vector.broadcast %929 : vector<8x1xi1> to vector<8x32xi1>
    %931 = arith.select %930, %926, %859 : vector<8x32xi1>, vector<8x32xf32>
    %932 = vector.shape_cast %903 : vector<8x1xi1> to vector<8x1xi1>
    %933 = vector.broadcast %932 : vector<8x1xi1> to vector<8x32xi1>
    %934 = arith.select %933, %928, %862 : vector<8x32xi1>, vector<8x32xf32>
    %935 = vector.extract_strided_slice %14 {offsets = [4, 0, 0], sizes = [1, 8, 1], strides = [1, 1, 1]} : vector<8x8x1xi1> to vector<1x8x1xi1>
    %936 = vector.shape_cast %935 : vector<1x8x1xi1> to vector<8x1xi1>
    %937 = vector.extract_strided_slice %901 {offsets = [0, 0], sizes = [8, 32], strides = [1, 1]} : vector<8x128xf32> to vector<8x32xf32>
    %938 = arith.negf %937 : vector<8x32xf32>
    %939 = math.exp %938 : vector<8x32xf32>
    %cst_140 = arith.constant 1.000000e+00 : f32
    %940 = vector.broadcast %cst_140 : f32 to vector<8x32xf32>
    %941 = arith.addf %940, %939 : vector<8x32xf32>
    %942 = arith.divf %940, %941 : vector<8x32xf32>
    %943 = vector.extract_strided_slice %901 {offsets = [0, 32], sizes = [8, 32], strides = [1, 1]} : vector<8x128xf32> to vector<8x32xf32>
    %944 = arith.negf %943 : vector<8x32xf32>
    %945 = math.exp %944 : vector<8x32xf32>
    %cst_141 = arith.constant 1.000000e+00 : f32
    %946 = vector.broadcast %cst_141 : f32 to vector<8x32xf32>
    %947 = arith.addf %946, %945 : vector<8x32xf32>
    %948 = arith.divf %946, %947 : vector<8x32xf32>
    %949 = vector.extract_strided_slice %901 {offsets = [0, 64], sizes = [8, 32], strides = [1, 1]} : vector<8x128xf32> to vector<8x32xf32>
    %950 = math.tanh %949 : vector<8x32xf32>
    %951 = vector.extract_strided_slice %901 {offsets = [0, 96], sizes = [8, 32], strides = [1, 1]} : vector<8x128xf32> to vector<8x32xf32>
    %952 = arith.negf %951 : vector<8x32xf32>
    %953 = math.exp %952 : vector<8x32xf32>
    %cst_142 = arith.constant 1.000000e+00 : f32
    %954 = vector.broadcast %cst_142 : f32 to vector<8x32xf32>
    %955 = arith.addf %954, %953 : vector<8x32xf32>
    %956 = arith.divf %954, %955 : vector<8x32xf32>
    %957 = arith.mulf %948, %892 : vector<8x32xf32>
    %958 = arith.mulf %942, %950 : vector<8x32xf32>
    %959 = arith.addf %957, %958 : vector<8x32xf32>
    %960 = math.tanh %959 : vector<8x32xf32>
    %961 = arith.mulf %956, %960 : vector<8x32xf32>
    %962 = vector.shape_cast %936 : vector<8x1xi1> to vector<8x1xi1>
    %963 = vector.broadcast %962 : vector<8x1xi1> to vector<8x32xi1>
    %964 = arith.select %963, %959, %892 : vector<8x32xi1>, vector<8x32xf32>
    %965 = vector.shape_cast %936 : vector<8x1xi1> to vector<8x1xi1>
    %966 = vector.broadcast %965 : vector<8x1xi1> to vector<8x32xi1>
    %967 = arith.select %966, %961, %895 : vector<8x32xi1>, vector<8x32xf32>
    %968 = vector.extract_strided_slice %675 {offsets = [32, 0], sizes = [8, 128], strides = [1, 1]} : vector<64x256xf32> to vector<8x128xf32>
    %cst_143 = arith.constant dense<0.000000e+00> : vector<8x128xf32>
    %969 = tpu.matmul %934, %670, %cst_143 {dimension_numbers = #tpu.dot_dimension_numbers<[1], [0], [0], [1], [0, 0, 1, 1], [], []>} : vector<8x32xf32>, vector<32x128xf32>, vector<8x128xf32> -> vector<8x128xf32>
    %970 = arith.addf %968, %969 : vector<8x128xf32>
    %971 = vector.extract_strided_slice %675 {offsets = [24, 128], sizes = [8, 128], strides = [1, 1]} : vector<64x256xf32> to vector<8x128xf32>
    %cst_144 = arith.constant dense<0.000000e+00> : vector<8x128xf32>
    %972 = tpu.matmul %967, %671, %cst_144 {dimension_numbers = #tpu.dot_dimension_numbers<[1], [0], [0], [1], [0, 0, 1, 1], [], []>} : vector<8x32xf32>, vector<32x128xf32>, vector<8x128xf32> -> vector<8x128xf32>
    %973 = arith.addf %971, %972 : vector<8x128xf32>
    %974 = vector.extract_strided_slice %14 {offsets = [4, 0, 0], sizes = [1, 8, 1], strides = [1, 1, 1]} : vector<8x8x1xi1> to vector<1x8x1xi1>
    %975 = vector.shape_cast %974 : vector<1x8x1xi1> to vector<8x1xi1>
    %976 = vector.extract_strided_slice %970 {offsets = [0, 0], sizes = [8, 32], strides = [1, 1]} : vector<8x128xf32> to vector<8x32xf32>
    %977 = arith.negf %976 : vector<8x32xf32>
    %978 = math.exp %977 : vector<8x32xf32>
    %cst_145 = arith.constant 1.000000e+00 : f32
    %979 = vector.broadcast %cst_145 : f32 to vector<8x32xf32>
    %980 = arith.addf %979, %978 : vector<8x32xf32>
    %981 = arith.divf %979, %980 : vector<8x32xf32>
    %982 = vector.extract_strided_slice %970 {offsets = [0, 32], sizes = [8, 32], strides = [1, 1]} : vector<8x128xf32> to vector<8x32xf32>
    %983 = arith.negf %982 : vector<8x32xf32>
    %984 = math.exp %983 : vector<8x32xf32>
    %cst_146 = arith.constant 1.000000e+00 : f32
    %985 = vector.broadcast %cst_146 : f32 to vector<8x32xf32>
    %986 = arith.addf %985, %984 : vector<8x32xf32>
    %987 = arith.divf %985, %986 : vector<8x32xf32>
    %988 = vector.extract_strided_slice %970 {offsets = [0, 64], sizes = [8, 32], strides = [1, 1]} : vector<8x128xf32> to vector<8x32xf32>
    %989 = math.tanh %988 : vector<8x32xf32>
    %990 = vector.extract_strided_slice %970 {offsets = [0, 96], sizes = [8, 32], strides = [1, 1]} : vector<8x128xf32> to vector<8x32xf32>
    %991 = arith.negf %990 : vector<8x32xf32>
    %992 = math.exp %991 : vector<8x32xf32>
    %cst_147 = arith.constant 1.000000e+00 : f32
    %993 = vector.broadcast %cst_147 : f32 to vector<8x32xf32>
    %994 = arith.addf %993, %992 : vector<8x32xf32>
    %995 = arith.divf %993, %994 : vector<8x32xf32>
    %996 = arith.mulf %987, %931 : vector<8x32xf32>
    %997 = arith.mulf %981, %989 : vector<8x32xf32>
    %998 = arith.addf %996, %997 : vector<8x32xf32>
    %999 = math.tanh %998 : vector<8x32xf32>
    %1000 = arith.mulf %995, %999 : vector<8x32xf32>
    %1001 = vector.shape_cast %975 : vector<8x1xi1> to vector<8x1xi1>
    %1002 = vector.broadcast %1001 : vector<8x1xi1> to vector<8x32xi1>
    %1003 = arith.select %1002, %998, %931 : vector<8x32xi1>, vector<8x32xf32>
    %1004 = vector.shape_cast %975 : vector<8x1xi1> to vector<8x1xi1>
    %1005 = vector.broadcast %1004 : vector<8x1xi1> to vector<8x32xi1>
    %1006 = arith.select %1005, %1000, %934 : vector<8x32xi1>, vector<8x32xf32>
    %1007 = vector.extract_strided_slice %14 {offsets = [3, 0, 0], sizes = [1, 8, 1], strides = [1, 1, 1]} : vector<8x8x1xi1> to vector<1x8x1xi1>
    %1008 = vector.shape_cast %1007 : vector<1x8x1xi1> to vector<8x1xi1>
    %1009 = vector.extract_strided_slice %973 {offsets = [0, 0], sizes = [8, 32], strides = [1, 1]} : vector<8x128xf32> to vector<8x32xf32>
    %1010 = arith.negf %1009 : vector<8x32xf32>
    %1011 = math.exp %1010 : vector<8x32xf32>
    %cst_148 = arith.constant 1.000000e+00 : f32
    %1012 = vector.broadcast %cst_148 : f32 to vector<8x32xf32>
    %1013 = arith.addf %1012, %1011 : vector<8x32xf32>
    %1014 = arith.divf %1012, %1013 : vector<8x32xf32>
    %1015 = vector.extract_strided_slice %973 {offsets = [0, 32], sizes = [8, 32], strides = [1, 1]} : vector<8x128xf32> to vector<8x32xf32>
    %1016 = arith.negf %1015 : vector<8x32xf32>
    %1017 = math.exp %1016 : vector<8x32xf32>
    %cst_149 = arith.constant 1.000000e+00 : f32
    %1018 = vector.broadcast %cst_149 : f32 to vector<8x32xf32>
    %1019 = arith.addf %1018, %1017 : vector<8x32xf32>
    %1020 = arith.divf %1018, %1019 : vector<8x32xf32>
    %1021 = vector.extract_strided_slice %973 {offsets = [0, 64], sizes = [8, 32], strides = [1, 1]} : vector<8x128xf32> to vector<8x32xf32>
    %1022 = math.tanh %1021 : vector<8x32xf32>
    %1023 = vector.extract_strided_slice %973 {offsets = [0, 96], sizes = [8, 32], strides = [1, 1]} : vector<8x128xf32> to vector<8x32xf32>
    %1024 = arith.negf %1023 : vector<8x32xf32>
    %1025 = math.exp %1024 : vector<8x32xf32>
    %cst_150 = arith.constant 1.000000e+00 : f32
    %1026 = vector.broadcast %cst_150 : f32 to vector<8x32xf32>
    %1027 = arith.addf %1026, %1025 : vector<8x32xf32>
    %1028 = arith.divf %1026, %1027 : vector<8x32xf32>
    %1029 = arith.mulf %1020, %964 : vector<8x32xf32>
    %1030 = arith.mulf %1014, %1022 : vector<8x32xf32>
    %1031 = arith.addf %1029, %1030 : vector<8x32xf32>
    %1032 = math.tanh %1031 : vector<8x32xf32>
    %1033 = arith.mulf %1028, %1032 : vector<8x32xf32>
    %1034 = vector.shape_cast %1008 : vector<8x1xi1> to vector<8x1xi1>
    %1035 = vector.broadcast %1034 : vector<8x1xi1> to vector<8x32xi1>
    %1036 = arith.select %1035, %1031, %964 : vector<8x32xi1>, vector<8x32xf32>
    %1037 = vector.shape_cast %1008 : vector<8x1xi1> to vector<8x1xi1>
    %1038 = vector.broadcast %1037 : vector<8x1xi1> to vector<8x32xi1>
    %1039 = arith.select %1038, %1033, %967 : vector<8x32xi1>, vector<8x32xf32>
    %1040 = vector.extract_strided_slice %675 {offsets = [40, 0], sizes = [8, 128], strides = [1, 1]} : vector<64x256xf32> to vector<8x128xf32>
    %cst_151 = arith.constant dense<0.000000e+00> : vector<8x128xf32>
    %1041 = tpu.matmul %1006, %670, %cst_151 {dimension_numbers = #tpu.dot_dimension_numbers<[1], [0], [0], [1], [0, 0, 1, 1], [], []>} : vector<8x32xf32>, vector<32x128xf32>, vector<8x128xf32> -> vector<8x128xf32>
    %1042 = arith.addf %1040, %1041 : vector<8x128xf32>
    %1043 = vector.extract_strided_slice %675 {offsets = [16, 128], sizes = [8, 128], strides = [1, 1]} : vector<64x256xf32> to vector<8x128xf32>
    %cst_152 = arith.constant dense<0.000000e+00> : vector<8x128xf32>
    %1044 = tpu.matmul %1039, %671, %cst_152 {dimension_numbers = #tpu.dot_dimension_numbers<[1], [0], [0], [1], [0, 0, 1, 1], [], []>} : vector<8x32xf32>, vector<32x128xf32>, vector<8x128xf32> -> vector<8x128xf32>
    %1045 = arith.addf %1043, %1044 : vector<8x128xf32>
    %1046 = vector.extract_strided_slice %14 {offsets = [5, 0, 0], sizes = [1, 8, 1], strides = [1, 1, 1]} : vector<8x8x1xi1> to vector<1x8x1xi1>
    %1047 = vector.shape_cast %1046 : vector<1x8x1xi1> to vector<8x1xi1>
    %1048 = vector.extract_strided_slice %1042 {offsets = [0, 0], sizes = [8, 32], strides = [1, 1]} : vector<8x128xf32> to vector<8x32xf32>
    %1049 = arith.negf %1048 : vector<8x32xf32>
    %1050 = math.exp %1049 : vector<8x32xf32>
    %cst_153 = arith.constant 1.000000e+00 : f32
    %1051 = vector.broadcast %cst_153 : f32 to vector<8x32xf32>
    %1052 = arith.addf %1051, %1050 : vector<8x32xf32>
    %1053 = arith.divf %1051, %1052 : vector<8x32xf32>
    %1054 = vector.extract_strided_slice %1042 {offsets = [0, 32], sizes = [8, 32], strides = [1, 1]} : vector<8x128xf32> to vector<8x32xf32>
    %1055 = arith.negf %1054 : vector<8x32xf32>
    %1056 = math.exp %1055 : vector<8x32xf32>
    %cst_154 = arith.constant 1.000000e+00 : f32
    %1057 = vector.broadcast %cst_154 : f32 to vector<8x32xf32>
    %1058 = arith.addf %1057, %1056 : vector<8x32xf32>
    %1059 = arith.divf %1057, %1058 : vector<8x32xf32>
    %1060 = vector.extract_strided_slice %1042 {offsets = [0, 64], sizes = [8, 32], strides = [1, 1]} : vector<8x128xf32> to vector<8x32xf32>
    %1061 = math.tanh %1060 : vector<8x32xf32>
    %1062 = vector.extract_strided_slice %1042 {offsets = [0, 96], sizes = [8, 32], strides = [1, 1]} : vector<8x128xf32> to vector<8x32xf32>
    %1063 = arith.negf %1062 : vector<8x32xf32>
    %1064 = math.exp %1063 : vector<8x32xf32>
    %cst_155 = arith.constant 1.000000e+00 : f32
    %1065 = vector.broadcast %cst_155 : f32 to vector<8x32xf32>
    %1066 = arith.addf %1065, %1064 : vector<8x32xf32>
    %1067 = arith.divf %1065, %1066 : vector<8x32xf32>
    %1068 = arith.mulf %1059, %1003 : vector<8x32xf32>
    %1069 = arith.mulf %1053, %1061 : vector<8x32xf32>
    %1070 = arith.addf %1068, %1069 : vector<8x32xf32>
    %1071 = math.tanh %1070 : vector<8x32xf32>
    %1072 = arith.mulf %1067, %1071 : vector<8x32xf32>
    %1073 = vector.shape_cast %1047 : vector<8x1xi1> to vector<8x1xi1>
    %1074 = vector.broadcast %1073 : vector<8x1xi1> to vector<8x32xi1>
    %1075 = arith.select %1074, %1070, %1003 : vector<8x32xi1>, vector<8x32xf32>
    %1076 = vector.shape_cast %1047 : vector<8x1xi1> to vector<8x1xi1>
    %1077 = vector.broadcast %1076 : vector<8x1xi1> to vector<8x32xi1>
    %1078 = arith.select %1077, %1072, %1006 : vector<8x32xi1>, vector<8x32xf32>
    %1079 = vector.extract_strided_slice %14 {offsets = [2, 0, 0], sizes = [1, 8, 1], strides = [1, 1, 1]} : vector<8x8x1xi1> to vector<1x8x1xi1>
    %1080 = vector.shape_cast %1079 : vector<1x8x1xi1> to vector<8x1xi1>
    %1081 = vector.extract_strided_slice %1045 {offsets = [0, 0], sizes = [8, 32], strides = [1, 1]} : vector<8x128xf32> to vector<8x32xf32>
    %1082 = arith.negf %1081 : vector<8x32xf32>
    %1083 = math.exp %1082 : vector<8x32xf32>
    %cst_156 = arith.constant 1.000000e+00 : f32
    %1084 = vector.broadcast %cst_156 : f32 to vector<8x32xf32>
    %1085 = arith.addf %1084, %1083 : vector<8x32xf32>
    %1086 = arith.divf %1084, %1085 : vector<8x32xf32>
    %1087 = vector.extract_strided_slice %1045 {offsets = [0, 32], sizes = [8, 32], strides = [1, 1]} : vector<8x128xf32> to vector<8x32xf32>
    %1088 = arith.negf %1087 : vector<8x32xf32>
    %1089 = math.exp %1088 : vector<8x32xf32>
    %cst_157 = arith.constant 1.000000e+00 : f32
    %1090 = vector.broadcast %cst_157 : f32 to vector<8x32xf32>
    %1091 = arith.addf %1090, %1089 : vector<8x32xf32>
    %1092 = arith.divf %1090, %1091 : vector<8x32xf32>
    %1093 = vector.extract_strided_slice %1045 {offsets = [0, 64], sizes = [8, 32], strides = [1, 1]} : vector<8x128xf32> to vector<8x32xf32>
    %1094 = math.tanh %1093 : vector<8x32xf32>
    %1095 = vector.extract_strided_slice %1045 {offsets = [0, 96], sizes = [8, 32], strides = [1, 1]} : vector<8x128xf32> to vector<8x32xf32>
    %1096 = arith.negf %1095 : vector<8x32xf32>
    %1097 = math.exp %1096 : vector<8x32xf32>
    %cst_158 = arith.constant 1.000000e+00 : f32
    %1098 = vector.broadcast %cst_158 : f32 to vector<8x32xf32>
    %1099 = arith.addf %1098, %1097 : vector<8x32xf32>
    %1100 = arith.divf %1098, %1099 : vector<8x32xf32>
    %1101 = arith.mulf %1092, %1036 : vector<8x32xf32>
    %1102 = arith.mulf %1086, %1094 : vector<8x32xf32>
    %1103 = arith.addf %1101, %1102 : vector<8x32xf32>
    %1104 = math.tanh %1103 : vector<8x32xf32>
    %1105 = arith.mulf %1100, %1104 : vector<8x32xf32>
    %1106 = vector.shape_cast %1080 : vector<8x1xi1> to vector<8x1xi1>
    %1107 = vector.broadcast %1106 : vector<8x1xi1> to vector<8x32xi1>
    %1108 = arith.select %1107, %1103, %1036 : vector<8x32xi1>, vector<8x32xf32>
    %1109 = vector.shape_cast %1080 : vector<8x1xi1> to vector<8x1xi1>
    %1110 = vector.broadcast %1109 : vector<8x1xi1> to vector<8x32xi1>
    %1111 = arith.select %1110, %1105, %1039 : vector<8x32xi1>, vector<8x32xf32>
    %1112 = vector.extract_strided_slice %675 {offsets = [48, 0], sizes = [8, 128], strides = [1, 1]} : vector<64x256xf32> to vector<8x128xf32>
    %cst_159 = arith.constant dense<0.000000e+00> : vector<8x128xf32>
    %1113 = tpu.matmul %1078, %670, %cst_159 {dimension_numbers = #tpu.dot_dimension_numbers<[1], [0], [0], [1], [0, 0, 1, 1], [], []>} : vector<8x32xf32>, vector<32x128xf32>, vector<8x128xf32> -> vector<8x128xf32>
    %1114 = arith.addf %1112, %1113 : vector<8x128xf32>
    %1115 = vector.extract_strided_slice %675 {offsets = [8, 128], sizes = [8, 128], strides = [1, 1]} : vector<64x256xf32> to vector<8x128xf32>
    %cst_160 = arith.constant dense<0.000000e+00> : vector<8x128xf32>
    %1116 = tpu.matmul %1111, %671, %cst_160 {dimension_numbers = #tpu.dot_dimension_numbers<[1], [0], [0], [1], [0, 0, 1, 1], [], []>} : vector<8x32xf32>, vector<32x128xf32>, vector<8x128xf32> -> vector<8x128xf32>
    %1117 = arith.addf %1115, %1116 : vector<8x128xf32>
    %1118 = vector.extract_strided_slice %14 {offsets = [6, 0, 0], sizes = [1, 8, 1], strides = [1, 1, 1]} : vector<8x8x1xi1> to vector<1x8x1xi1>
    %1119 = vector.shape_cast %1118 : vector<1x8x1xi1> to vector<8x1xi1>
    %1120 = vector.extract_strided_slice %1114 {offsets = [0, 0], sizes = [8, 32], strides = [1, 1]} : vector<8x128xf32> to vector<8x32xf32>
    %1121 = arith.negf %1120 : vector<8x32xf32>
    %1122 = math.exp %1121 : vector<8x32xf32>
    %cst_161 = arith.constant 1.000000e+00 : f32
    %1123 = vector.broadcast %cst_161 : f32 to vector<8x32xf32>
    %1124 = arith.addf %1123, %1122 : vector<8x32xf32>
    %1125 = arith.divf %1123, %1124 : vector<8x32xf32>
    %1126 = vector.extract_strided_slice %1114 {offsets = [0, 32], sizes = [8, 32], strides = [1, 1]} : vector<8x128xf32> to vector<8x32xf32>
    %1127 = arith.negf %1126 : vector<8x32xf32>
    %1128 = math.exp %1127 : vector<8x32xf32>
    %cst_162 = arith.constant 1.000000e+00 : f32
    %1129 = vector.broadcast %cst_162 : f32 to vector<8x32xf32>
    %1130 = arith.addf %1129, %1128 : vector<8x32xf32>
    %1131 = arith.divf %1129, %1130 : vector<8x32xf32>
    %1132 = vector.extract_strided_slice %1114 {offsets = [0, 64], sizes = [8, 32], strides = [1, 1]} : vector<8x128xf32> to vector<8x32xf32>
    %1133 = math.tanh %1132 : vector<8x32xf32>
    %1134 = vector.extract_strided_slice %1114 {offsets = [0, 96], sizes = [8, 32], strides = [1, 1]} : vector<8x128xf32> to vector<8x32xf32>
    %1135 = arith.negf %1134 : vector<8x32xf32>
    %1136 = math.exp %1135 : vector<8x32xf32>
    %cst_163 = arith.constant 1.000000e+00 : f32
    %1137 = vector.broadcast %cst_163 : f32 to vector<8x32xf32>
    %1138 = arith.addf %1137, %1136 : vector<8x32xf32>
    %1139 = arith.divf %1137, %1138 : vector<8x32xf32>
    %1140 = arith.mulf %1131, %1075 : vector<8x32xf32>
    %1141 = arith.mulf %1125, %1133 : vector<8x32xf32>
    %1142 = arith.addf %1140, %1141 : vector<8x32xf32>
    %1143 = math.tanh %1142 : vector<8x32xf32>
    %1144 = arith.mulf %1139, %1143 : vector<8x32xf32>
    %1145 = vector.shape_cast %1119 : vector<8x1xi1> to vector<8x1xi1>
    %1146 = vector.broadcast %1145 : vector<8x1xi1> to vector<8x32xi1>
    %1147 = arith.select %1146, %1142, %1075 : vector<8x32xi1>, vector<8x32xf32>
    %1148 = vector.shape_cast %1119 : vector<8x1xi1> to vector<8x1xi1>
    %1149 = vector.broadcast %1148 : vector<8x1xi1> to vector<8x32xi1>
    %1150 = arith.select %1149, %1144, %1078 : vector<8x32xi1>, vector<8x32xf32>
    %1151 = vector.extract_strided_slice %14 {offsets = [1, 0, 0], sizes = [1, 8, 1], strides = [1, 1, 1]} : vector<8x8x1xi1> to vector<1x8x1xi1>
    %1152 = vector.shape_cast %1151 : vector<1x8x1xi1> to vector<8x1xi1>
    %1153 = vector.extract_strided_slice %1117 {offsets = [0, 0], sizes = [8, 32], strides = [1, 1]} : vector<8x128xf32> to vector<8x32xf32>
    %1154 = arith.negf %1153 : vector<8x32xf32>
    %1155 = math.exp %1154 : vector<8x32xf32>
    %cst_164 = arith.constant 1.000000e+00 : f32
    %1156 = vector.broadcast %cst_164 : f32 to vector<8x32xf32>
    %1157 = arith.addf %1156, %1155 : vector<8x32xf32>
    %1158 = arith.divf %1156, %1157 : vector<8x32xf32>
    %1159 = vector.extract_strided_slice %1117 {offsets = [0, 32], sizes = [8, 32], strides = [1, 1]} : vector<8x128xf32> to vector<8x32xf32>
    %1160 = arith.negf %1159 : vector<8x32xf32>
    %1161 = math.exp %1160 : vector<8x32xf32>
    %cst_165 = arith.constant 1.000000e+00 : f32
    %1162 = vector.broadcast %cst_165 : f32 to vector<8x32xf32>
    %1163 = arith.addf %1162, %1161 : vector<8x32xf32>
    %1164 = arith.divf %1162, %1163 : vector<8x32xf32>
    %1165 = vector.extract_strided_slice %1117 {offsets = [0, 64], sizes = [8, 32], strides = [1, 1]} : vector<8x128xf32> to vector<8x32xf32>
    %1166 = math.tanh %1165 : vector<8x32xf32>
    %1167 = vector.extract_strided_slice %1117 {offsets = [0, 96], sizes = [8, 32], strides = [1, 1]} : vector<8x128xf32> to vector<8x32xf32>
    %1168 = arith.negf %1167 : vector<8x32xf32>
    %1169 = math.exp %1168 : vector<8x32xf32>
    %cst_166 = arith.constant 1.000000e+00 : f32
    %1170 = vector.broadcast %cst_166 : f32 to vector<8x32xf32>
    %1171 = arith.addf %1170, %1169 : vector<8x32xf32>
    %1172 = arith.divf %1170, %1171 : vector<8x32xf32>
    %1173 = arith.mulf %1164, %1108 : vector<8x32xf32>
    %1174 = arith.mulf %1158, %1166 : vector<8x32xf32>
    %1175 = arith.addf %1173, %1174 : vector<8x32xf32>
    %1176 = math.tanh %1175 : vector<8x32xf32>
    %1177 = arith.mulf %1172, %1176 : vector<8x32xf32>
    %1178 = vector.shape_cast %1152 : vector<8x1xi1> to vector<8x1xi1>
    %1179 = vector.broadcast %1178 : vector<8x1xi1> to vector<8x32xi1>
    %1180 = arith.select %1179, %1175, %1108 : vector<8x32xi1>, vector<8x32xf32>
    %1181 = vector.shape_cast %1152 : vector<8x1xi1> to vector<8x1xi1>
    %1182 = vector.broadcast %1181 : vector<8x1xi1> to vector<8x32xi1>
    %1183 = arith.select %1182, %1177, %1111 : vector<8x32xi1>, vector<8x32xf32>
    %1184 = vector.extract_strided_slice %675 {offsets = [56, 0], sizes = [8, 128], strides = [1, 1]} : vector<64x256xf32> to vector<8x128xf32>
    %cst_167 = arith.constant dense<0.000000e+00> : vector<8x128xf32>
    %1185 = tpu.matmul %1150, %670, %cst_167 {dimension_numbers = #tpu.dot_dimension_numbers<[1], [0], [0], [1], [0, 0, 1, 1], [], []>} : vector<8x32xf32>, vector<32x128xf32>, vector<8x128xf32> -> vector<8x128xf32>
    %1186 = arith.addf %1184, %1185 : vector<8x128xf32>
    %1187 = vector.extract_strided_slice %675 {offsets = [0, 128], sizes = [8, 128], strides = [1, 1]} : vector<64x256xf32> to vector<8x128xf32>
    %cst_168 = arith.constant dense<0.000000e+00> : vector<8x128xf32>
    %1188 = tpu.matmul %1183, %671, %cst_168 {dimension_numbers = #tpu.dot_dimension_numbers<[1], [0], [0], [1], [0, 0, 1, 1], [], []>} : vector<8x32xf32>, vector<32x128xf32>, vector<8x128xf32> -> vector<8x128xf32>
    %1189 = arith.addf %1187, %1188 : vector<8x128xf32>
    %1190 = vector.extract_strided_slice %14 {offsets = [7, 0, 0], sizes = [1, 8, 1], strides = [1, 1, 1]} : vector<8x8x1xi1> to vector<1x8x1xi1>
    %1191 = vector.shape_cast %1190 : vector<1x8x1xi1> to vector<8x1xi1>
    %1192 = vector.extract_strided_slice %1186 {offsets = [0, 0], sizes = [8, 32], strides = [1, 1]} : vector<8x128xf32> to vector<8x32xf32>
    %1193 = arith.negf %1192 : vector<8x32xf32>
    %1194 = math.exp %1193 : vector<8x32xf32>
    %cst_169 = arith.constant 1.000000e+00 : f32
    %1195 = vector.broadcast %cst_169 : f32 to vector<8x32xf32>
    %1196 = arith.addf %1195, %1194 : vector<8x32xf32>
    %1197 = arith.divf %1195, %1196 : vector<8x32xf32>
    %1198 = vector.extract_strided_slice %1186 {offsets = [0, 32], sizes = [8, 32], strides = [1, 1]} : vector<8x128xf32> to vector<8x32xf32>
    %1199 = arith.negf %1198 : vector<8x32xf32>
    %1200 = math.exp %1199 : vector<8x32xf32>
    %cst_170 = arith.constant 1.000000e+00 : f32
    %1201 = vector.broadcast %cst_170 : f32 to vector<8x32xf32>
    %1202 = arith.addf %1201, %1200 : vector<8x32xf32>
    %1203 = arith.divf %1201, %1202 : vector<8x32xf32>
    %1204 = vector.extract_strided_slice %1186 {offsets = [0, 64], sizes = [8, 32], strides = [1, 1]} : vector<8x128xf32> to vector<8x32xf32>
    %1205 = math.tanh %1204 : vector<8x32xf32>
    %1206 = vector.extract_strided_slice %1186 {offsets = [0, 96], sizes = [8, 32], strides = [1, 1]} : vector<8x128xf32> to vector<8x32xf32>
    %1207 = arith.negf %1206 : vector<8x32xf32>
    %1208 = math.exp %1207 : vector<8x32xf32>
    %cst_171 = arith.constant 1.000000e+00 : f32
    %1209 = vector.broadcast %cst_171 : f32 to vector<8x32xf32>
    %1210 = arith.addf %1209, %1208 : vector<8x32xf32>
    %1211 = arith.divf %1209, %1210 : vector<8x32xf32>
    %1212 = arith.mulf %1203, %1147 : vector<8x32xf32>
    %1213 = arith.mulf %1197, %1205 : vector<8x32xf32>
    %1214 = arith.addf %1212, %1213 : vector<8x32xf32>
    %1215 = math.tanh %1214 : vector<8x32xf32>
    %1216 = arith.mulf %1211, %1215 : vector<8x32xf32>
    %1217 = vector.shape_cast %1191 : vector<8x1xi1> to vector<8x1xi1>
    %1218 = vector.broadcast %1217 : vector<8x1xi1> to vector<8x32xi1>
    %1219 = arith.select %1218, %1216, %1150 : vector<8x32xi1>, vector<8x32xf32>
    %1220 = vector.extract_strided_slice %14 {offsets = [0, 0, 0], sizes = [1, 8, 1], strides = [1, 1, 1]} : vector<8x8x1xi1> to vector<1x8x1xi1>
    %1221 = vector.shape_cast %1220 : vector<1x8x1xi1> to vector<8x1xi1>
    %1222 = vector.extract_strided_slice %1189 {offsets = [0, 0], sizes = [8, 32], strides = [1, 1]} : vector<8x128xf32> to vector<8x32xf32>
    %1223 = arith.negf %1222 : vector<8x32xf32>
    %1224 = math.exp %1223 : vector<8x32xf32>
    %cst_172 = arith.constant 1.000000e+00 : f32
    %1225 = vector.broadcast %cst_172 : f32 to vector<8x32xf32>
    %1226 = arith.addf %1225, %1224 : vector<8x32xf32>
    %1227 = arith.divf %1225, %1226 : vector<8x32xf32>
    %1228 = vector.extract_strided_slice %1189 {offsets = [0, 32], sizes = [8, 32], strides = [1, 1]} : vector<8x128xf32> to vector<8x32xf32>
    %1229 = arith.negf %1228 : vector<8x32xf32>
    %1230 = math.exp %1229 : vector<8x32xf32>
    %cst_173 = arith.constant 1.000000e+00 : f32
    %1231 = vector.broadcast %cst_173 : f32 to vector<8x32xf32>
    %1232 = arith.addf %1231, %1230 : vector<8x32xf32>
    %1233 = arith.divf %1231, %1232 : vector<8x32xf32>
    %1234 = vector.extract_strided_slice %1189 {offsets = [0, 64], sizes = [8, 32], strides = [1, 1]} : vector<8x128xf32> to vector<8x32xf32>
    %1235 = math.tanh %1234 : vector<8x32xf32>
    %1236 = vector.extract_strided_slice %1189 {offsets = [0, 96], sizes = [8, 32], strides = [1, 1]} : vector<8x128xf32> to vector<8x32xf32>
    %1237 = arith.negf %1236 : vector<8x32xf32>
    %1238 = math.exp %1237 : vector<8x32xf32>
    %cst_174 = arith.constant 1.000000e+00 : f32
    %1239 = vector.broadcast %cst_174 : f32 to vector<8x32xf32>
    %1240 = arith.addf %1239, %1238 : vector<8x32xf32>
    %1241 = arith.divf %1239, %1240 : vector<8x32xf32>
    %1242 = arith.mulf %1233, %1180 : vector<8x32xf32>
    %1243 = arith.mulf %1227, %1235 : vector<8x32xf32>
    %1244 = arith.addf %1242, %1243 : vector<8x32xf32>
    %1245 = math.tanh %1244 : vector<8x32xf32>
    %1246 = arith.mulf %1241, %1245 : vector<8x32xf32>
    %1247 = vector.shape_cast %1221 : vector<8x1xi1> to vector<8x1xi1>
    %1248 = vector.broadcast %1247 : vector<8x1xi1> to vector<8x32xi1>
    %1249 = arith.select %1248, %1246, %1183 : vector<8x32xi1>, vector<8x32xf32>
    %1250 = tpu.concatenate %1219, %1249 in 1 : vector<8x32xf32>, vector<8x32xf32> -> vector<8x64xf32>
    %c0_175 = arith.constant 0 : index
    %c0_176 = arith.constant 0 : index
    %1251 = vector.load %arg12[%c0_175, %c0_176] : memref<64x32xf32, #tpu.memory_space<vmem>>, vector<64x32xf32>
    %cst_177 = arith.constant dense<0.000000e+00> : vector<8x32xf32>
    %1252 = tpu.matmul %1250, %1251, %cst_177 {dimension_numbers = #tpu.dot_dimension_numbers<[1], [0], [0], [1], [0, 0, 1, 1], [], []>} : vector<8x64xf32>, vector<64x32xf32>, vector<8x32xf32> -> vector<8x32xf32>
    %c0_178 = arith.constant 0 : index
    %c0_179 = arith.constant 0 : index
    %1253 = vector.load %arg13[%c0_178, %c0_179] : memref<1x32xf32, #tpu.memory_space<vmem>>, vector<1x32xf32>
    %1254 = vector.broadcast %1253 : vector<1x32xf32> to vector<8x32xf32>
    %1255 = arith.addf %1252, %1254 : vector<8x32xf32>
    %c0_180 = arith.constant 0 : index
    %c0_181 = arith.constant 0 : index
    %1256 = vector.load %arg14[%c0_180, %c0_181] : memref<32x1xf32, #tpu.memory_space<vmem>>, vector<32x1xf32>
    %cst_182 = arith.constant dense<0.000000e+00> : vector<8x1xf32>
    %1257 = tpu.matmul %1255, %1256, %cst_182 {dimension_numbers = #tpu.dot_dimension_numbers<[1], [0], [0], [1], [0, 0, 1, 1], [], []>} : vector<8x32xf32>, vector<32x1xf32>, vector<8x1xf32> -> vector<8x1xf32>
    %c0_183 = arith.constant 0 : index
    %c0_184 = arith.constant 0 : index
    %1258 = vector.load %arg15[%c0_183, %c0_184] : memref<1x1xf32, #tpu.memory_space<vmem>>, vector<1x1xf32>
    %1259 = vector.broadcast %1258 : vector<1x1xf32> to vector<8x1xf32>
    %1260 = arith.addf %1257, %1259 : vector<8x1xf32>
    %c0_185 = arith.constant 0 : index
    %c0_186 = arith.constant 0 : index
    %1261 = vector.load %arg16[%c0_185, %c0_186] : memref<8x1xf32, #tpu.memory_space<vmem>>, vector<8x1xf32>
    tpu.vector_store %arg16[%c0_185, %c0_186], %1260 {strides = array<i32>} : memref<8x1xf32, #tpu.memory_space<vmem>>, vector<8x1xf32>,
    return
  }
  func.func @transform_0(%arg0: i32) -> (i32, i32) {
    %c0_i32 = arith.constant 0 : i32
    %c0_i32_0 = arith.constant 0 : i32
    %c0_i32_1 = arith.constant 0 : i32
    return %c0_i32, %c0_i32_0 : i32, i32
  }
  func.func @transform_1(%arg0: i32) -> (i32, i32) {
    %c0_i32 = arith.constant 0 : i32
    %c0_i32_0 = arith.constant 0 : i32
    %c0_i32_1 = arith.constant 0 : i32
    return %c0_i32, %c0_i32_0 : i32, i32
  }
  func.func @transform_2(%arg0: i32) -> (i32, i32) {
    %c0_i32 = arith.constant 0 : i32
    %c0_i32_0 = arith.constant 0 : i32
    %c0_i32_1 = arith.constant 0 : i32
    return %c0_i32, %c0_i32_0 : i32, i32
  }
  func.func @transform_3(%arg0: i32) -> (i32, i32) {
    %c0_i32 = arith.constant 0 : i32
    %c0_i32_0 = arith.constant 0 : i32
    %c0_i32_1 = arith.constant 0 : i32
    return %c0_i32, %c0_i32_0 : i32, i32
  }
  func.func @transform_4(%arg0: i32) -> (i32, i32) {
    %c0_i32 = arith.constant 0 : i32
    %c0_i32_0 = arith.constant 0 : i32
    %c0_i32_1 = arith.constant 0 : i32
    return %c0_i32, %c0_i32_0 : i32, i32
  }
  func.func @transform_5(%arg0: i32) -> (i32, i32) {
    %c0_i32 = arith.constant 0 : i32
    %c0_i32_0 = arith.constant 0 : i32
    %c0_i32_1 = arith.constant 0 : i32
    return %c0_i32, %c0_i32_0 : i32, i32
  }
  func.func @transform_6(%arg0: i32) -> (i32, i32) {
    %c0_i32 = arith.constant 0 : i32
    %c0_i32_0 = arith.constant 0 : i32
    %c0_i32_1 = arith.constant 0 : i32
    return %c0_i32, %c0_i32_0 : i32, i32
  }
  func.func @transform_7(%arg0: i32) -> (i32, i32) {
    %c0_i32 = arith.constant 0 : i32
    %c0_i32_0 = arith.constant 0 : i32
    %c0_i32_1 = arith.constant 0 : i32
    return %c0_i32, %c0_i32_0 : i32, i32
  }
  func.func @transform_8(%arg0: i32) -> (i32, i32) {
    %c0_i32 = arith.constant 0 : i32
    %c0_i32_0 = arith.constant 0 : i32
    %c0_i32_1 = arith.constant 0 : i32
    return %c0_i32, %c0_i32_0 : i32, i32
  }
  func.func @transform_9(%arg0: i32) -> (i32, i32) {
    %c0_i32 = arith.constant 0 : i32
    %c0_i32_0 = arith.constant 0 : i32
    %c0_i32_1 = arith.constant 0 : i32
    return %c0_i32, %c0_i32_0 : i32, i32
  }
  func.func @transform_10(%arg0: i32) -> (i32, i32) {
    %c0_i32 = arith.constant 0 : i32
    %c0_i32_0 = arith.constant 0 : i32
    %c0_i32_1 = arith.constant 0 : i32
    return %c0_i32, %c0_i32_0 : i32, i32
  }
  func.func @transform_11(%arg0: i32) -> (i32, i32) {
    %c0_i32 = arith.constant 0 : i32
    %c0_i32_0 = arith.constant 0 : i32
    %c0_i32_1 = arith.constant 0 : i32
    return %c0_i32, %c0_i32_0 : i32, i32
  }
  func.func @transform_12(%arg0: i32) -> (i32, i32) {
    %c0_i32 = arith.constant 0 : i32
    %c0_i32_0 = arith.constant 0 : i32
    %c0_i32_1 = arith.constant 0 : i32
    return %c0_i32, %c0_i32_0 : i32, i32
  }
  func.func @transform_13(%arg0: i32) -> (i32, i32) {
    %c0_i32 = arith.constant 0 : i32
    %c0_i32_0 = arith.constant 0 : i32
    %c0_i32_1 = arith.constant 0 : i32
    return %c0_i32, %c0_i32_0 : i32, i32
  }
  func.func @transform_14(%arg0: i32) -> (i32, i32) {
    %c0_i32 = arith.constant 0 : i32
    %c0_i32_0 = arith.constant 0 : i32
    %c0_i32_1 = arith.constant 0 : i32
    return %c0_i32, %c0_i32_0 : i32, i32
  }
  func.func @transform_15(%arg0: i32) -> (i32, i32) {
    %c0_i32 = arith.constant 0 : i32
    %c0_i32_0 = arith.constant 0 : i32
    %c0_i32_1 = arith.constant 0 : i32
    return %c0_i32, %c0_i32_0 : i32, i32
  }
}

</mosaic_0001>

<llo_original>
// kernel: _lambda_.1
$region0: #{_lambda_.1}
  #allocation0 [shape = 'u32[]', space=smem, size = 0x4, offset = 0x4, fixed_abs, tag = 'smem constant byte address 0x4 - core index']
  #allocation1 [shape = 'u32[144,128]{1,0:T(1,128)}', space=vmem, size = 0x12000, scoped, tag = 'internal scratch']
  #allocation2 [shape = 'f32[1,1]{1,0:T(1,128)S(1)}', space=vmem, size = 0x200, scoped, tag = 'scoped memory for _lambda_.1']
  %s0 = inlined_call_operand.vmem [shape: s32[8,8], index: 0, kind: input, shape index: {}]
  %s1 = inlined_call_operand.vmem [shape: s32[8,1], index: 1, kind: input, shape index: {}]
  %s2 = inlined_call_operand.vmem [shape: f32[50,32], index: 2, kind: input, shape index: {}]
  %s3 = inlined_call_operand.vmem [shape: f32[32,256], index: 3, kind: input, shape index: {}]
  %s4 = inlined_call_operand.vmem [shape: f32[32,128], index: 4, kind: input, shape index: {}]
  %s5 = inlined_call_operand.hbm [shape: f32[32,128], index: 5, kind: input, shape index: {}]
  %s6 = inlined_call_operand.vmem [shape: f32[1,256], index: 6, kind: input, shape index: {}]
  %s7 = inlined_call_operand.vmem [shape: f32[64,256], index: 7, kind: input, shape index: {}]
  %s8 = inlined_call_operand.hbm [shape: f32[32,128], index: 8, kind: input, shape index: {}]
  %s9 = inlined_call_operand.hbm [shape: f32[32,128], index: 9, kind: input, shape index: {}]
  %s10 = inlined_call_operand.vmem [shape: f32[1,256], index: 10, kind: input, shape index: {}]
  %s11 = inlined_call_operand.vmem [shape: f32[64,32], index: 11, kind: input, shape index: {}]
  %s12 = inlined_call_operand.hbm [shape: f32[1,32], index: 12, kind: input, shape index: {}]
  %s13 = inlined_call_operand.vmem [shape: f32[32,1], index: 13, kind: input, shape index: {}]
  %s14 = inlined_call_operand.<no memory space> [shape: f32[1,1], index: 14, kind: input, shape index: {}]
  %s15 = inlined_call_operand.vmem [shape: f32[8,1], index: 15, kind: output, shape index: {}]
  %s16 = sld [smem:[#allocation0]]
  $region86: #{_lambda_.1} parent=0
    _
  %s18 = ssub.s32 1, %s16
  %s19 = scalar_select 0, %s18, %s16
  %v20 = vstv %s14
  %21 = vst [vmem:[#allocation2] sm:$0x1] %v20
  $region1: #{_lambda_.1} parent=0
    #allocation3 [shape = 'u8[16384]{0}', space=vmem, size = 0x4000, scoped, tag = 'input window, operand 5, single buffered']
    #allocation4 [shape = 's32[1]{0}', space=sflag, size = 0x4, scoped, tag = 'scoped memory for _lambda_.1']
    #allocation5 [shape = 'u8[16384]{0}', space=vmem, size = 0x4000, scoped, tag = 'input window, operand 8, single buffered']
    #allocation6 [shape = 's32[1]{0}', space=sflag, size = 0x4, scoped, tag = 'scoped memory for _lambda_.1']
    #allocation7 [shape = 'u8[16384]{0}', space=vmem, size = 0x4000, scoped, tag = 'input window, operand 9, single buffered']
    #allocation8 [shape = 'u8[512]{0}', space=vmem, size = 0x400, scoped, tag = 'input window, operand 12, single buffered']
    #allocation9 [shape = 's32[1]{0}', space=sflag, size = 0x4, scoped, tag = 'scoped memory for _lambda_.1']
    %22 = vsyncpa [#allocation4], 0
    %23 = vsyncpa [#allocation6], 0
    %24 = vsyncpa [#allocation9], 0
    // Predicated region
    $region2: #{_lambda_.1} parent=1 // pred_check
      _
    $region3: #{_lambda_.1} parent=1 // pred_check_branch
      %26 = sbr.rel (0) target = $region5
    $region4: #{_lambda_.1} parent=1 // pred_region
      _
    $region5: #{_lambda_.1} parent=1 // pred_fallthru
      _
    // Predicated region
    $region6: #{_lambda_.1} parent=1 // pred_check
      _
    $region7: #{_lambda_.1} parent=1 // pred_check_branch
      %28 = sbr.rel (0) target = $region9
    $region8: #{_lambda_.1} parent=1 // pred_region
      _
    $region9: #{_lambda_.1} parent=1 // pred_fallthru
      _
    // Predicated region
    $region10: #{_lambda_.1} parent=1 // pred_check
      _
    $region11: #{_lambda_.1} parent=1 // pred_check_branch
      %30 = sbr.rel (0) target = $region13
    $region12: #{_lambda_.1} parent=1 // pred_region
      _
    $region13: #{_lambda_.1} parent=1 // pred_fallthru
      _
    // Predicated region
    $region14: #{_lambda_.1} parent=1 // pred_check
      _
    $region15: #{_lambda_.1} parent=1 // pred_check_branch
      %32 = sbr.rel (0) target = $region17
    $region16: #{_lambda_.1} parent=1 // pred_region
      _
    $region17: #{_lambda_.1} parent=1 // pred_fallthru
      _
    // Predicated region
    $region18: #{_lambda_.1} parent=1 // pred_check
      _
    $region19: #{_lambda_.1} parent=1 // pred_check_branch
      %34 = sbr.rel (0) target = $region21
    $region20: #{_lambda_.1} parent=1 // pred_region
      _
    $region21: #{_lambda_.1} parent=1 // pred_fallthru
      _
    // Predicated region
    $region22: #{_lambda_.1} parent=1 // pred_check
      _
    $region23: #{_lambda_.1} parent=1 // pred_check_branch
      %36 = sbr.rel (0) target = $region25
    $region24: #{_lambda_.1} parent=1 // pred_region
      %s38 = ssub.s32 512, 512
      %39 = vsyncadd [#allocation4], %s38
      %s40 = sshll.u32 [#allocation3], 4
      %s41 = int_to_ptr.vmem [resolvable:$true] %s40
      %46 = dma.hbm_to_vmem [thread:$0]  %s5, 512, %s41, [#allocation4], 128, 128, 8
    $region25: #{_lambda_.1} parent=1 // pred_fallthru
      _
    // Predicated region
    $region26: #{_lambda_.1} parent=1 // pred_check
      _
    $region27: #{_lambda_.1} parent=1 // pred_check_branch
      %48 = sbr.rel (0) target = $region29
    $region28: #{_lambda_.1} parent=1 // pred_region
      _
    $region29: #{_lambda_.1} parent=1 // pred_fallthru
      _
    // Predicated region
    $region30: #{_lambda_.1} parent=1 // pred_check
      _
    $region31: #{_lambda_.1} parent=1 // pred_check_branch
      %50 = sbr.rel (0) target = $region33
    $region32: #{_lambda_.1} parent=1 // pred_region
      _
    $region33: #{_lambda_.1} parent=1 // pred_fallthru
      _
    // Predicated region
    $region34: #{_lambda_.1} parent=1 // pred_check
      _
    $region35: #{_lambda_.1} parent=1 // pred_check_branch
      %52 = sbr.rel (0) target = $region37
    $region36: #{_lambda_.1} parent=1 // pred_region
      %s54 = ssub.s32 512, 512
      %55 = vsyncadd [#allocation6], %s54
      %s56 = sshll.u32 [#allocation5], 4
      %s57 = int_to_ptr.vmem [resolvable:$true] %s56
      %62 = dma.hbm_to_vmem [thread:$0]  %s8, 512, %s57, [#allocation6], 128, 128, 8
    $region37: #{_lambda_.1} parent=1 // pred_fallthru
      _
    // Predicated region
    $region38: #{_lambda_.1} parent=1 // pred_check
      _
    $region39: #{_lambda_.1} parent=1 // pred_check_branch
      %64 = sbr.rel (0) target = $region41
    $region40: #{_lambda_.1} parent=1 // pred_region
      %s66 = ssub.s32 512, 512
      %67 = vsyncadd [#allocation6], %s66
      %s68 = sshll.u32 [#allocation7], 4
      %s69 = int_to_ptr.vmem [resolvable:$true] %s68
      %74 = dma.hbm_to_vmem [thread:$0]  %s9, 512, %s69, [#allocation6], 128, 128, 8
    $region41: #{_lambda_.1} parent=1 // pred_fallthru
      _
    // Predicated region
    $region42: #{_lambda_.1} parent=1 // pred_check
      _
    $region43: #{_lambda_.1} parent=1 // pred_check_branch
      %76 = sbr.rel (0) target = $region45
    $region44: #{_lambda_.1} parent=1 // pred_region
      _
    $region45: #{_lambda_.1} parent=1 // pred_fallthru
      _
    // Predicated region
    $region46: #{_lambda_.1} parent=1 // pred_check
      _
    $region47: #{_lambda_.1} parent=1 // pred_check_branch
      %78 = sbr.rel (0) target = $region49
    $region48: #{_lambda_.1} parent=1 // pred_region
      _
    $region49: #{_lambda_.1} parent=1 // pred_fallthru
      _
    // Predicated region
    $region50: #{_lambda_.1} parent=1 // pred_check
      _
    $region51: #{_lambda_.1} parent=1 // pred_check_branch
      %80 = sbr.rel (0) target = $region53
    $region52: #{_lambda_.1} parent=1 // pred_region
      %s82 = ssub.s32 16, 16
      %83 = vsyncadd [#allocation9], %s82
      %s85 = sshll.u32 [#allocation8], 4
      %s86 = int_to_ptr.vmem [resolvable:$true] %s85
      %88 = dma.hbm_to_vmem [thread:$0]  %s12, 16, %s86, [#allocation9]
    $region53: #{_lambda_.1} parent=1 // pred_fallthru
      _
    // Predicated region
    $region54: #{_lambda_.1} parent=1 // pred_check
      _
    $region55: #{_lambda_.1} parent=1 // pred_check_branch
      %90 = sbr.rel (0) target = $region57
    $region56: #{_lambda_.1} parent=1 // pred_region
      _
    $region57: #{_lambda_.1} parent=1 // pred_fallthru
      _
    // Predicated region
    $region58: #{_lambda_.1} parent=1 // pred_check
      _
    $region59: #{_lambda_.1} parent=1 // pred_check_branch
      %92 = sbr.rel (0) target = $region61
    $region60: #{_lambda_.1} parent=1 // pred_region
      _
    $region61: #{_lambda_.1} parent=1 // pred_fallthru
      _
    // Predicated region
    $region62: #{_lambda_.1} parent=1 // pred_check
      _
    $region63: #{_lambda_.1} parent=1 // pred_check_branch
      %94 = sbr.rel (0) target = $region65
    $region64: #{_lambda_.1} parent=1 // pred_region
      %95 = dma.done [#allocation4], 512
    $region65: #{_lambda_.1} parent=1 // pred_fallthru
      _
    // Predicated region
    $region66: #{_lambda_.1} parent=1 // pred_check
      _
    $region67: #{_lambda_.1} parent=1 // pred_check_branch
      %97 = sbr.rel (0) target = $region69
    $region68: #{_lambda_.1} parent=1 // pred_region
      %98 = dma.done [#allocation6], 512
    $region69: #{_lambda_.1} parent=1 // pred_fallthru
      _
    // Predicated region
    $region70: #{_lambda_.1} parent=1 // pred_check
      _
    $region71: #{_lambda_.1} parent=1 // pred_check_branch
      %100 = sbr.rel (0) target = $region73
    $region72: #{_lambda_.1} parent=1 // pred_region
      %101 = dma.done [#allocation6], 512
    $region73: #{_lambda_.1} parent=1 // pred_fallthru
      _
    // Predicated region
    $region74: #{_lambda_.1} parent=1 // pred_check
      _
    $region75: #{_lambda_.1} parent=1 // pred_check_branch
      %103 = sbr.rel (0) target = $region77
    $region76: #{_lambda_.1} parent=1 // pred_region
      %104 = dma.done [#allocation9], 16
    $region77: #{_lambda_.1} parent=1 // pred_fallthru
      _
    %v105 = vld [vmem:[%s0] sm:$0xff]
    %v106 = vlaneseq
    %v107 = vshrl.u32 %v106, 7
    %v108 = vsub.s32 0, %v107
    %v109 = vrot.slane %v105, %v108
    %111 = vbcast.lane.b32.xlu0 %v109, 256
    %v112 = vpop.permute.xlu0 %111
    %v113 = vlaneseq
    %v114 = vshrl.u32 %v113, 7
    %v115 = vsub.s32 1, %v114
    %v116 = vrot.slane %v105, %v115
    %118 = vbcast.lane.b32.xlu0 %v116, 256
    %v119 = vpop.permute.xlu0 %118
    %v120 = vlaneseq
    %v121 = vshrl.u32 %v120, 7
    %v122 = vsub.s32 2, %v121
    %v123 = vrot.slane %v105, %v122
    %125 = vbcast.lane.b32.xlu0 %v123, 256
    %v126 = vpop.permute.xlu0 %125
    %v127 = vlaneseq
    %v128 = vshrl.u32 %v127, 7
    %v129 = vsub.s32 3, %v128
    %v130 = vrot.slane %v105, %v129
    %132 = vbcast.lane.b32.xlu0 %v130, 256
    %v133 = vpop.permute.xlu0 %132
    %v134 = vlaneseq
    %v135 = vshrl.u32 %v134, 7
    %v136 = vsub.s32 4, %v135
    %v137 = vrot.slane %v105, %v136
    %139 = vbcast.lane.b32.xlu0 %v137, 256
    %v140 = vpop.permute.xlu0 %139
    %v141 = vlaneseq
    %v142 = vshrl.u32 %v141, 7
    %v143 = vsub.s32 5, %v142
    %v144 = vrot.slane %v105, %v143
    %146 = vbcast.lane.b32.xlu0 %v144, 256
    %v147 = vpop.permute.xlu0 %146
    %v148 = vlaneseq
    %v149 = vshrl.u32 %v148, 7
    %v150 = vsub.s32 6, %v149
    %v151 = vrot.slane %v105, %v150
    %153 = vbcast.lane.b32.xlu0 %v151, 256
    %v154 = vpop.permute.xlu0 %153
    %v155 = vlaneseq
    %v156 = vshrl.u32 %v155, 7
    %v157 = vsub.s32 7, %v156
    %v158 = vrot.slane %v105, %v157
    %160 = vbcast.lane.b32.xlu0 %v158, 256
    %v161 = vpop.permute.xlu0 %160
    %v162 = vlaneseq
    %v163 = vand.u32 %v162, 127
    %vm164 = vcmp.eq.s32.totalorder %v112, %v163
    %vm165 = vcmp.eq.s32.totalorder %v119, %v163
    %vm166 = vcmp.eq.s32.totalorder %v126, %v163
    %vm167 = vcmp.eq.s32.totalorder %v133, %v163
    %vm168 = vcmp.eq.s32.totalorder %v140, %v163
    %vm169 = vcmp.eq.s32.totalorder %v147, %v163
    %vm170 = vcmp.eq.s32.totalorder %v154, %v163
    %vm171 = vcmp.eq.s32.totalorder %v161, %v163
    %v172 = vsel %vm164, 1, 0
    %v173 = vsel %vm165, 1, 0
    %v174 = vsel %vm166, 1, 0
    %v175 = vsel %vm167, 1, 0
    %v176 = vsel %vm168, 1, 0
    %v177 = vsel %vm169, 1, 0
    %v178 = vsel %vm170, 1, 0
    %v179 = vsel %vm171, 1, 0
    %v180 = vcvt.s32.f32 %v172
    %v181 = vcvt.s32.f32 %v173
    %v182 = vcvt.s32.f32 %v174
    %v183 = vcvt.s32.f32 %v175
    %v184 = vcvt.s32.f32 %v176
    %v185 = vcvt.s32.f32 %v177
    %v186 = vcvt.s32.f32 %v178
    %v187 = vcvt.s32.f32 %v179
    %v188 = vld [vmem:[%s2] sm:$0xff]
    %v189 = vld [vmem:[%s2 + $0x8] sm:$0xff]
    %v190 = vld [vmem:[%s2 + $0x10] sm:$0xff]
    %v191 = vld [vmem:[%s2 + $0x18] sm:$0xff]
    %v192 = vld [vmem:[%s2 + $0x20] sm:$0xff]
    %v193 = vld [vmem:[%s2 + $0x28] sm:$0xff]
    %v194 = vld [vmem:[%s2 + $0x30] sm:$0x3]
    %vm195 = vcmask 408576
    %v197 = vsel %vm195, %v180, 0
    %v200 = vsel %vm195, %v181, 0
    %v203 = vsel %vm195, %v182, 0
    %v206 = vsel %vm195, %v183, 0
    %v209 = vsel %vm195, %v184, 0
    %v212 = vsel %vm195, %v185, 0
    %v215 = vsel %vm195, %v186, 0
    %v218 = vsel %vm195, %v187, 0
    %vm220 = vcmask 1041408
    %v222 = vsel %vm220, %v194, 0
    %224 = vmatprep.subr.mxu0 0.0
    %225 = vmatpush1.msra.mxu0 %v188
    %226 = vmatprep.subr.mxu0 0.0
    %227 = vmatpush1.msra.mxu0 %v189
    %228 = vmatprep.subr.mxu0 0.0
    %229 = vmatpush1.msra.mxu0 %v190
    %230 = vmatprep.subr.mxu0 0.0
    %231 = vmatpush1.msra.mxu0 %v191
    %232 = vmatprep.subr.mxu0 0.0
    %233 = vmatpush1.msra.mxu0 %v192
    %234 = vmatprep.subr.mxu0 0.0
    %235 = vmatpush1.msra.mxu0 %v193
    %236 = vmatprep.subr.mxu0 0.0
    %237 = vmatpush1.msra.mxu0 %v222
    %238 = vmatprep.subr.mxu0 0.0
    %239 = vmatpush1.msra.mxu0 0.0
    %240 = vmatprep.subr.mxu0 0.0
    %241 = vmatpush1.msra.mxu0 0.0
    %242 = vmatprep.subr.mxu0 0.0
    %243 = vmatpush1.msra.mxu0 0.0
    %244 = vmatprep.subr.mxu0 0.0
    %245 = vmatpush1.msra.mxu0 0.0
    %246 = vmatprep.subr.mxu0 0.0
    %247 = vmatpush1.msra.mxu0 0.0
    %248 = vmatprep.subr.mxu0 0.0
    %249 = vmatpush1.msra.mxu0 0.0
    %250 = vmatprep.subr.mxu0 0.0
    %251 = vmatpush1.msra.mxu0 0.0
    %252 = vmatprep.subr.mxu0 0.0
    %253 = vmatpush1.msra.mxu0 0.0
    %254 = vmatprep.subr.mxu0 0.0
    %255 = vmatpush1.msra.mxu0 0.0
    %256 = vmatprep.subr.mxu0 0.0
    %257 = vmatpush1.msra.mxu0 0.0
    %258 = vmatprep.subr.mxu0 0.0
    %259 = vmatpush1.msra.mxu0 0.0
    %260 = vmatprep.subr.mxu0 0.0
    %261 = vmatpush1.msra.mxu0 0.0
    %262 = vmatprep.subr.mxu0 0.0
    %263 = vmatpush1.msra.mxu0 0.0
    %264 = vmatprep.subr.mxu0 0.0
    %265 = vmatpush1.msra.mxu0 0.0
    %266 = vmatprep.subr.mxu0 0.0
    %267 = vmatpush1.msra.mxu0 0.0
    %268 = vmatprep.subr.mxu0 0.0
    %269 = vmatpush1.msra.mxu0 0.0
    %270 = vmatprep.subr.mxu0 0.0
    %271 = vmatpush1.msra.mxu0 0.0
    %272 = vmatprep.subr.mxu0 0.0
    %273 = vmatpush1.msra.mxu0 0.0
    %274 = vmatprep.subr.mxu0 0.0
    %275 = vmatpush1.msra.mxu0 0.0
    %276 = vmatprep.subr.mxu0 0.0
    %277 = vmatpush1.msra.mxu0 0.0
    %278 = vmatprep.subr.mxu0 0.0
    %279 = vmatpush1.msra.mxu0 0.0
    %280 = vmatprep.subr.mxu0 0.0
    %281 = vmatpush1.msra.mxu0 0.0
    %282 = vmatprep.subr.mxu0 0.0
    %283 = vmatpush1.msra.mxu0 0.0
    %284 = vmatprep.subr.mxu0 0.0
    %285 = vmatpush1.msra.mxu0 0.0
    %286 = vmatprep.subr.mxu0 0.0
    %287 = vmatpush1.msra.mxu0 0.0
    %288 = vmatprep.mubr.f32.mxu0 0.0
    %289 = vmatmul.mubr.f32.gmra.mrb[0].mxu0 %v197
    %v290 = vpop.f32.mrb[0].mxu0
    %v291 = vadd.f32 0.0, %v290
    %v292 = vpop.f32.mrb[0].mxu0
    %293 = vmatprep.mubr.f32.mxu0 0.0
    %294 = vmatmul.mubr.f32.gmra.mrb[0].mxu0 %v200
    %v295 = vpop.f32.mrb[0].mxu0
    %v296 = vadd.f32 0.0, %v295
    %v297 = vpop.f32.mrb[0].mxu0
    %298 = vmatprep.mubr.f32.mxu0 0.0
    %299 = vmatmul.mubr.f32.gmra.mrb[0].mxu0 %v203
    %v300 = vpop.f32.mrb[0].mxu0
    %v301 = vadd.f32 0.0, %v300
    %v302 = vpop.f32.mrb[0].mxu0
    %303 = vmatprep.mubr.f32.mxu0 0.0
    %304 = vmatmul.mubr.f32.gmra.mrb[0].mxu0 %v206
    %v305 = vpop.f32.mrb[0].mxu0
    %v306 = vadd.f32 0.0, %v305
    %v307 = vpop.f32.mrb[0].mxu0
    %308 = vmatprep.mubr.f32.mxu0 0.0
    %309 = vmatmul.mubr.f32.gmra.mrb[0].mxu0 %v209
    %v310 = vpop.f32.mrb[0].mxu0
    %v311 = vadd.f32 0.0, %v310
    %v312 = vpop.f32.mrb[0].mxu0
    %313 = vmatprep.mubr.f32.mxu0 0.0
    %314 = vmatmul.mubr.f32.gmra.mrb[0].mxu0 %v212
    %v315 = vpop.f32.mrb[0].mxu0
    %v316 = vadd.f32 0.0, %v315
    %v317 = vpop.f32.mrb[0].mxu0
    %318 = vmatprep.mubr.f32.mxu0 0.0
    %319 = vmatmul.mubr.f32.gmra.mrb[0].mxu0 %v215
    %v320 = vpop.f32.mrb[0].mxu0
    %v321 = vadd.f32 0.0, %v320
    %v322 = vpop.f32.mrb[0].mxu0
    %323 = vmatprep.mubr.f32.mxu0 0.0
    %324 = vmatmul.mubr.f32.gmra.mrb[0].mxu0 %v218
    %v325 = vpop.f32.mrb[0].mxu0
    %v326 = vadd.f32 0.0, %v325
    %v327 = vpop.f32.mrb[0].mxu0
    %328 = vdwg.mxu0
    %v329 = vld [vmem:[%s1] sm:$0xff]
    %vm330 = vcmp.gt.s32.totalorder %v329, 0
    %vm331 = vcmp.gt.s32.totalorder %v329, 1
    %vm332 = vcmp.gt.s32.totalorder %v329, 2
    %vm333 = vcmp.gt.s32.totalorder %v329, 3
    %vm334 = vcmp.gt.s32.totalorder %v329, 4
    %vm335 = vcmp.gt.s32.totalorder %v329, 5
    %vm336 = vcmp.gt.s32.totalorder %v329, 6
    %vm337 = vcmp.gt.s32.totalorder %v329, 7
    %v338 = vld [vmem:[%s3] sm:$0xff]
    %v339 = vld [vmem:[%s3 + $0x8] sm:$0xff]
    %v340 = vld [vmem:[%s3 + $0x10] sm:$0xff]
    %v341 = vld [vmem:[%s3 + $0x18] sm:$0xff]
    %v342 = vld [vmem:[%s3 + $0x20] sm:$0xff]
    %v343 = vld [vmem:[%s3 + $0x28] sm:$0xff]
    %v344 = vld [vmem:[%s3 + $0x30] sm:$0xff]
    %v345 = vld [vmem:[%s3 + $0x38] sm:$0xff]
    %v346 = vld [vmem:[%s4] sm:$0xff]
    %v347 = vld [vmem:[%s4 + $0x8] sm:$0xff]
    %v348 = vld [vmem:[%s4 + $0x10] sm:$0xff]
    %v349 = vld [vmem:[%s4 + $0x18] sm:$0xff]
    %v350 = vld [vmem:[#allocation3] sm:$0xff]
    %v351 = vld [vmem:[#allocation3 + $0x8] sm:$0xff]
    %v352 = vld [vmem:[#allocation3 + $0x10] sm:$0xff]
    %v353 = vld [vmem:[#allocation3 + $0x18] sm:$0xff]
    %v354 = vld [vmem:[%s6] sm:$0x3]
    %v356 = vlaneseq
    %v357 = vshrl.u32 %v356, 7
    %v358 = vsub.s32 0, %v357
    %v359 = vrot.slane %v354, %v358
    %v360 = vlaneseq
    %v361 = vshrl.u32 %v360, 7
    %v362 = vsub.s32 1, %v361
    %v363 = vrot.slane %v354, %v362
    %vm366 = vcmask 261120
    %v368 = vsel %vm366, %v291, 0
    %v371 = vsel %vm366, %v296, 0
    %v374 = vsel %vm366, %v301, 0
    %v377 = vsel %vm366, %v306, 0
    %v380 = vsel %vm366, %v311, 0
    %v383 = vsel %vm366, %v316, 0
    %v386 = vsel %vm366, %v321, 0
    %v389 = vsel %vm366, %v326, 0
    %391 = vmatprep.subr.mxu0 %v339
    %392 = vmatpush1.msra.mxu0 %v338
    %393 = vmatprep.subr.mxu0 %v341
    %394 = vmatpush1.msra.mxu0 %v340
    %395 = vmatprep.subr.mxu0 %v343
    %396 = vmatpush1.msra.mxu0 %v342
    %397 = vmatprep.subr.mxu0 %v345
    %398 = vmatpush1.msra.mxu0 %v344
    %399 = vmatprep.subr.mxu0 0.0
    %400 = vmatpush1.msra.mxu0 0.0
    %401 = vmatprep.subr.mxu0 0.0
    %402 = vmatpush1.msra.mxu0 0.0
    %403 = vmatprep.subr.mxu0 0.0
    %404 = vmatpush1.msra.mxu0 0.0
    %405 = vmatprep.subr.mxu0 0.0
    %406 = vmatpush1.msra.mxu0 0.0
    %407 = vmatprep.subr.mxu0 0.0
    %408 = vmatpush1.msra.mxu0 0.0
    %409 = vmatprep.subr.mxu0 0.0
    %410 = vmatpush1.msra.mxu0 0.0
    %411 = vmatprep.subr.mxu0 0.0
    %412 = vmatpush1.msra.mxu0 0.0
    %413 = vmatprep.subr.mxu0 0.0
    %414 = vmatpush1.msra.mxu0 0.0
    %415 = vmatprep.subr.mxu0 0.0
    %416 = vmatpush1.msra.mxu0 0.0
    %417 = vmatprep.subr.mxu0 0.0
    %418 = vmatpush1.msra.mxu0 0.0
    %419 = vmatprep.subr.mxu0 0.0
    %420 = vmatpush1.msra.mxu0 0.0
    %421 = vmatprep.subr.mxu0 0.0
    %422 = vmatpush1.msra.mxu0 0.0
    %423 = vmatprep.subr.mxu0 0.0
    %424 = vmatpush1.msra.mxu0 0.0
    %425 = vmatprep.subr.mxu0 0.0
    %426 = vmatpush1.msra.mxu0 0.0
    %427 = vmatprep.subr.mxu0 0.0
    %428 = vmatpush1.msra.mxu0 0.0
    %429 = vmatprep.subr.mxu0 0.0
    %430 = vmatpush1.msra.mxu0 0.0
    %431 = vmatprep.subr.mxu0 0.0
    %432 = vmatpush1.msra.mxu0 0.0
    %433 = vmatprep.subr.mxu0 0.0
    %434 = vmatpush1.msra.mxu0 0.0
    %435 = vmatprep.subr.mxu0 0.0
    %436 = vmatpush1.msra.mxu0 0.0
    %437 = vmatprep.subr.mxu0 0.0
    %438 = vmatpush1.msra.mxu0 0.0
    %439 = vmatprep.subr.mxu0 0.0
    %440 = vmatpush1.msra.mxu0 0.0
    %441 = vmatprep.subr.mxu0 0.0
    %442 = vmatpush1.msra.mxu0 0.0
    %443 = vmatprep.subr.mxu0 0.0
    %444 = vmatpush1.msra.mxu0 0.0
    %445 = vmatprep.subr.mxu0 0.0
    %446 = vmatpush1.msra.mxu0 0.0
    %447 = vmatprep.subr.mxu0 0.0
    %448 = vmatpush1.msra.mxu0 0.0
    %449 = vmatprep.subr.mxu0 0.0
    %450 = vmatpush1.msra.mxu0 0.0
    %451 = vmatprep.subr.mxu0 0.0
    %452 = vmatpush1.msra.mxu0 0.0
    %453 = vmatprep.subr.mxu0 0.0
    %454 = vmatpush1.msra.mxu0 0.0
    %455 = vmatprep.mubr.f32.mxu0 0.0
    %456 = vmatmul.mubr.f32.gmra.mrb[0].mxu0 %v368
    %v457 = vpop.f32.mrb[0].mxu0
    %v458 = vadd.f32 %v359, %v457
    %v459 = vpop.f32.mrb[0].mxu0
    %v460 = vadd.f32 %v363, %v459
    %461 = vmatprep.mubr.f32.mxu0 0.0
    %462 = vmatmul.mubr.f32.gmra.mrb[0].mxu0 %v371
    %v463 = vpop.f32.mrb[0].mxu0
    %v464 = vadd.f32 %v359, %v463
    %v465 = vpop.f32.mrb[0].mxu0
    %v466 = vadd.f32 %v363, %v465
    %467 = vmatprep.mubr.f32.mxu0 0.0
    %468 = vmatmul.mubr.f32.gmra.mrb[0].mxu0 %v374
    %v469 = vpop.f32.mrb[0].mxu0
    %v470 = vadd.f32 %v359, %v469
    %v471 = vpop.f32.mrb[0].mxu0
    %v472 = vadd.f32 %v363, %v471
    %473 = vmatprep.mubr.f32.mxu0 0.0
    %474 = vmatmul.mubr.f32.gmra.mrb[0].mxu0 %v377
    %v475 = vpop.f32.mrb[0].mxu0
    %v476 = vadd.f32 %v359, %v475
    %v477 = vpop.f32.mrb[0].mxu0
    %v478 = vadd.f32 %v363, %v477
    %479 = vmatprep.mubr.f32.mxu0 0.0
    %480 = vmatmul.mubr.f32.gmra.mrb[0].mxu0 %v380
    %v481 = vpop.f32.mrb[0].mxu0
    %v482 = vadd.f32 %v359, %v481
    %v483 = vpop.f32.mrb[0].mxu0
    %v484 = vadd.f32 %v363, %v483
    %485 = vmatprep.mubr.f32.mxu0 0.0
    %486 = vmatmul.mubr.f32.gmra.mrb[0].mxu0 %v383
    %v487 = vpop.f32.mrb[0].mxu0
    %v488 = vadd.f32 %v359, %v487
    %v489 = vpop.f32.mrb[0].mxu0
    %v490 = vadd.f32 %v363, %v489
    %491 = vmatprep.mubr.f32.mxu0 0.0
    %492 = vmatmul.mubr.f32.gmra.mrb[0].mxu0 %v386
    %v493 = vpop.f32.mrb[0].mxu0
    %v494 = vadd.f32 %v359, %v493
    %v495 = vpop.f32.mrb[0].mxu0
    %v496 = vadd.f32 %v363, %v495
    %497 = vmatprep.mubr.f32.mxu0 0.0
    %498 = vmatmul.mubr.f32.gmra.mrb[0].mxu0 %v389
    %v499 = vpop.f32.mrb[0].mxu0
    %v500 = vadd.f32 %v359, %v499
    %v501 = vpop.f32.mrb[0].mxu0
    %v502 = vadd.f32 %v363, %v501
    %503 = vdwg.mxu0
    %v505 = vsel %vm366, 0.0, 0
    %507 = vmatprep.subr.mxu0 0.0
    %508 = vmatpush1.msra.mxu0 %v346
    %509 = vmatprep.subr.mxu0 0.0
    %510 = vmatpush1.msra.mxu0 %v347
    %511 = vmatprep.subr.mxu0 0.0
    %512 = vmatpush1.msra.mxu0 %v348
    %513 = vmatprep.subr.mxu0 0.0
    %514 = vmatpush1.msra.mxu0 %v349
    %515 = vmatprep.subr.mxu0 0.0
    %516 = vmatpush1.msra.mxu0 0.0
    %517 = vmatprep.subr.mxu0 0.0
    %518 = vmatpush1.msra.mxu0 0.0
    %519 = vmatprep.subr.mxu0 0.0
    %520 = vmatpush1.msra.mxu0 0.0
    %521 = vmatprep.subr.mxu0 0.0
    %522 = vmatpush1.msra.mxu0 0.0
    %523 = vmatprep.subr.mxu0 0.0
    %524 = vmatpush1.msra.mxu0 0.0
    %525 = vmatprep.subr.mxu0 0.0
    %526 = vmatpush1.msra.mxu0 0.0
    %527 = vmatprep.subr.mxu0 0.0
    %528 = vmatpush1.msra.mxu0 0.0
    %529 = vmatprep.subr.mxu0 0.0
    %530 = vmatpush1.msra.mxu0 0.0
    %531 = vmatprep.subr.mxu0 0.0
    %532 = vmatpush1.msra.mxu0 0.0
    %533 = vmatprep.subr.mxu0 0.0
    %534 = vmatpush1.msra.mxu0 0.0
    %535 = vmatprep.subr.mxu0 0.0
    %536 = vmatpush1.msra.mxu0 0.0
    %537 = vmatprep.subr.mxu0 0.0
    %538 = vmatpush1.msra.mxu0 0.0
    %539 = vmatprep.subr.mxu0 0.0
    %540 = vmatpush1.msra.mxu0 0.0
    %541 = vmatprep.subr.mxu0 0.0
    %542 = vmatpush1.msra.mxu0 0.0
    %543 = vmatprep.subr.mxu0 0.0
    %544 = vmatpush1.msra.mxu0 0.0
    %545 = vmatprep.subr.mxu0 0.0
    %546 = vmatpush1.msra.mxu0 0.0
    %547 = vmatprep.subr.mxu0 0.0
    %548 = vmatpush1.msra.mxu0 0.0
    %549 = vmatprep.subr.mxu0 0.0
    %550 = vmatpush1.msra.mxu0 0.0
    %551 = vmatprep.subr.mxu0 0.0
    %552 = vmatpush1.msra.mxu0 0.0
    %553 = vmatprep.subr.mxu0 0.0
    %554 = vmatpush1.msra.mxu0 0.0
    %555 = vmatprep.subr.mxu0 0.0
    %556 = vmatpush1.msra.mxu0 0.0
    %557 = vmatprep.subr.mxu0 0.0
    %558 = vmatpush1.msra.mxu0 0.0
    %559 = vmatprep.subr.mxu0 0.0
    %560 = vmatpush1.msra.mxu0 0.0
    %561 = vmatprep.subr.mxu0 0.0
    %562 = vmatpush1.msra.mxu0 0.0
    %563 = vmatprep.subr.mxu0 0.0
    %564 = vmatpush1.msra.mxu0 0.0
    %565 = vmatprep.subr.mxu0 0.0
    %566 = vmatpush1.msra.mxu0 0.0
    %567 = vmatprep.subr.mxu0 0.0
    %568 = vmatpush1.msra.mxu0 0.0
    %569 = vmatprep.subr.mxu0 0.0
    %570 = vmatpush1.msra.mxu0 0.0
    %571 = vmatprep.mubr.f32.mxu0 0.0
    %572 = vmatmul.mubr.f32.gmra.mrb[0].mxu0 %v505
    %v573 = vpop.f32.mrb[0].mxu0
    %v574 = vadd.f32 0.0, %v573
    %v575 = vpop.f32.mrb[0].mxu0
    %576 = vdwg.mxu0
    %v577 = vadd.f32 %v458, %v574
    %578 = vmatprep.subr.mxu0 0.0
    %579 = vmatpush1.msra.mxu0 %v350
    %580 = vmatprep.subr.mxu0 0.0
    %581 = vmatpush1.msra.mxu0 %v351
    %582 = vmatprep.subr.mxu0 0.0
    %583 = vmatpush1.msra.mxu0 %v352
    %584 = vmatprep.subr.mxu0 0.0
    %585 = vmatpush1.msra.mxu0 %v353
    %586 = vmatprep.subr.mxu0 0.0
    %587 = vmatpush1.msra.mxu0 0.0
    %588 = vmatprep.subr.mxu0 0.0
    %589 = vmatpush1.msra.mxu0 0.0
    %590 = vmatprep.subr.mxu0 0.0
    %591 = vmatpush1.msra.mxu0 0.0
    %592 = vmatprep.subr.mxu0 0.0
    %593 = vmatpush1.msra.mxu0 0.0
    %594 = vmatprep.subr.mxu0 0.0
    %595 = vmatpush1.msra.mxu0 0.0
    %596 = vmatprep.subr.mxu0 0.0
    %597 = vmatpush1.msra.mxu0 0.0
    %598 = vmatprep.subr.mxu0 0.0
    %599 = vmatpush1.msra.mxu0 0.0
    %600 = vmatprep.subr.mxu0 0.0
    %601 = vmatpush1.msra.mxu0 0.0
    %602 = vmatprep.subr.mxu0 0.0
    %603 = vmatpush1.msra.mxu0 0.0
    %604 = vmatprep.subr.mxu0 0.0
    %605 = vmatpush1.msra.mxu0 0.0
    %606 = vmatprep.subr.mxu0 0.0
    %607 = vmatpush1.msra.mxu0 0.0
    %608 = vmatprep.subr.mxu0 0.0
    %609 = vmatpush1.msra.mxu0 0.0
    %610 = vmatprep.subr.mxu0 0.0
    %611 = vmatpush1.msra.mxu0 0.0
    %612 = vmatprep.subr.mxu0 0.0
    %613 = vmatpush1.msra.mxu0 0.0
    %614 = vmatprep.subr.mxu0 0.0
    %615 = vmatpush1.msra.mxu0 0.0
    %616 = vmatprep.subr.mxu0 0.0
    %617 = vmatpush1.msra.mxu0 0.0
    %618 = vmatprep.subr.mxu0 0.0
    %619 = vmatpush1.msra.mxu0 0.0
    %620 = vmatprep.subr.mxu0 0.0
    %621 = vmatpush1.msra.mxu0 0.0
    %622 = vmatprep.subr.mxu0 0.0
    %623 = vmatpush1.msra.mxu0 0.0
    %624 = vmatprep.subr.mxu0 0.0
    %625 = vmatpush1.msra.mxu0 0.0
    %626 = vmatprep.subr.mxu0 0.0
    %627 = vmatpush1.msra.mxu0 0.0
    %628 = vmatprep.subr.mxu0 0.0
    %629 = vmatpush1.msra.mxu0 0.0
    %630 = vmatprep.subr.mxu0 0.0
    %631 = vmatpush1.msra.mxu0 0.0
    %632 = vmatprep.subr.mxu0 0.0
    %633 = vmatpush1.msra.mxu0 0.0
    %634 = vmatprep.subr.mxu0 0.0
    %635 = vmatpush1.msra.mxu0 0.0
    %636 = vmatprep.subr.mxu0 0.0
    %637 = vmatpush1.msra.mxu0 0.0
    %638 = vmatprep.subr.mxu0 0.0
    %639 = vmatpush1.msra.mxu0 0.0
    %640 = vmatprep.subr.mxu0 0.0
    %641 = vmatpush1.msra.mxu0 0.0
    %642 = vmatprep.mubr.f32.mxu0 0.0
    %643 = vmatmul.mubr.f32.gmra.mrb[0].mxu0 %v505
    %v644 = vpop.f32.mrb[0].mxu0
    %v645 = vadd.f32 0.0, %v644
    %v646 = vpop.f32.mrb[0].mxu0
    %647 = vdwg.mxu0
    %v648 = vadd.f32 %v502, %v645
    %v649 = vxor.u32 %v577, 2147483648
    %v650 = vmul.f32 %v649, 1.442695
    %v651 = vpow.pop %v650
    %v652 = vadd.f32 %v651, 1.0
    %v653 = vrcp.pop %v652
    %v654 = vmul.f32 1.0, %v653
    %v655 = vtanh.pop %v577
    %v656 = vmul.f32 %v654, 0.0
    %658 = vrot.lane.b32.xlu0 %v655, 64
    %v659 = vpop.permute.xlu0 %658
    %v661 = vmul.f32 %v654, %v659
    %663 = vrot.lane.b32.xlu0 %v661, 32
    %v664 = vpop.permute.xlu0 %663
    %v666 = vadd.f32 %v656, %v664
    %v667 = vtanh.pop %v666
    %669 = vrot.lane.b32.xlu0 %v667, 64
    %v670 = vpop.permute.xlu0 %669
    %v672 = vmul.f32 %v654, %v670
    %v673 = vsel %vm330, 1, 0
    %674 = vset.pattern.permute.xlu0 0
    %675 = vperm.xlu0 %674, %v673
    %v676 = vpop.permute.xlu0 %675
    %vm677 = vcmp.eq.s32.totalorder %v676, 1
    %v678 = vsel %vm677, %v666, 0.0
    %v679 = vsel %vm677, %v672, 0.0
    %v680 = vxor.u32 %v648, 2147483648
    %v681 = vmul.f32 %v680, 1.442695
    %v682 = vpow.pop %v681
    %v683 = vadd.f32 %v682, 1.0
    %v684 = vrcp.pop %v683
    %v685 = vmul.f32 1.0, %v684
    %v686 = vtanh.pop %v648
    %v687 = vmul.f32 %v685, 0.0
    %689 = vrot.lane.b32.xlu0 %v686, 64
    %v690 = vpop.permute.xlu0 %689
    %v692 = vmul.f32 %v685, %v690
    %694 = vrot.lane.b32.xlu0 %v692, 32
    %v695 = vpop.permute.xlu0 %694
    %v697 = vadd.f32 %v687, %v695
    %v698 = vtanh.pop %v697
    %700 = vrot.lane.b32.xlu0 %v698, 64
    %v701 = vpop.permute.xlu0 %700
    %v703 = vmul.f32 %v685, %v701
    %v704 = vsel %vm337, 1, 0
    %705 = vset.pattern.permute.xlu0 0
    %706 = vperm.xlu0 %705, %v704
    %v707 = vpop.permute.xlu0 %706
    %vm708 = vcmp.eq.s32.totalorder %v707, 1
    %v709 = vsel %vm708, %v697, 0.0
    %v710 = vsel %vm708, %v703, 0.0
    %712 = vrot.lane.b32.xlu0 %v679, 32
    %v713 = vpop.permute.xlu0 %712
    %v714 = vsel %vm366, %v713, 0
    %716 = vmatprep.subr.mxu0 0.0
    %717 = vmatpush1.msra.mxu0 %v346
    %718 = vmatprep.subr.mxu0 0.0
    %719 = vmatpush1.msra.mxu0 %v347
    %720 = vmatprep.subr.mxu0 0.0
    %721 = vmatpush1.msra.mxu0 %v348
    %722 = vmatprep.subr.mxu0 0.0
    %723 = vmatpush1.msra.mxu0 %v349
    %724 = vmatprep.subr.mxu0 0.0
    %725 = vmatpush1.msra.mxu0 0.0
    %726 = vmatprep.subr.mxu0 0.0
    %727 = vmatpush1.msra.mxu0 0.0
    %728 = vmatprep.subr.mxu0 0.0
    %729 = vmatpush1.msra.mxu0 0.0
    %730 = vmatprep.subr.mxu0 0.0
    %731 = vmatpush1.msra.mxu0 0.0
    %732 = vmatprep.subr.mxu0 0.0
    %733 = vmatpush1.msra.mxu0 0.0
    %734 = vmatprep.subr.mxu0 0.0
    %735 = vmatpush1.msra.mxu0 0.0
    %736 = vmatprep.subr.mxu0 0.0
    %737 = vmatpush1.msra.mxu0 0.0
    %738 = vmatprep.subr.mxu0 0.0
    %739 = vmatpush1.msra.mxu0 0.0
    %740 = vmatprep.subr.mxu0 0.0
    %741 = vmatpush1.msra.mxu0 0.0
    %742 = vmatprep.subr.mxu0 0.0
    %743 = vmatpush1.msra.mxu0 0.0
    %744 = vmatprep.subr.mxu0 0.0
    %745 = vmatpush1.msra.mxu0 0.0
    %746 = vmatprep.subr.mxu0 0.0
    %747 = vmatpush1.msra.mxu0 0.0
    %748 = vmatprep.subr.mxu0 0.0
    %749 = vmatpush1.msra.mxu0 0.0
    %750 = vmatprep.subr.mxu0 0.0
    %751 = vmatpush1.msra.mxu0 0.0
    %752 = vmatprep.subr.mxu0 0.0
    %753 = vmatpush1.msra.mxu0 0.0
    %754 = vmatprep.subr.mxu0 0.0
    %755 = vmatpush1.msra.mxu0 0.0
    %756 = vmatprep.subr.mxu0 0.0
    %757 = vmatpush1.msra.mxu0 0.0
    %758 = vmatprep.subr.mxu0 0.0
    %759 = vmatpush1.msra.mxu0 0.0
    %760 = vmatprep.subr.mxu0 0.0
    %761 = vmatpush1.msra.mxu0 0.0
    %762 = vmatprep.subr.mxu0 0.0
    %763 = vmatpush1.msra.mxu0 0.0
    %764 = vmatprep.subr.mxu0 0.0
    %765 = vmatpush1.msra.mxu0 0.0
    %766 = vmatprep.subr.mxu0 0.0
    %767 = vmatpush1.msra.mxu0 0.0
    %768 = vmatprep.subr.mxu0 0.0
    %769 = vmatpush1.msra.mxu0 0.0
    %770 = vmatprep.subr.mxu0 0.0
    %771 = vmatpush1.msra.mxu0 0.0
    %772 = vmatprep.subr.mxu0 0.0
    %773 = vmatpush1.msra.mxu0 0.0
    %774 = vmatprep.subr.mxu0 0.0
    %775 = vmatpush1.msra.mxu0 0.0
    %776 = vmatprep.subr.mxu0 0.0
    %777 = vmatpush1.msra.mxu0 0.0
    %778 = vmatprep.subr.mxu0 0.0
    %779 = vmatpush1.msra.mxu0 0.0
    %780 = vmatprep.mubr.f32.mxu0 0.0
    %781 = vmatmul.mubr.f32.gmra.mrb[0].mxu0 %v714
    %v782 = vpop.f32.mrb[0].mxu0
    %v783 = vadd.f32 0.0, %v782
    %v784 = vpop.f32.mrb[0].mxu0
    %785 = vdwg.mxu0
    %v786 = vadd.f32 %v464, %v783
    %788 = vrot.lane.b32.xlu0 %v710, 32
    %v789 = vpop.permute.xlu0 %788
    %v790 = vsel %vm366, %v789, 0
    %792 = vmatprep.subr.mxu0 0.0
    %793 = vmatpush1.msra.mxu0 %v350
    %794 = vmatprep.subr.mxu0 0.0
    %795 = vmatpush1.msra.mxu0 %v351
    %796 = vmatprep.subr.mxu0 0.0
    %797 = vmatpush1.msra.mxu0 %v352
    %798 = vmatprep.subr.mxu0 0.0
    %799 = vmatpush1.msra.mxu0 %v353
    %800 = vmatprep.subr.mxu0 0.0
    %801 = vmatpush1.msra.mxu0 0.0
    %802 = vmatprep.subr.mxu0 0.0
    %803 = vmatpush1.msra.mxu0 0.0
    %804 = vmatprep.subr.mxu0 0.0
    %805 = vmatpush1.msra.mxu0 0.0
    %806 = vmatprep.subr.mxu0 0.0
    %807 = vmatpush1.msra.mxu0 0.0
    %808 = vmatprep.subr.mxu0 0.0
    %809 = vmatpush1.msra.mxu0 0.0
    %810 = vmatprep.subr.mxu0 0.0
    %811 = vmatpush1.msra.mxu0 0.0
    %812 = vmatprep.subr.mxu0 0.0
    %813 = vmatpush1.msra.mxu0 0.0
    %814 = vmatprep.subr.mxu0 0.0
    %815 = vmatpush1.msra.mxu0 0.0
    %816 = vmatprep.subr.mxu0 0.0
    %817 = vmatpush1.msra.mxu0 0.0
    %818 = vmatprep.subr.mxu0 0.0
    %819 = vmatpush1.msra.mxu0 0.0
    %820 = vmatprep.subr.mxu0 0.0
    %821 = vmatpush1.msra.mxu0 0.0
    %822 = vmatprep.subr.mxu0 0.0
    %823 = vmatpush1.msra.mxu0 0.0
    %824 = vmatprep.subr.mxu0 0.0
    %825 = vmatpush1.msra.mxu0 0.0
    %826 = vmatprep.subr.mxu0 0.0
    %827 = vmatpush1.msra.mxu0 0.0
    %828 = vmatprep.subr.mxu0 0.0
    %829 = vmatpush1.msra.mxu0 0.0
    %830 = vmatprep.subr.mxu0 0.0
    %831 = vmatpush1.msra.mxu0 0.0
    %832 = vmatprep.subr.mxu0 0.0
    %833 = vmatpush1.msra.mxu0 0.0
    %834 = vmatprep.subr.mxu0 0.0
    %835 = vmatpush1.msra.mxu0 0.0
    %836 = vmatprep.subr.mxu0 0.0
    %837 = vmatpush1.msra.mxu0 0.0
    %838 = vmatprep.subr.mxu0 0.0
    %839 = vmatpush1.msra.mxu0 0.0
    %840 = vmatprep.subr.mxu0 0.0
    %841 = vmatpush1.msra.mxu0 0.0
    %842 = vmatprep.subr.mxu0 0.0
    %843 = vmatpush1.msra.mxu0 0.0
    %844 = vmatprep.subr.mxu0 0.0
    %845 = vmatpush1.msra.mxu0 0.0
    %846 = vmatprep.subr.mxu0 0.0
    %847 = vmatpush1.msra.mxu0 0.0
    %848 = vmatprep.subr.mxu0 0.0
    %849 = vmatpush1.msra.mxu0 0.0
    %850 = vmatprep.subr.mxu0 0.0
    %851 = vmatpush1.msra.mxu0 0.0
    %852 = vmatprep.subr.mxu0 0.0
    %853 = vmatpush1.msra.mxu0 0.0
    %854 = vmatprep.subr.mxu0 0.0
    %855 = vmatpush1.msra.mxu0 0.0
    %856 = vmatprep.mubr.f32.mxu0 0.0
    %857 = vmatmul.mubr.f32.gmra.mrb[0].mxu0 %v790
    %v858 = vpop.f32.mrb[0].mxu0
    %v859 = vadd.f32 0.0, %v858
    %v860 = vpop.f32.mrb[0].mxu0
    %861 = vdwg.mxu0
    %v862 = vadd.f32 %v496, %v859
    %v863 = vxor.u32 %v786, 2147483648
    %v864 = vmul.f32 %v863, 1.442695
    %v865 = vpow.pop %v864
    %v866 = vadd.f32 %v865, 1.0
    %v867 = vrcp.pop %v866
    %v868 = vmul.f32 1.0, %v867
    %v869 = vtanh.pop %v786
    %v870 = vmul.f32 %v868, %v678
    %872 = vrot.lane.b32.xlu0 %v869, 64
    %v873 = vpop.permute.xlu0 %872
    %v875 = vmul.f32 %v868, %v873
    %877 = vrot.lane.b32.xlu0 %v875, 32
    %v878 = vpop.permute.xlu0 %877
    %v880 = vadd.f32 %v870, %v878
    %v881 = vtanh.pop %v880
    %883 = vrot.lane.b32.xlu0 %v881, 64
    %v884 = vpop.permute.xlu0 %883
    %v886 = vmul.f32 %v868, %v884
    %v887 = vsel %vm331, 1, 0
    %888 = vset.pattern.permute.xlu0 0
    %889 = vperm.xlu0 %888, %v887
    %v890 = vpop.permute.xlu0 %889
    %vm891 = vcmp.eq.s32.totalorder %v890, 1
    %v892 = vsel %vm891, %v880, %v678
    %v893 = vsel %vm891, %v886, %v679
    %v894 = vsel %vm891, %v886, 0.0
    %v895 = vxor.u32 %v862, 2147483648
    %v896 = vmul.f32 %v895, 1.442695
    %v897 = vpow.pop %v896
    %v898 = vadd.f32 %v897, 1.0
    %v899 = vrcp.pop %v898
    %v900 = vmul.f32 1.0, %v899
    %v901 = vtanh.pop %v862
    %v902 = vmul.f32 %v900, %v709
    %904 = vrot.lane.b32.xlu0 %v901, 64
    %v905 = vpop.permute.xlu0 %904
    %v907 = vmul.f32 %v900, %v905
    %909 = vrot.lane.b32.xlu0 %v907, 32
    %v910 = vpop.permute.xlu0 %909
    %v912 = vadd.f32 %v902, %v910
    %v913 = vtanh.pop %v912
    %915 = vrot.lane.b32.xlu0 %v913, 64
    %v916 = vpop.permute.xlu0 %915
    %v918 = vmul.f32 %v900, %v916
    %v919 = vsel %vm336, 1, 0
    %920 = vset.pattern.permute.xlu0 0
    %921 = vperm.xlu0 %920, %v919
    %v922 = vpop.permute.xlu0 %921
    %vm923 = vcmp.eq.s32.totalorder %v922, 1
    %v924 = vsel %vm923, %v912, %v709
    %v925 = vsel %vm923, %v918, %v710
    %v926 = vsel %vm923, %v918, 0.0
    %928 = vrot.lane.b32.xlu0 %v893, 32
    %v929 = vpop.permute.xlu0 %928
    %v930 = vsel %vm366, %v929, 0
    %932 = vmatprep.subr.mxu0 0.0
    %933 = vmatpush1.msra.mxu0 %v346
    %934 = vmatprep.subr.mxu0 0.0
    %935 = vmatpush1.msra.mxu0 %v347
    %936 = vmatprep.subr.mxu0 0.0
    %937 = vmatpush1.msra.mxu0 %v348
    %938 = vmatprep.subr.mxu0 0.0
    %939 = vmatpush1.msra.mxu0 %v349
    %940 = vmatprep.subr.mxu0 0.0
    %941 = vmatpush1.msra.mxu0 0.0
    %942 = vmatprep.subr.mxu0 0.0
    %943 = vmatpush1.msra.mxu0 0.0
    %944 = vmatprep.subr.mxu0 0.0
    %945 = vmatpush1.msra.mxu0 0.0
    %946 = vmatprep.subr.mxu0 0.0
    %947 = vmatpush1.msra.mxu0 0.0
    %948 = vmatprep.subr.mxu0 0.0
    %949 = vmatpush1.msra.mxu0 0.0
    %950 = vmatprep.subr.mxu0 0.0
    %951 = vmatpush1.msra.mxu0 0.0
    %952 = vmatprep.subr.mxu0 0.0
    %953 = vmatpush1.msra.mxu0 0.0
    %954 = vmatprep.subr.mxu0 0.0
    %955 = vmatpush1.msra.mxu0 0.0
    %956 = vmatprep.subr.mxu0 0.0
    %957 = vmatpush1.msra.mxu0 0.0
    %958 = vmatprep.subr.mxu0 0.0
    %959 = vmatpush1.msra.mxu0 0.0
    %960 = vmatprep.subr.mxu0 0.0
    %961 = vmatpush1.msra.mxu0 0.0
    %962 = vmatprep.subr.mxu0 0.0
    %963 = vmatpush1.msra.mxu0 0.0
    %964 = vmatprep.subr.mxu0 0.0
    %965 = vmatpush1.msra.mxu0 0.0
    %966 = vmatprep.subr.mxu0 0.0
    %967 = vmatpush1.msra.mxu0 0.0
    %968 = vmatprep.subr.mxu0 0.0
    %969 = vmatpush1.msra.mxu0 0.0
    %970 = vmatprep.subr.mxu0 0.0
    %971 = vmatpush1.msra.mxu0 0.0
    %972 = vmatprep.subr.mxu0 0.0
    %973 = vmatpush1.msra.mxu0 0.0
    %974 = vmatprep.subr.mxu0 0.0
    %975 = vmatpush1.msra.mxu0 0.0
    %976 = vmatprep.subr.mxu0 0.0
    %977 = vmatpush1.msra.mxu0 0.0
    %978 = vmatprep.subr.mxu0 0.0
    %979 = vmatpush1.msra.mxu0 0.0
    %980 = vmatprep.subr.mxu0 0.0
    %981 = vmatpush1.msra.mxu0 0.0
    %982 = vmatprep.subr.mxu0 0.0
    %983 = vmatpush1.msra.mxu0 0.0
    %984 = vmatprep.subr.mxu0 0.0
    %985 = vmatpush1.msra.mxu0 0.0
    %986 = vmatprep.subr.mxu0 0.0
    %987 = vmatpush1.msra.mxu0 0.0
    %988 = vmatprep.subr.mxu0 0.0
    %989 = vmatpush1.msra.mxu0 0.0
    %990 = vmatprep.subr.mxu0 0.0
    %991 = vmatpush1.msra.mxu0 0.0
    %992 = vmatprep.subr.mxu0 0.0
    %993 = vmatpush1.msra.mxu0 0.0
    %994 = vmatprep.subr.mxu0 0.0
    %995 = vmatpush1.msra.mxu0 0.0
    %996 = vmatprep.mubr.f32.mxu0 0.0
    %997 = vmatmul.mubr.f32.gmra.mrb[0].mxu0 %v930
    %v998 = vpop.f32.mrb[0].mxu0
    %v999 = vadd.f32 0.0, %v998
    %v1000 = vpop.f32.mrb[0].mxu0
    %1001 = vdwg.mxu0
    %v1002 = vadd.f32 %v470, %v999
    %1004 = vrot.lane.b32.xlu0 %v925, 32
    %v1005 = vpop.permute.xlu0 %1004
    %v1006 = vsel %vm366, %v1005, 0
    %1008 = vmatprep.subr.mxu0 0.0
    %1009 = vmatpush1.msra.mxu0 %v350
    %1010 = vmatprep.subr.mxu0 0.0
    %1011 = vmatpush1.msra.mxu0 %v351
    %1012 = vmatprep.subr.mxu0 0.0
    %1013 = vmatpush1.msra.mxu0 %v352
    %1014 = vmatprep.subr.mxu0 0.0
    %1015 = vmatpush1.msra.mxu0 %v353
    %1016 = vmatprep.subr.mxu0 0.0
    %1017 = vmatpush1.msra.mxu0 0.0
    %1018 = vmatprep.subr.mxu0 0.0
    %1019 = vmatpush1.msra.mxu0 0.0
    %1020 = vmatprep.subr.mxu0 0.0
    %1021 = vmatpush1.msra.mxu0 0.0
    %1022 = vmatprep.subr.mxu0 0.0
    %1023 = vmatpush1.msra.mxu0 0.0
    %1024 = vmatprep.subr.mxu0 0.0
    %1025 = vmatpush1.msra.mxu0 0.0
    %1026 = vmatprep.subr.mxu0 0.0
    %1027 = vmatpush1.msra.mxu0 0.0
    %1028 = vmatprep.subr.mxu0 0.0
    %1029 = vmatpush1.msra.mxu0 0.0
    %1030 = vmatprep.subr.mxu0 0.0
    %1031 = vmatpush1.msra.mxu0 0.0
    %1032 = vmatprep.subr.mxu0 0.0
    %1033 = vmatpush1.msra.mxu0 0.0
    %1034 = vmatprep.subr.mxu0 0.0
    %1035 = vmatpush1.msra.mxu0 0.0
    %1036 = vmatprep.subr.mxu0 0.0
    %1037 = vmatpush1.msra.mxu0 0.0
    %1038 = vmatprep.subr.mxu0 0.0
    %1039 = vmatpush1.msra.mxu0 0.0
    %1040 = vmatprep.subr.mxu0 0.0
    %1041 = vmatpush1.msra.mxu0 0.0
    %1042 = vmatprep.subr.mxu0 0.0
    %1043 = vmatpush1.msra.mxu0 0.0
    %1044 = vmatprep.subr.mxu0 0.0
    %1045 = vmatpush1.msra.mxu0 0.0
    %1046 = vmatprep.subr.mxu0 0.0
    %1047 = vmatpush1.msra.mxu0 0.0
    %1048 = vmatprep.subr.mxu0 0.0
    %1049 = vmatpush1.msra.mxu0 0.0
    %1050 = vmatprep.subr.mxu0 0.0
    %1051 = vmatpush1.msra.mxu0 0.0
    %1052 = vmatprep.subr.mxu0 0.0
    %1053 = vmatpush1.msra.mxu0 0.0
    %1054 = vmatprep.subr.mxu0 0.0
    %1055 = vmatpush1.msra.mxu0 0.0
    %1056 = vmatprep.subr.mxu0 0.0
    %1057 = vmatpush1.msra.mxu0 0.0
    %1058 = vmatprep.subr.mxu0 0.0
    %1059 = vmatpush1.msra.mxu0 0.0
    %1060 = vmatprep.subr.mxu0 0.0
    %1061 = vmatpush1.msra.mxu0 0.0
    %1062 = vmatprep.subr.mxu0 0.0
    %1063 = vmatpush1.msra.mxu0 0.0
    %1064 = vmatprep.subr.mxu0 0.0
    %1065 = vmatpush1.msra.mxu0 0.0
    %1066 = vmatprep.subr.mxu0 0.0
    %1067 = vmatpush1.msra.mxu0 0.0
    %1068 = vmatprep.subr.mxu0 0.0
    %1069 = vmatpush1.msra.mxu0 0.0
    %1070 = vmatprep.subr.mxu0 0.0
    %1071 = vmatpush1.msra.mxu0 0.0
    %1072 = vmatprep.mubr.f32.mxu0 0.0
    %1073 = vmatmul.mubr.f32.gmra.mrb[0].mxu0 %v1006
    %v1074 = vpop.f32.mrb[0].mxu0
    %v1075 = vadd.f32 0.0, %v1074
    %v1076 = vpop.f32.mrb[0].mxu0
    %1077 = vdwg.mxu0
    %v1078 = vadd.f32 %v490, %v1075
    %v1079 = vxor.u32 %v1002, 2147483648
    %v1080 = vmul.f32 %v1079, 1.442695
    %v1081 = vpow.pop %v1080
    %v1082 = vadd.f32 %v1081, 1.0
    %v1083 = vrcp.pop %v1082
    %v1084 = vmul.f32 1.0, %v1083
    %v1085 = vtanh.pop %v1002
    %v1086 = vmul.f32 %v1084, %v892
    %1088 = vrot.lane.b32.xlu0 %v1085, 64
    %v1089 = vpop.permute.xlu0 %1088
    %v1091 = vmul.f32 %v1084, %v1089
    %1093 = vrot.lane.b32.xlu0 %v1091, 32
    %v1094 = vpop.permute.xlu0 %1093
    %v1096 = vadd.f32 %v1086, %v1094
    %v1097 = vtanh.pop %v1096
    %1099 = vrot.lane.b32.xlu0 %v1097, 64
    %v1100 = vpop.permute.xlu0 %1099
    %v1102 = vmul.f32 %v1084, %v1100
    %v1103 = vsel %vm332, 1, 0
    %1104 = vset.pattern.permute.xlu0 0
    %1105 = vperm.xlu0 %1104, %v1103
    %v1106 = vpop.permute.xlu0 %1105
    %vm1107 = vcmp.eq.s32.totalorder %v1106, 1
    %v1108 = vsel %vm1107, %v1096, %v892
    %v1109 = vsel %vm1107, %v1102, %v893
    %v1110 = vsel %vm1107, %v1102, 0.0
    %v1111 = vxor.u32 %v1078, 2147483648
    %v1112 = vmul.f32 %v1111, 1.442695
    %v1113 = vpow.pop %v1112
    %v1114 = vadd.f32 %v1113, 1.0
    %v1115 = vrcp.pop %v1114
    %v1116 = vmul.f32 1.0, %v1115
    %v1117 = vtanh.pop %v1078
    %v1118 = vmul.f32 %v1116, %v924
    %1120 = vrot.lane.b32.xlu0 %v1117, 64
    %v1121 = vpop.permute.xlu0 %1120
    %v1123 = vmul.f32 %v1116, %v1121
    %1125 = vrot.lane.b32.xlu0 %v1123, 32
    %v1126 = vpop.permute.xlu0 %1125
    %v1128 = vadd.f32 %v1118, %v1126
    %v1129 = vtanh.pop %v1128
    %1131 = vrot.lane.b32.xlu0 %v1129, 64
    %v1132 = vpop.permute.xlu0 %1131
    %v1134 = vmul.f32 %v1116, %v1132
    %v1135 = vsel %vm335, 1, 0
    %1136 = vset.pattern.permute.xlu0 0
    %1137 = vperm.xlu0 %1136, %v1135
    %v1138 = vpop.permute.xlu0 %1137
    %vm1139 = vcmp.eq.s32.totalorder %v1138, 1
    %v1140 = vsel %vm1139, %v1128, %v924
    %v1141 = vsel %vm1139, %v1134, %v925
    %v1142 = vsel %vm1139, %v1134, 0.0
    %1144 = vrot.lane.b32.xlu0 %v1109, 32
    %v1145 = vpop.permute.xlu0 %1144
    %v1146 = vsel %vm366, %v1145, 0
    %1148 = vmatprep.subr.mxu0 0.0
    %1149 = vmatpush1.msra.mxu0 %v346
    %1150 = vmatprep.subr.mxu0 0.0
    %1151 = vmatpush1.msra.mxu0 %v347
    %1152 = vmatprep.subr.mxu0 0.0
    %1153 = vmatpush1.msra.mxu0 %v348
    %1154 = vmatprep.subr.mxu0 0.0
    %1155 = vmatpush1.msra.mxu0 %v349
    %1156 = vmatprep.subr.mxu0 0.0
    %1157 = vmatpush1.msra.mxu0 0.0
    %1158 = vmatprep.subr.mxu0 0.0
    %1159 = vmatpush1.msra.mxu0 0.0
    %1160 = vmatprep.subr.mxu0 0.0
    %1161 = vmatpush1.msra.mxu0 0.0
    %1162 = vmatprep.subr.mxu0 0.0
    %1163 = vmatpush1.msra.mxu0 0.0
    %1164 = vmatprep.subr.mxu0 0.0
    %1165 = vmatpush1.msra.mxu0 0.0
    %1166 = vmatprep.subr.mxu0 0.0
    %1167 = vmatpush1.msra.mxu0 0.0
    %1168 = vmatprep.subr.mxu0 0.0
    %1169 = vmatpush1.msra.mxu0 0.0
    %1170 = vmatprep.subr.mxu0 0.0
    %1171 = vmatpush1.msra.mxu0 0.0
    %1172 = vmatprep.subr.mxu0 0.0
    %1173 = vmatpush1.msra.mxu0 0.0
    %1174 = vmatprep.subr.mxu0 0.0
    %1175 = vmatpush1.msra.mxu0 0.0
    %1176 = vmatprep.subr.mxu0 0.0
    %1177 = vmatpush1.msra.mxu0 0.0
    %1178 = vmatprep.subr.mxu0 0.0
    %1179 = vmatpush1.msra.mxu0 0.0
    %1180 = vmatprep.subr.mxu0 0.0
    %1181 = vmatpush1.msra.mxu0 0.0
    %1182 = vmatprep.subr.mxu0 0.0
    %1183 = vmatpush1.msra.mxu0 0.0
    %1184 = vmatprep.subr.mxu0 0.0
    %1185 = vmatpush1.msra.mxu0 0.0
    %1186 = vmatprep.subr.mxu0 0.0
    %1187 = vmatpush1.msra.mxu0 0.0
    %1188 = vmatprep.subr.mxu0 0.0
    %1189 = vmatpush1.msra.mxu0 0.0
    %1190 = vmatprep.subr.mxu0 0.0
    %1191 = vmatpush1.msra.mxu0 0.0
    %1192 = vmatprep.subr.mxu0 0.0
    %1193 = vmatpush1.msra.mxu0 0.0
    %1194 = vmatprep.subr.mxu0 0.0
    %1195 = vmatpush1.msra.mxu0 0.0
    %1196 = vmatprep.subr.mxu0 0.0
    %1197 = vmatpush1.msra.mxu0 0.0
    %1198 = vmatprep.subr.mxu0 0.0
    %1199 = vmatpush1.msra.mxu0 0.0
    %1200 = vmatprep.subr.mxu0 0.0
    %1201 = vmatpush1.msra.mxu0 0.0
    %1202 = vmatprep.subr.mxu0 0.0
    %1203 = vmatpush1.msra.mxu0 0.0
    %1204 = vmatprep.subr.mxu0 0.0
    %1205 = vmatpush1.msra.mxu0 0.0
    %1206 = vmatprep.subr.mxu0 0.0
    %1207 = vmatpush1.msra.mxu0 0.0
    %1208 = vmatprep.subr.mxu0 0.0
    %1209 = vmatpush1.msra.mxu0 0.0
    %1210 = vmatprep.subr.mxu0 0.0
    %1211 = vmatpush1.msra.mxu0 0.0
    %1212 = vmatprep.mubr.f32.mxu0 0.0
    %1213 = vmatmul.mubr.f32.gmra.mrb[0].mxu0 %v1146
    %v1214 = vpop.f32.mrb[0].mxu0
    %v1215 = vadd.f32 0.0, %v1214
    %v1216 = vpop.f32.mrb[0].mxu0
    %1217 = vdwg.mxu0
    %v1218 = vadd.f32 %v476, %v1215
    %1220 = vrot.lane.b32.xlu0 %v1141, 32
    %v1221 = vpop.permute.xlu0 %1220
    %v1222 = vsel %vm366, %v1221, 0
    %1224 = vmatprep.subr.mxu0 0.0
    %1225 = vmatpush1.msra.mxu0 %v350
    %1226 = vmatprep.subr.mxu0 0.0
    %1227 = vmatpush1.msra.mxu0 %v351
    %1228 = vmatprep.subr.mxu0 0.0
    %1229 = vmatpush1.msra.mxu0 %v352
    %1230 = vmatprep.subr.mxu0 0.0
    %1231 = vmatpush1.msra.mxu0 %v353
    %1232 = vmatprep.subr.mxu0 0.0
    %1233 = vmatpush1.msra.mxu0 0.0
    %1234 = vmatprep.subr.mxu0 0.0
    %1235 = vmatpush1.msra.mxu0 0.0
    %1236 = vmatprep.subr.mxu0 0.0
    %1237 = vmatpush1.msra.mxu0 0.0
    %1238 = vmatprep.subr.mxu0 0.0
    %1239 = vmatpush1.msra.mxu0 0.0
    %1240 = vmatprep.subr.mxu0 0.0
    %1241 = vmatpush1.msra.mxu0 0.0
    %1242 = vmatprep.subr.mxu0 0.0
    %1243 = vmatpush1.msra.mxu0 0.0
    %1244 = vmatprep.subr.mxu0 0.0
    %1245 = vmatpush1.msra.mxu0 0.0
    %1246 = vmatprep.subr.mxu0 0.0
    %1247 = vmatpush1.msra.mxu0 0.0
    %1248 = vmatprep.subr.mxu0 0.0
    %1249 = vmatpush1.msra.mxu0 0.0
    %1250 = vmatprep.subr.mxu0 0.0
    %1251 = vmatpush1.msra.mxu0 0.0
    %1252 = vmatprep.subr.mxu0 0.0
    %1253 = vmatpush1.msra.mxu0 0.0
    %1254 = vmatprep.subr.mxu0 0.0
    %1255 = vmatpush1.msra.mxu0 0.0
    %1256 = vmatprep.subr.mxu0 0.0
    %1257 = vmatpush1.msra.mxu0 0.0
    %1258 = vmatprep.subr.mxu0 0.0
    %1259 = vmatpush1.msra.mxu0 0.0
    %1260 = vmatprep.subr.mxu0 0.0
    %1261 = vmatpush1.msra.mxu0 0.0
    %1262 = vmatprep.subr.mxu0 0.0
    %1263 = vmatpush1.msra.mxu0 0.0
    %1264 = vmatprep.subr.mxu0 0.0
    %1265 = vmatpush1.msra.mxu0 0.0
    %1266 = vmatprep.subr.mxu0 0.0
    %1267 = vmatpush1.msra.mxu0 0.0
    %1268 = vmatprep.subr.mxu0 0.0
    %1269 = vmatpush1.msra.mxu0 0.0
    %1270 = vmatprep.subr.mxu0 0.0
    %1271 = vmatpush1.msra.mxu0 0.0
    %1272 = vmatprep.subr.mxu0 0.0
    %1273 = vmatpush1.msra.mxu0 0.0
    %1274 = vmatprep.subr.mxu0 0.0
    %1275 = vmatpush1.msra.mxu0 0.0
    %1276 = vmatprep.subr.mxu0 0.0
    %1277 = vmatpush1.msra.mxu0 0.0
    %1278 = vmatprep.subr.mxu0 0.0
    %1279 = vmatpush1.msra.mxu0 0.0
    %1280 = vmatprep.subr.mxu0 0.0
    %1281 = vmatpush1.msra.mxu0 0.0
    %1282 = vmatprep.subr.mxu0 0.0
    %1283 = vmatpush1.msra.mxu0 0.0
    %1284 = vmatprep.subr.mxu0 0.0
    %1285 = vmatpush1.msra.mxu0 0.0
    %1286 = vmatprep.subr.mxu0 0.0
    %1287 = vmatpush1.msra.mxu0 0.0
    %1288 = vmatprep.mubr.f32.mxu0 0.0
    %1289 = vmatmul.mubr.f32.gmra.mrb[0].mxu0 %v1222
    %v1290 = vpop.f32.mrb[0].mxu0
    %v1291 = vadd.f32 0.0, %v1290
    %v1292 = vpop.f32.mrb[0].mxu0
    %1293 = vdwg.mxu0
    %v1294 = vadd.f32 %v484, %v1291
    %v1295 = vxor.u32 %v1218, 2147483648
    %v1296 = vmul.f32 %v1295, 1.442695
    %v1297 = vpow.pop %v1296
    %v1298 = vadd.f32 %v1297, 1.0
    %v1299 = vrcp.pop %v1298
    %v1300 = vmul.f32 1.0, %v1299
    %v1301 = vtanh.pop %v1218
    %v1302 = vmul.f32 %v1300, %v1108
    %1304 = vrot.lane.b32.xlu0 %v1301, 64
    %v1305 = vpop.permute.xlu0 %1304
    %v1307 = vmul.f32 %v1300, %v1305
    %1309 = vrot.lane.b32.xlu0 %v1307, 32
    %v1310 = vpop.permute.xlu0 %1309
    %v1312 = vadd.f32 %v1302, %v1310
    %v1313 = vtanh.pop %v1312
    %1315 = vrot.lane.b32.xlu0 %v1313, 64
    %v1316 = vpop.permute.xlu0 %1315
    %v1318 = vmul.f32 %v1300, %v1316
    %v1319 = vsel %vm333, 1, 0
    %1320 = vset.pattern.permute.xlu0 0
    %1321 = vperm.xlu0 %1320, %v1319
    %v1322 = vpop.permute.xlu0 %1321
    %vm1323 = vcmp.eq.s32.totalorder %v1322, 1
    %v1324 = vsel %vm1323, %v1312, %v1108
    %v1325 = vsel %vm1323, %v1318, %v1109
    %v1326 = vsel %vm1323, %v1318, 0.0
    %v1327 = vxor.u32 %v1294, 2147483648
    %v1328 = vmul.f32 %v1327, 1.442695
    %v1329 = vpow.pop %v1328
    %v1330 = vadd.f32 %v1329, 1.0
    %v1331 = vrcp.pop %v1330
    %v1332 = vmul.f32 1.0, %v1331
    %v1333 = vtanh.pop %v1294
    %v1334 = vmul.f32 %v1332, %v1140
    %1336 = vrot.lane.b32.xlu0 %v1333, 64
    %v1337 = vpop.permute.xlu0 %1336
    %v1339 = vmul.f32 %v1332, %v1337
    %1341 = vrot.lane.b32.xlu0 %v1339, 32
    %v1342 = vpop.permute.xlu0 %1341
    %v1344 = vadd.f32 %v1334, %v1342
    %v1345 = vtanh.pop %v1344
    %1347 = vrot.lane.b32.xlu0 %v1345, 64
    %v1348 = vpop.permute.xlu0 %1347
    %v1350 = vmul.f32 %v1332, %v1348
    %v1351 = vsel %vm334, 1, 0
    %1352 = vset.pattern.permute.xlu0 0
    %1353 = vperm.xlu0 %1352, %v1351
    %v1354 = vpop.permute.xlu0 %1353
    %vm1355 = vcmp.eq.s32.totalorder %v1354, 1
    %v1356 = vsel %vm1355, %v1344, %v1140
    %v1357 = vsel %vm1355, %v1350, %v1141
    %v1358 = vsel %vm1355, %v1350, 0.0
    %1360 = vrot.lane.b32.xlu0 %v1325, 32
    %v1361 = vpop.permute.xlu0 %1360
    %v1362 = vsel %vm366, %v1361, 0
    %1364 = vmatprep.subr.mxu0 0.0
    %1365 = vmatpush1.msra.mxu0 %v346
    %1366 = vmatprep.subr.mxu0 0.0
    %1367 = vmatpush1.msra.mxu0 %v347
    %1368 = vmatprep.subr.mxu0 0.0
    %1369 = vmatpush1.msra.mxu0 %v348
    %1370 = vmatprep.subr.mxu0 0.0
    %1371 = vmatpush1.msra.mxu0 %v349
    %1372 = vmatprep.subr.mxu0 0.0
    %1373 = vmatpush1.msra.mxu0 0.0
    %1374 = vmatprep.subr.mxu0 0.0
    %1375 = vmatpush1.msra.mxu0 0.0
    %1376 = vmatprep.subr.mxu0 0.0
    %1377 = vmatpush1.msra.mxu0 0.0
    %1378 = vmatprep.subr.mxu0 0.0
    %1379 = vmatpush1.msra.mxu0 0.0
    %1380 = vmatprep.subr.mxu0 0.0
    %1381 = vmatpush1.msra.mxu0 0.0
    %1382 = vmatprep.subr.mxu0 0.0
    %1383 = vmatpush1.msra.mxu0 0.0
    %1384 = vmatprep.subr.mxu0 0.0
    %1385 = vmatpush1.msra.mxu0 0.0
    %1386 = vmatprep.subr.mxu0 0.0
    %1387 = vmatpush1.msra.mxu0 0.0
    %1388 = vmatprep.subr.mxu0 0.0
    %1389 = vmatpush1.msra.mxu0 0.0
    %1390 = vmatprep.subr.mxu0 0.0
    %1391 = vmatpush1.msra.mxu0 0.0
    %1392 = vmatprep.subr.mxu0 0.0
    %1393 = vmatpush1.msra.mxu0 0.0
    %1394 = vmatprep.subr.mxu0 0.0
    %1395 = vmatpush1.msra.mxu0 0.0
    %1396 = vmatprep.subr.mxu0 0.0
    %1397 = vmatpush1.msra.mxu0 0.0
    %1398 = vmatprep.subr.mxu0 0.0
    %1399 = vmatpush1.msra.mxu0 0.0
    %1400 = vmatprep.subr.mxu0 0.0
    %1401 = vmatpush1.msra.mxu0 0.0
    %1402 = vmatprep.subr.mxu0 0.0
    %1403 = vmatpush1.msra.mxu0 0.0
    %1404 = vmatprep.subr.mxu0 0.0
    %1405 = vmatpush1.msra.mxu0 0.0
    %1406 = vmatprep.subr.mxu0 0.0
    %1407 = vmatpush1.msra.mxu0 0.0
    %1408 = vmatprep.subr.mxu0 0.0
    %1409 = vmatpush1.msra.mxu0 0.0
    %1410 = vmatprep.subr.mxu0 0.0
    %1411 = vmatpush1.msra.mxu0 0.0
    %1412 = vmatprep.subr.mxu0 0.0
    %1413 = vmatpush1.msra.mxu0 0.0
    %1414 = vmatprep.subr.mxu0 0.0
    %1415 = vmatpush1.msra.mxu0 0.0
    %1416 = vmatprep.subr.mxu0 0.0
    %1417 = vmatpush1.msra.mxu0 0.0
    %1418 = vmatprep.subr.mxu0 0.0
    %1419 = vmatpush1.msra.mxu0 0.0
    %1420 = vmatprep.subr.mxu0 0.0
    %1421 = vmatpush1.msra.mxu0 0.0
    %1422 = vmatprep.subr.mxu0 0.0
    %1423 = vmatpush1.msra.mxu0 0.0
    %1424 = vmatprep.subr.mxu0 0.0
    %1425 = vmatpush1.msra.mxu0 0.0
    %1426 = vmatprep.subr.mxu0 0.0
    %1427 = vmatpush1.msra.mxu0 0.0
    %1428 = vmatprep.mubr.f32.mxu0 0.0
    %1429 = vmatmul.mubr.f32.gmra.mrb[0].mxu0 %v1362
    %v1430 = vpop.f32.mrb[0].mxu0
    %v1431 = vadd.f32 0.0, %v1430
    %v1432 = vpop.f32.mrb[0].mxu0
    %1433 = vdwg.mxu0
    %v1434 = vadd.f32 %v482, %v1431
    %1436 = vrot.lane.b32.xlu0 %v1357, 32
    %v1437 = vpop.permute.xlu0 %1436
    %v1438 = vsel %vm366, %v1437, 0
    %1440 = vmatprep.subr.mxu0 0.0
    %1441 = vmatpush1.msra.mxu0 %v350
    %1442 = vmatprep.subr.mxu0 0.0
    %1443 = vmatpush1.msra.mxu0 %v351
    %1444 = vmatprep.subr.mxu0 0.0
    %1445 = vmatpush1.msra.mxu0 %v352
    %1446 = vmatprep.subr.mxu0 0.0
    %1447 = vmatpush1.msra.mxu0 %v353
    %1448 = vmatprep.subr.mxu0 0.0
    %1449 = vmatpush1.msra.mxu0 0.0
    %1450 = vmatprep.subr.mxu0 0.0
    %1451 = vmatpush1.msra.mxu0 0.0
    %1452 = vmatprep.subr.mxu0 0.0
    %1453 = vmatpush1.msra.mxu0 0.0
    %1454 = vmatprep.subr.mxu0 0.0
    %1455 = vmatpush1.msra.mxu0 0.0
    %1456 = vmatprep.subr.mxu0 0.0
    %1457 = vmatpush1.msra.mxu0 0.0
    %1458 = vmatprep.subr.mxu0 0.0
    %1459 = vmatpush1.msra.mxu0 0.0
    %1460 = vmatprep.subr.mxu0 0.0
    %1461 = vmatpush1.msra.mxu0 0.0
    %1462 = vmatprep.subr.mxu0 0.0
    %1463 = vmatpush1.msra.mxu0 0.0
    %1464 = vmatprep.subr.mxu0 0.0
    %1465 = vmatpush1.msra.mxu0 0.0
    %1466 = vmatprep.subr.mxu0 0.0
    %1467 = vmatpush1.msra.mxu0 0.0
    %1468 = vmatprep.subr.mxu0 0.0
    %1469 = vmatpush1.msra.mxu0 0.0
    %1470 = vmatprep.subr.mxu0 0.0
    %1471 = vmatpush1.msra.mxu0 0.0
    %1472 = vmatprep.subr.mxu0 0.0
    %1473 = vmatpush1.msra.mxu0 0.0
    %1474 = vmatprep.subr.mxu0 0.0
    %1475 = vmatpush1.msra.mxu0 0.0
    %1476 = vmatprep.subr.mxu0 0.0
    %1477 = vmatpush1.msra.mxu0 0.0
    %1478 = vmatprep.subr.mxu0 0.0
    %1479 = vmatpush1.msra.mxu0 0.0
    %1480 = vmatprep.subr.mxu0 0.0
    %1481 = vmatpush1.msra.mxu0 0.0
    %1482 = vmatprep.subr.mxu0 0.0
    %1483 = vmatpush1.msra.mxu0 0.0
    %1484 = vmatprep.subr.mxu0 0.0
    %1485 = vmatpush1.msra.mxu0 0.0
    %1486 = vmatprep.subr.mxu0 0.0
    %1487 = vmatpush1.msra.mxu0 0.0
    %1488 = vmatprep.subr.mxu0 0.0
    %1489 = vmatpush1.msra.mxu0 0.0
    %1490 = vmatprep.subr.mxu0 0.0
    %1491 = vmatpush1.msra.mxu0 0.0
    %1492 = vmatprep.subr.mxu0 0.0
    %1493 = vmatpush1.msra.mxu0 0.0
    %1494 = vmatprep.subr.mxu0 0.0
    %1495 = vmatpush1.msra.mxu0 0.0
    %1496 = vmatprep.subr.mxu0 0.0
    %1497 = vmatpush1.msra.mxu0 0.0
    %1498 = vmatprep.subr.mxu0 0.0
    %1499 = vmatpush1.msra.mxu0 0.0
    %1500 = vmatprep.subr.mxu0 0.0
    %1501 = vmatpush1.msra.mxu0 0.0
    %1502 = vmatprep.subr.mxu0 0.0
    %1503 = vmatpush1.msra.mxu0 0.0
    %1504 = vmatprep.mubr.f32.mxu0 0.0
    %1505 = vmatmul.mubr.f32.gmra.mrb[0].mxu0 %v1438
    %v1506 = vpop.f32.mrb[0].mxu0
    %v1507 = vadd.f32 0.0, %v1506
    %v1508 = vpop.f32.mrb[0].mxu0
    %1509 = vdwg.mxu0
    %v1510 = vadd.f32 %v478, %v1507
    %v1511 = vxor.u32 %v1434, 2147483648
    %v1512 = vmul.f32 %v1511, 1.442695
    %v1513 = vpow.pop %v1512
    %v1514 = vadd.f32 %v1513, 1.0
    %v1515 = vrcp.pop %v1514
    %v1516 = vmul.f32 1.0, %v1515
    %v1517 = vtanh.pop %v1434
    %v1518 = vmul.f32 %v1516, %v1324
    %1520 = vrot.lane.b32.xlu0 %v1517, 64
    %v1521 = vpop.permute.xlu0 %1520
    %v1523 = vmul.f32 %v1516, %v1521
    %1525 = vrot.lane.b32.xlu0 %v1523, 32
    %v1526 = vpop.permute.xlu0 %1525
    %v1528 = vadd.f32 %v1518, %v1526
    %v1529 = vtanh.pop %v1528
    %1531 = vrot.lane.b32.xlu0 %v1529, 64
    %v1532 = vpop.permute.xlu0 %1531
    %v1534 = vmul.f32 %v1516, %v1532
    %v1535 = vsel %vm1355, %v1528, %v1324
    %v1536 = vsel %vm1355, %v1534, %v1325
    %v1537 = vsel %vm1355, %v1534, 0.0
    %v1538 = vxor.u32 %v1510, 2147483648
    %v1539 = vmul.f32 %v1538, 1.442695
    %v1540 = vpow.pop %v1539
    %v1541 = vadd.f32 %v1540, 1.0
    %v1542 = vrcp.pop %v1541
    %v1543 = vmul.f32 1.0, %v1542
    %v1544 = vtanh.pop %v1510
    %v1545 = vmul.f32 %v1543, %v1356
    %1547 = vrot.lane.b32.xlu0 %v1544, 64
    %v1548 = vpop.permute.xlu0 %1547
    %v1550 = vmul.f32 %v1543, %v1548
    %1552 = vrot.lane.b32.xlu0 %v1550, 32
    %v1553 = vpop.permute.xlu0 %1552
    %v1555 = vadd.f32 %v1545, %v1553
    %v1556 = vtanh.pop %v1555
    %1558 = vrot.lane.b32.xlu0 %v1556, 64
    %v1559 = vpop.permute.xlu0 %1558
    %v1561 = vmul.f32 %v1543, %v1559
    %v1562 = vsel %vm1323, %v1555, %v1356
    %v1563 = vsel %vm1323, %v1561, %v1357
    %v1564 = vsel %vm1323, %v1561, 0.0
    %1566 = vrot.lane.b32.xlu0 %v1536, 32
    %v1567 = vpop.permute.xlu0 %1566
    %v1568 = vsel %vm366, %v1567, 0
    %1570 = vmatprep.subr.mxu0 0.0
    %1571 = vmatpush1.msra.mxu0 %v346
    %1572 = vmatprep.subr.mxu0 0.0
    %1573 = vmatpush1.msra.mxu0 %v347
    %1574 = vmatprep.subr.mxu0 0.0
    %1575 = vmatpush1.msra.mxu0 %v348
    %1576 = vmatprep.subr.mxu0 0.0
    %1577 = vmatpush1.msra.mxu0 %v349
    %1578 = vmatprep.subr.mxu0 0.0
    %1579 = vmatpush1.msra.mxu0 0.0
    %1580 = vmatprep.subr.mxu0 0.0
    %1581 = vmatpush1.msra.mxu0 0.0
    %1582 = vmatprep.subr.mxu0 0.0
    %1583 = vmatpush1.msra.mxu0 0.0
    %1584 = vmatprep.subr.mxu0 0.0
    %1585 = vmatpush1.msra.mxu0 0.0
    %1586 = vmatprep.subr.mxu0 0.0
    %1587 = vmatpush1.msra.mxu0 0.0
    %1588 = vmatprep.subr.mxu0 0.0
    %1589 = vmatpush1.msra.mxu0 0.0
    %1590 = vmatprep.subr.mxu0 0.0
    %1591 = vmatpush1.msra.mxu0 0.0
    %1592 = vmatprep.subr.mxu0 0.0
    %1593 = vmatpush1.msra.mxu0 0.0
    %1594 = vmatprep.subr.mxu0 0.0
    %1595 = vmatpush1.msra.mxu0 0.0
    %1596 = vmatprep.subr.mxu0 0.0
    %1597 = vmatpush1.msra.mxu0 0.0
    %1598 = vmatprep.subr.mxu0 0.0
    %1599 = vmatpush1.msra.mxu0 0.0
    %1600 = vmatprep.subr.mxu0 0.0
    %1601 = vmatpush1.msra.mxu0 0.0
    %1602 = vmatprep.subr.mxu0 0.0
    %1603 = vmatpush1.msra.mxu0 0.0
    %1604 = vmatprep.subr.mxu0 0.0
    %1605 = vmatpush1.msra.mxu0 0.0
    %1606 = vmatprep.subr.mxu0 0.0
    %1607 = vmatpush1.msra.mxu0 0.0
    %1608 = vmatprep.subr.mxu0 0.0
    %1609 = vmatpush1.msra.mxu0 0.0
    %1610 = vmatprep.subr.mxu0 0.0
    %1611 = vmatpush1.msra.mxu0 0.0
    %1612 = vmatprep.subr.mxu0 0.0
    %1613 = vmatpush1.msra.mxu0 0.0
    %1614 = vmatprep.subr.mxu0 0.0
    %1615 = vmatpush1.msra.mxu0 0.0
    %1616 = vmatprep.subr.mxu0 0.0
    %1617 = vmatpush1.msra.mxu0 0.0
    %1618 = vmatprep.subr.mxu0 0.0
    %1619 = vmatpush1.msra.mxu0 0.0
    %1620 = vmatprep.subr.mxu0 0.0
    %1621 = vmatpush1.msra.mxu0 0.0
    %1622 = vmatprep.subr.mxu0 0.0
    %1623 = vmatpush1.msra.mxu0 0.0
    %1624 = vmatprep.subr.mxu0 0.0
    %1625 = vmatpush1.msra.mxu0 0.0
    %1626 = vmatprep.subr.mxu0 0.0
    %1627 = vmatpush1.msra.mxu0 0.0
    %1628 = vmatprep.subr.mxu0 0.0
    %1629 = vmatpush1.msra.mxu0 0.0
    %1630 = vmatprep.subr.mxu0 0.0
    %1631 = vmatpush1.msra.mxu0 0.0
    %1632 = vmatprep.subr.mxu0 0.0
    %1633 = vmatpush1.msra.mxu0 0.0
    %1634 = vmatprep.mubr.f32.mxu0 0.0
    %1635 = vmatmul.mubr.f32.gmra.mrb[0].mxu0 %v1568
    %v1636 = vpop.f32.mrb[0].mxu0
    %v1637 = vadd.f32 0.0, %v1636
    %v1638 = vpop.f32.mrb[0].mxu0
    %1639 = vdwg.mxu0
    %v1640 = vadd.f32 %v488, %v1637
    %1642 = vrot.lane.b32.xlu0 %v1563, 32
    %v1643 = vpop.permute.xlu0 %1642
    %v1644 = vsel %vm366, %v1643, 0
    %1646 = vmatprep.subr.mxu0 0.0
    %1647 = vmatpush1.msra.mxu0 %v350
    %1648 = vmatprep.subr.mxu0 0.0
    %1649 = vmatpush1.msra.mxu0 %v351
    %1650 = vmatprep.subr.mxu0 0.0
    %1651 = vmatpush1.msra.mxu0 %v352
    %1652 = vmatprep.subr.mxu0 0.0
    %1653 = vmatpush1.msra.mxu0 %v353
    %1654 = vmatprep.subr.mxu0 0.0
    %1655 = vmatpush1.msra.mxu0 0.0
    %1656 = vmatprep.subr.mxu0 0.0
    %1657 = vmatpush1.msra.mxu0 0.0
    %1658 = vmatprep.subr.mxu0 0.0
    %1659 = vmatpush1.msra.mxu0 0.0
    %1660 = vmatprep.subr.mxu0 0.0
    %1661 = vmatpush1.msra.mxu0 0.0
    %1662 = vmatprep.subr.mxu0 0.0
    %1663 = vmatpush1.msra.mxu0 0.0
    %1664 = vmatprep.subr.mxu0 0.0
    %1665 = vmatpush1.msra.mxu0 0.0
    %1666 = vmatprep.subr.mxu0 0.0
    %1667 = vmatpush1.msra.mxu0 0.0
    %1668 = vmatprep.subr.mxu0 0.0
    %1669 = vmatpush1.msra.mxu0 0.0
    %1670 = vmatprep.subr.mxu0 0.0
    %1671 = vmatpush1.msra.mxu0 0.0
    %1672 = vmatprep.subr.mxu0 0.0
    %1673 = vmatpush1.msra.mxu0 0.0
    %1674 = vmatprep.subr.mxu0 0.0
    %1675 = vmatpush1.msra.mxu0 0.0
    %1676 = vmatprep.subr.mxu0 0.0
    %1677 = vmatpush1.msra.mxu0 0.0
    %1678 = vmatprep.subr.mxu0 0.0
    %1679 = vmatpush1.msra.mxu0 0.0
    %1680 = vmatprep.subr.mxu0 0.0
    %1681 = vmatpush1.msra.mxu0 0.0
    %1682 = vmatprep.subr.mxu0 0.0
    %1683 = vmatpush1.msra.mxu0 0.0
    %1684 = vmatprep.subr.mxu0 0.0
    %1685 = vmatpush1.msra.mxu0 0.0
    %1686 = vmatprep.subr.mxu0 0.0
    %1687 = vmatpush1.msra.mxu0 0.0
    %1688 = vmatprep.subr.mxu0 0.0
    %1689 = vmatpush1.msra.mxu0 0.0
    %1690 = vmatprep.subr.mxu0 0.0
    %1691 = vmatpush1.msra.mxu0 0.0
    %1692 = vmatprep.subr.mxu0 0.0
    %1693 = vmatpush1.msra.mxu0 0.0
    %1694 = vmatprep.subr.mxu0 0.0
    %1695 = vmatpush1.msra.mxu0 0.0
    %1696 = vmatprep.subr.mxu0 0.0
    %1697 = vmatpush1.msra.mxu0 0.0
    %1698 = vmatprep.subr.mxu0 0.0
    %1699 = vmatpush1.msra.mxu0 0.0
    %1700 = vmatprep.subr.mxu0 0.0
    %1701 = vmatpush1.msra.mxu0 0.0
    %1702 = vmatprep.subr.mxu0 0.0
    %1703 = vmatpush1.msra.mxu0 0.0
    %1704 = vmatprep.subr.mxu0 0.0
    %1705 = vmatpush1.msra.mxu0 0.0
    %1706 = vmatprep.subr.mxu0 0.0
    %1707 = vmatpush1.msra.mxu0 0.0
    %1708 = vmatprep.subr.mxu0 0.0
    %1709 = vmatpush1.msra.mxu0 0.0
    %1710 = vmatprep.mubr.f32.mxu0 0.0
    %1711 = vmatmul.mubr.f32.gmra.mrb[0].mxu0 %v1644
    %v1712 = vpop.f32.mrb[0].mxu0
    %v1713 = vadd.f32 0.0, %v1712
    %v1714 = vpop.f32.mrb[0].mxu0
    %1715 = vdwg.mxu0
    %v1716 = vadd.f32 %v472, %v1713
    %v1717 = vxor.u32 %v1640, 2147483648
    %v1718 = vmul.f32 %v1717, 1.442695
    %v1719 = vpow.pop %v1718
    %v1720 = vadd.f32 %v1719, 1.0
    %v1721 = vrcp.pop %v1720
    %v1722 = vmul.f32 1.0, %v1721
    %v1723 = vtanh.pop %v1640
    %v1724 = vmul.f32 %v1722, %v1535
    %1726 = vrot.lane.b32.xlu0 %v1723, 64
    %v1727 = vpop.permute.xlu0 %1726
    %v1729 = vmul.f32 %v1722, %v1727
    %1731 = vrot.lane.b32.xlu0 %v1729, 32
    %v1732 = vpop.permute.xlu0 %1731
    %v1734 = vadd.f32 %v1724, %v1732
    %v1735 = vtanh.pop %v1734
    %1737 = vrot.lane.b32.xlu0 %v1735, 64
    %v1738 = vpop.permute.xlu0 %1737
    %v1740 = vmul.f32 %v1722, %v1738
    %v1741 = vsel %vm1139, %v1734, %v1535
    %v1742 = vsel %vm1139, %v1740, %v1536
    %v1743 = vsel %vm1139, %v1740, 0.0
    %v1744 = vxor.u32 %v1716, 2147483648
    %v1745 = vmul.f32 %v1744, 1.442695
    %v1746 = vpow.pop %v1745
    %v1747 = vadd.f32 %v1746, 1.0
    %v1748 = vrcp.pop %v1747
    %v1749 = vmul.f32 1.0, %v1748
    %v1750 = vtanh.pop %v1716
    %v1751 = vmul.f32 %v1749, %v1562
    %1753 = vrot.lane.b32.xlu0 %v1750, 64
    %v1754 = vpop.permute.xlu0 %1753
    %v1756 = vmul.f32 %v1749, %v1754
    %1758 = vrot.lane.b32.xlu0 %v1756, 32
    %v1759 = vpop.permute.xlu0 %1758
    %v1761 = vadd.f32 %v1751, %v1759
    %v1762 = vtanh.pop %v1761
    %1764 = vrot.lane.b32.xlu0 %v1762, 64
    %v1765 = vpop.permute.xlu0 %1764
    %v1767 = vmul.f32 %v1749, %v1765
    %v1768 = vsel %vm1107, %v1761, %v1562
    %v1769 = vsel %vm1107, %v1767, %v1563
    %v1770 = vsel %vm1107, %v1767, 0.0
    %1772 = vrot.lane.b32.xlu0 %v1742, 32
    %v1773 = vpop.permute.xlu0 %1772
    %v1774 = vsel %vm366, %v1773, 0
    %1776 = vmatprep.subr.mxu0 0.0
    %1777 = vmatpush1.msra.mxu0 %v346
    %1778 = vmatprep.subr.mxu0 0.0
    %1779 = vmatpush1.msra.mxu0 %v347
    %1780 = vmatprep.subr.mxu0 0.0
    %1781 = vmatpush1.msra.mxu0 %v348
    %1782 = vmatprep.subr.mxu0 0.0
    %1783 = vmatpush1.msra.mxu0 %v349
    %1784 = vmatprep.subr.mxu0 0.0
    %1785 = vmatpush1.msra.mxu0 0.0
    %1786 = vmatprep.subr.mxu0 0.0
    %1787 = vmatpush1.msra.mxu0 0.0
    %1788 = vmatprep.subr.mxu0 0.0
    %1789 = vmatpush1.msra.mxu0 0.0
    %1790 = vmatprep.subr.mxu0 0.0
    %1791 = vmatpush1.msra.mxu0 0.0
    %1792 = vmatprep.subr.mxu0 0.0
    %1793 = vmatpush1.msra.mxu0 0.0
    %1794 = vmatprep.subr.mxu0 0.0
    %1795 = vmatpush1.msra.mxu0 0.0
    %1796 = vmatprep.subr.mxu0 0.0
    %1797 = vmatpush1.msra.mxu0 0.0
    %1798 = vmatprep.subr.mxu0 0.0
    %1799 = vmatpush1.msra.mxu0 0.0
    %1800 = vmatprep.subr.mxu0 0.0
    %1801 = vmatpush1.msra.mxu0 0.0
    %1802 = vmatprep.subr.mxu0 0.0
    %1803 = vmatpush1.msra.mxu0 0.0
    %1804 = vmatprep.subr.mxu0 0.0
    %1805 = vmatpush1.msra.mxu0 0.0
    %1806 = vmatprep.subr.mxu0 0.0
    %1807 = vmatpush1.msra.mxu0 0.0
    %1808 = vmatprep.subr.mxu0 0.0
    %1809 = vmatpush1.msra.mxu0 0.0
    %1810 = vmatprep.subr.mxu0 0.0
    %1811 = vmatpush1.msra.mxu0 0.0
    %1812 = vmatprep.subr.mxu0 0.0
    %1813 = vmatpush1.msra.mxu0 0.0
    %1814 = vmatprep.subr.mxu0 0.0
    %1815 = vmatpush1.msra.mxu0 0.0
    %1816 = vmatprep.subr.mxu0 0.0
    %1817 = vmatpush1.msra.mxu0 0.0
    %1818 = vmatprep.subr.mxu0 0.0
    %1819 = vmatpush1.msra.mxu0 0.0
    %1820 = vmatprep.subr.mxu0 0.0
    %1821 = vmatpush1.msra.mxu0 0.0
    %1822 = vmatprep.subr.mxu0 0.0
    %1823 = vmatpush1.msra.mxu0 0.0
    %1824 = vmatprep.subr.mxu0 0.0
    %1825 = vmatpush1.msra.mxu0 0.0
    %1826 = vmatprep.subr.mxu0 0.0
    %1827 = vmatpush1.msra.mxu0 0.0
    %1828 = vmatprep.subr.mxu0 0.0
    %1829 = vmatpush1.msra.mxu0 0.0
    %1830 = vmatprep.subr.mxu0 0.0
    %1831 = vmatpush1.msra.mxu0 0.0
    %1832 = vmatprep.subr.mxu0 0.0
    %1833 = vmatpush1.msra.mxu0 0.0
    %1834 = vmatprep.subr.mxu0 0.0
    %1835 = vmatpush1.msra.mxu0 0.0
    %1836 = vmatprep.subr.mxu0 0.0
    %1837 = vmatpush1.msra.mxu0 0.0
    %1838 = vmatprep.subr.mxu0 0.0
    %1839 = vmatpush1.msra.mxu0 0.0
    %1840 = vmatprep.mubr.f32.mxu0 0.0
    %1841 = vmatmul.mubr.f32.gmra.mrb[0].mxu0 %v1774
    %v1842 = vpop.f32.mrb[0].mxu0
    %v1843 = vadd.f32 0.0, %v1842
    %v1844 = vpop.f32.mrb[0].mxu0
    %1845 = vdwg.mxu0
    %v1846 = vadd.f32 %v494, %v1843
    %1848 = vrot.lane.b32.xlu0 %v1769, 32
    %v1849 = vpop.permute.xlu0 %1848
    %v1850 = vsel %vm366, %v1849, 0
    %1852 = vmatprep.subr.mxu0 0.0
    %1853 = vmatpush1.msra.mxu0 %v350
    %1854 = vmatprep.subr.mxu0 0.0
    %1855 = vmatpush1.msra.mxu0 %v351
    %1856 = vmatprep.subr.mxu0 0.0
    %1857 = vmatpush1.msra.mxu0 %v352
    %1858 = vmatprep.subr.mxu0 0.0
    %1859 = vmatpush1.msra.mxu0 %v353
    %1860 = vmatprep.subr.mxu0 0.0
    %1861 = vmatpush1.msra.mxu0 0.0
    %1862 = vmatprep.subr.mxu0 0.0
    %1863 = vmatpush1.msra.mxu0 0.0
    %1864 = vmatprep.subr.mxu0 0.0
    %1865 = vmatpush1.msra.mxu0 0.0
    %1866 = vmatprep.subr.mxu0 0.0
    %1867 = vmatpush1.msra.mxu0 0.0
    %1868 = vmatprep.subr.mxu0 0.0
    %1869 = vmatpush1.msra.mxu0 0.0
    %1870 = vmatprep.subr.mxu0 0.0
    %1871 = vmatpush1.msra.mxu0 0.0
    %1872 = vmatprep.subr.mxu0 0.0
    %1873 = vmatpush1.msra.mxu0 0.0
    %1874 = vmatprep.subr.mxu0 0.0
    %1875 = vmatpush1.msra.mxu0 0.0
    %1876 = vmatprep.subr.mxu0 0.0
    %1877 = vmatpush1.msra.mxu0 0.0
    %1878 = vmatprep.subr.mxu0 0.0
    %1879 = vmatpush1.msra.mxu0 0.0
    %1880 = vmatprep.subr.mxu0 0.0
    %1881 = vmatpush1.msra.mxu0 0.0
    %1882 = vmatprep.subr.mxu0 0.0
    %1883 = vmatpush1.msra.mxu0 0.0
    %1884 = vmatprep.subr.mxu0 0.0
    %1885 = vmatpush1.msra.mxu0 0.0
    %1886 = vmatprep.subr.mxu0 0.0
    %1887 = vmatpush1.msra.mxu0 0.0
    %1888 = vmatprep.subr.mxu0 0.0
    %1889 = vmatpush1.msra.mxu0 0.0
    %1890 = vmatprep.subr.mxu0 0.0
    %1891 = vmatpush1.msra.mxu0 0.0
    %1892 = vmatprep.subr.mxu0 0.0
    %1893 = vmatpush1.msra.mxu0 0.0
    %1894 = vmatprep.subr.mxu0 0.0
    %1895 = vmatpush1.msra.mxu0 0.0
    %1896 = vmatprep.subr.mxu0 0.0
    %1897 = vmatpush1.msra.mxu0 0.0
    %1898 = vmatprep.subr.mxu0 0.0
    %1899 = vmatpush1.msra.mxu0 0.0
    %1900 = vmatprep.subr.mxu0 0.0
    %1901 = vmatpush1.msra.mxu0 0.0
    %1902 = vmatprep.subr.mxu0 0.0
    %1903 = vmatpush1.msra.mxu0 0.0
    %1904 = vmatprep.subr.mxu0 0.0
    %1905 = vmatpush1.msra.mxu0 0.0
    %1906 = vmatprep.subr.mxu0 0.0
    %1907 = vmatpush1.msra.mxu0 0.0
    %1908 = vmatprep.subr.mxu0 0.0
    %1909 = vmatpush1.msra.mxu0 0.0
    %1910 = vmatprep.subr.mxu0 0.0
    %1911 = vmatpush1.msra.mxu0 0.0
    %1912 = vmatprep.subr.mxu0 0.0
    %1913 = vmatpush1.msra.mxu0 0.0
    %1914 = vmatprep.subr.mxu0 0.0
    %1915 = vmatpush1.msra.mxu0 0.0
    %1916 = vmatprep.mubr.f32.mxu0 0.0
    %1917 = vmatmul.mubr.f32.gmra.mrb[0].mxu0 %v1850
    %v1918 = vpop.f32.mrb[0].mxu0
    %v1919 = vadd.f32 0.0, %v1918
    %v1920 = vpop.f32.mrb[0].mxu0
    %1921 = vdwg.mxu0
    %v1922 = vadd.f32 %v466, %v1919
    %v1923 = vxor.u32 %v1846, 2147483648
    %v1924 = vmul.f32 %v1923, 1.442695
    %v1925 = vpow.pop %v1924
    %v1926 = vadd.f32 %v1925, 1.0
    %v1927 = vrcp.pop %v1926
    %v1928 = vmul.f32 1.0, %v1927
    %v1929 = vtanh.pop %v1846
    %v1930 = vmul.f32 %v1928, %v1741
    %1932 = vrot.lane.b32.xlu0 %v1929, 64
    %v1933 = vpop.permute.xlu0 %1932
    %v1935 = vmul.f32 %v1928, %v1933
    %1937 = vrot.lane.b32.xlu0 %v1935, 32
    %v1938 = vpop.permute.xlu0 %1937
    %v1940 = vadd.f32 %v1930, %v1938
    %v1941 = vtanh.pop %v1940
    %1943 = vrot.lane.b32.xlu0 %v1941, 64
    %v1944 = vpop.permute.xlu0 %1943
    %v1946 = vmul.f32 %v1928, %v1944
    %v1947 = vsel %vm923, %v1940, %v1741
    %v1948 = vsel %vm923, %v1946, %v1742
    %v1949 = vsel %vm923, %v1946, 0.0
    %v1950 = vxor.u32 %v1922, 2147483648
    %v1951 = vmul.f32 %v1950, 1.442695
    %v1952 = vpow.pop %v1951
    %v1953 = vadd.f32 %v1952, 1.0
    %v1954 = vrcp.pop %v1953
    %v1955 = vmul.f32 1.0, %v1954
    %v1956 = vtanh.pop %v1922
    %v1957 = vmul.f32 %v1955, %v1768
    %1959 = vrot.lane.b32.xlu0 %v1956, 64
    %v1960 = vpop.permute.xlu0 %1959
    %v1962 = vmul.f32 %v1955, %v1960
    %1964 = vrot.lane.b32.xlu0 %v1962, 32
    %v1965 = vpop.permute.xlu0 %1964
    %v1967 = vadd.f32 %v1957, %v1965
    %v1968 = vtanh.pop %v1967
    %1970 = vrot.lane.b32.xlu0 %v1968, 64
    %v1971 = vpop.permute.xlu0 %1970
    %v1973 = vmul.f32 %v1955, %v1971
    %v1974 = vsel %vm891, %v1967, %v1768
    %v1975 = vsel %vm891, %v1973, %v1769
    %v1976 = vsel %vm891, %v1973, 0.0
    %1978 = vrot.lane.b32.xlu0 %v1948, 32
    %v1979 = vpop.permute.xlu0 %1978
    %v1980 = vsel %vm366, %v1979, 0
    %1982 = vmatprep.subr.mxu0 0.0
    %1983 = vmatpush1.msra.mxu0 %v346
    %1984 = vmatprep.subr.mxu0 0.0
    %1985 = vmatpush1.msra.mxu0 %v347
    %1986 = vmatprep.subr.mxu0 0.0
    %1987 = vmatpush1.msra.mxu0 %v348
    %1988 = vmatprep.subr.mxu0 0.0
    %1989 = vmatpush1.msra.mxu0 %v349
    %1990 = vmatprep.subr.mxu0 0.0
    %1991 = vmatpush1.msra.mxu0 0.0
    %1992 = vmatprep.subr.mxu0 0.0
    %1993 = vmatpush1.msra.mxu0 0.0
    %1994 = vmatprep.subr.mxu0 0.0
    %1995 = vmatpush1.msra.mxu0 0.0
    %1996 = vmatprep.subr.mxu0 0.0
    %1997 = vmatpush1.msra.mxu0 0.0
    %1998 = vmatprep.subr.mxu0 0.0
    %1999 = vmatpush1.msra.mxu0 0.0
    %2000 = vmatprep.subr.mxu0 0.0
    %2001 = vmatpush1.msra.mxu0 0.0
    %2002 = vmatprep.subr.mxu0 0.0
    %2003 = vmatpush1.msra.mxu0 0.0
    %2004 = vmatprep.subr.mxu0 0.0
    %2005 = vmatpush1.msra.mxu0 0.0
    %2006 = vmatprep.subr.mxu0 0.0
    %2007 = vmatpush1.msra.mxu0 0.0
    %2008 = vmatprep.subr.mxu0 0.0
    %2009 = vmatpush1.msra.mxu0 0.0
    %2010 = vmatprep.subr.mxu0 0.0
    %2011 = vmatpush1.msra.mxu0 0.0
    %2012 = vmatprep.subr.mxu0 0.0
    %2013 = vmatpush1.msra.mxu0 0.0
    %2014 = vmatprep.subr.mxu0 0.0
    %2015 = vmatpush1.msra.mxu0 0.0
    %2016 = vmatprep.subr.mxu0 0.0
    %2017 = vmatpush1.msra.mxu0 0.0
    %2018 = vmatprep.subr.mxu0 0.0
    %2019 = vmatpush1.msra.mxu0 0.0
    %2020 = vmatprep.subr.mxu0 0.0
    %2021 = vmatpush1.msra.mxu0 0.0
    %2022 = vmatprep.subr.mxu0 0.0
    %2023 = vmatpush1.msra.mxu0 0.0
    %2024 = vmatprep.subr.mxu0 0.0
    %2025 = vmatpush1.msra.mxu0 0.0
    %2026 = vmatprep.subr.mxu0 0.0
    %2027 = vmatpush1.msra.mxu0 0.0
    %2028 = vmatprep.subr.mxu0 0.0
    %2029 = vmatpush1.msra.mxu0 0.0
    %2030 = vmatprep.subr.mxu0 0.0
    %2031 = vmatpush1.msra.mxu0 0.0
    %2032 = vmatprep.subr.mxu0 0.0
    %2033 = vmatpush1.msra.mxu0 0.0
    %2034 = vmatprep.subr.mxu0 0.0
    %2035 = vmatpush1.msra.mxu0 0.0
    %2036 = vmatprep.subr.mxu0 0.0
    %2037 = vmatpush1.msra.mxu0 0.0
    %2038 = vmatprep.subr.mxu0 0.0
    %2039 = vmatpush1.msra.mxu0 0.0
    %2040 = vmatprep.subr.mxu0 0.0
    %2041 = vmatpush1.msra.mxu0 0.0
    %2042 = vmatprep.subr.mxu0 0.0
    %2043 = vmatpush1.msra.mxu0 0.0
    %2044 = vmatprep.subr.mxu0 0.0
    %2045 = vmatpush1.msra.mxu0 0.0
    %2046 = vmatprep.mubr.f32.mxu0 0.0
    %2047 = vmatmul.mubr.f32.gmra.mrb[0].mxu0 %v1980
    %v2048 = vpop.f32.mrb[0].mxu0
    %v2049 = vadd.f32 0.0, %v2048
    %v2050 = vpop.f32.mrb[0].mxu0
    %2051 = vdwg.mxu0
    %v2052 = vadd.f32 %v500, %v2049
    %2054 = vrot.lane.b32.xlu0 %v1975, 32
    %v2055 = vpop.permute.xlu0 %2054
    %v2056 = vsel %vm366, %v2055, 0
    %2058 = vmatprep.subr.mxu0 0.0
    %2059 = vmatpush1.msra.mxu0 %v350
    %2060 = vmatprep.subr.mxu0 0.0
    %2061 = vmatpush1.msra.mxu0 %v351
    %2062 = vmatprep.subr.mxu0 0.0
    %2063 = vmatpush1.msra.mxu0 %v352
    %2064 = vmatprep.subr.mxu0 0.0
    %2065 = vmatpush1.msra.mxu0 %v353
    %2066 = vmatprep.subr.mxu0 0.0
    %2067 = vmatpush1.msra.mxu0 0.0
    %2068 = vmatprep.subr.mxu0 0.0
    %2069 = vmatpush1.msra.mxu0 0.0
    %2070 = vmatprep.subr.mxu0 0.0
    %2071 = vmatpush1.msra.mxu0 0.0
    %2072 = vmatprep.subr.mxu0 0.0
    %2073 = vmatpush1.msra.mxu0 0.0
    %2074 = vmatprep.subr.mxu0 0.0
    %2075 = vmatpush1.msra.mxu0 0.0
    %2076 = vmatprep.subr.mxu0 0.0
    %2077 = vmatpush1.msra.mxu0 0.0
    %2078 = vmatprep.subr.mxu0 0.0
    %2079 = vmatpush1.msra.mxu0 0.0
    %2080 = vmatprep.subr.mxu0 0.0
    %2081 = vmatpush1.msra.mxu0 0.0
    %2082 = vmatprep.subr.mxu0 0.0
    %2083 = vmatpush1.msra.mxu0 0.0
    %2084 = vmatprep.subr.mxu0 0.0
    %2085 = vmatpush1.msra.mxu0 0.0
    %2086 = vmatprep.subr.mxu0 0.0
    %2087 = vmatpush1.msra.mxu0 0.0
    %2088 = vmatprep.subr.mxu0 0.0
    %2089 = vmatpush1.msra.mxu0 0.0
    %2090 = vmatprep.subr.mxu0 0.0
    %2091 = vmatpush1.msra.mxu0 0.0
    %2092 = vmatprep.subr.mxu0 0.0
    %2093 = vmatpush1.msra.mxu0 0.0
    %2094 = vmatprep.subr.mxu0 0.0
    %2095 = vmatpush1.msra.mxu0 0.0
    %2096 = vmatprep.subr.mxu0 0.0
    %2097 = vmatpush1.msra.mxu0 0.0
    %2098 = vmatprep.subr.mxu0 0.0
    %2099 = vmatpush1.msra.mxu0 0.0
    %2100 = vmatprep.subr.mxu0 0.0
    %2101 = vmatpush1.msra.mxu0 0.0
    %2102 = vmatprep.subr.mxu0 0.0
    %2103 = vmatpush1.msra.mxu0 0.0
    %2104 = vmatprep.subr.mxu0 0.0
    %2105 = vmatpush1.msra.mxu0 0.0
    %2106 = vmatprep.subr.mxu0 0.0
    %2107 = vmatpush1.msra.mxu0 0.0
    %2108 = vmatprep.subr.mxu0 0.0
    %2109 = vmatpush1.msra.mxu0 0.0
    %2110 = vmatprep.subr.mxu0 0.0
    %2111 = vmatpush1.msra.mxu0 0.0
    %2112 = vmatprep.subr.mxu0 0.0
    %2113 = vmatpush1.msra.mxu0 0.0
    %2114 = vmatprep.subr.mxu0 0.0
    %2115 = vmatpush1.msra.mxu0 0.0
    %2116 = vmatprep.subr.mxu0 0.0
    %2117 = vmatpush1.msra.mxu0 0.0
    %2118 = vmatprep.subr.mxu0 0.0
    %2119 = vmatpush1.msra.mxu0 0.0
    %2120 = vmatprep.subr.mxu0 0.0
    %2121 = vmatpush1.msra.mxu0 0.0
    %2122 = vmatprep.mubr.f32.mxu0 0.0
    %2123 = vmatmul.mubr.f32.gmra.mrb[0].mxu0 %v2056
    %v2124 = vpop.f32.mrb[0].mxu0
    %v2125 = vadd.f32 0.0, %v2124
    %v2126 = vpop.f32.mrb[0].mxu0
    %2127 = vdwg.mxu0
    %v2128 = vadd.f32 %v460, %v2125
    %v2129 = vxor.u32 %v2052, 2147483648
    %v2130 = vmul.f32 %v2129, 1.442695
    %v2131 = vpow.pop %v2130
    %v2132 = vadd.f32 %v2131, 1.0
    %v2133 = vrcp.pop %v2132
    %v2134 = vmul.f32 1.0, %v2133
    %v2135 = vtanh.pop %v2052
    %v2136 = vmul.f32 %v2134, %v1947
    %2138 = vrot.lane.b32.xlu0 %v2135, 64
    %v2139 = vpop.permute.xlu0 %2138
    %v2141 = vmul.f32 %v2134, %v2139
    %2143 = vrot.lane.b32.xlu0 %v2141, 32
    %v2144 = vpop.permute.xlu0 %2143
    %v2146 = vadd.f32 %v2136, %v2144
    %v2147 = vtanh.pop %v2146
    %2149 = vrot.lane.b32.xlu0 %v2147, 64
    %v2150 = vpop.permute.xlu0 %2149
    %v2152 = vmul.f32 %v2134, %v2150
    %v2153 = vsel %vm708, %v2152, 0.0
    %v2154 = vxor.u32 %v2128, 2147483648
    %v2155 = vmul.f32 %v2154, 1.442695
    %v2156 = vpow.pop %v2155
    %v2157 = vadd.f32 %v2156, 1.0
    %v2158 = vrcp.pop %v2157
    %v2159 = vmul.f32 1.0, %v2158
    %v2160 = vtanh.pop %v2128
    %v2161 = vmul.f32 %v2159, %v1974
    %2163 = vrot.lane.b32.xlu0 %v2160, 64
    %v2164 = vpop.permute.xlu0 %2163
    %v2166 = vmul.f32 %v2159, %v2164
    %2168 = vrot.lane.b32.xlu0 %v2166, 32
    %v2169 = vpop.permute.xlu0 %2168
    %v2171 = vadd.f32 %v2161, %v2169
    %v2172 = vtanh.pop %v2171
    %2174 = vrot.lane.b32.xlu0 %v2172, 64
    %v2175 = vpop.permute.xlu0 %2174
    %v2177 = vmul.f32 %v2159, %v2175
    %v2178 = vsel %vm677, %v2177, 0.0
    %2181 = vrot.lane.b32.xlu0 %v2178, 64
    %v2182 = vpop.permute.xlu0 %2181
    %v2184 = vsel %vm366, %v713, %v2182
    %2186 = vrot.lane.b32.xlu0 %v894, 32
    %v2187 = vpop.permute.xlu0 %2186
    %2190 = vrot.lane.b32.xlu0 %v1976, 64
    %v2191 = vpop.permute.xlu0 %2190
    %v2193 = vsel %vm366, %v2187, %v2191
    %2195 = vrot.lane.b32.xlu0 %v1110, 32
    %v2196 = vpop.permute.xlu0 %2195
    %2199 = vrot.lane.b32.xlu0 %v1770, 64
    %v2200 = vpop.permute.xlu0 %2199
    %v2202 = vsel %vm366, %v2196, %v2200
    %2204 = vrot.lane.b32.xlu0 %v1326, 32
    %v2205 = vpop.permute.xlu0 %2204
    %2208 = vrot.lane.b32.xlu0 %v1564, 64
    %v2209 = vpop.permute.xlu0 %2208
    %v2211 = vsel %vm366, %v2205, %v2209
    %2213 = vrot.lane.b32.xlu0 %v1537, 32
    %v2214 = vpop.permute.xlu0 %2213
    %2217 = vrot.lane.b32.xlu0 %v1358, 64
    %v2218 = vpop.permute.xlu0 %2217
    %v2220 = vsel %vm366, %v2214, %v2218
    %2222 = vrot.lane.b32.xlu0 %v1743, 32
    %v2223 = vpop.permute.xlu0 %2222
    %2226 = vrot.lane.b32.xlu0 %v1142, 64
    %v2227 = vpop.permute.xlu0 %2226
    %v2229 = vsel %vm366, %v2223, %v2227
    %2231 = vrot.lane.b32.xlu0 %v1949, 32
    %v2232 = vpop.permute.xlu0 %2231
    %2235 = vrot.lane.b32.xlu0 %v926, 64
    %v2236 = vpop.permute.xlu0 %2235
    %v2238 = vsel %vm366, %v2232, %v2236
    %2240 = vrot.lane.b32.xlu0 %v2153, 32
    %v2241 = vpop.permute.xlu0 %2240
    %2243 = vrot.lane.b32.xlu0 %v710, 64
    %v2244 = vpop.permute.xlu0 %2243
    %v2246 = vsel %vm366, %v2241, %v2244
    %v2247 = vld [vmem:[%s7] sm:$0xff]
    %v2248 = vld [vmem:[%s7 + $0x8] sm:$0xff]
    %v2249 = vld [vmem:[%s7 + $0x10] sm:$0xff]
    %v2250 = vld [vmem:[%s7 + $0x18] sm:$0xff]
    %v2251 = vld [vmem:[%s7 + $0x20] sm:$0xff]
    %v2252 = vld [vmem:[%s7 + $0x28] sm:$0xff]
    %v2253 = vld [vmem:[%s7 + $0x30] sm:$0xff]
    %v2254 = vld [vmem:[%s7 + $0x38] sm:$0xff]
    %v2255 = vld [vmem:[%s7 + $0x40] sm:$0xff]
    %v2256 = vld [vmem:[%s7 + $0x48] sm:$0xff]
    %v2257 = vld [vmem:[%s7 + $0x50] sm:$0xff]
    %v2258 = vld [vmem:[%s7 + $0x58] sm:$0xff]
    %v2259 = vld [vmem:[%s7 + $0x60] sm:$0xff]
    %v2260 = vld [vmem:[%s7 + $0x68] sm:$0xff]
    %v2261 = vld [vmem:[%s7 + $0x70] sm:$0xff]
    %v2262 = vld [vmem:[%s7 + $0x78] sm:$0xff]
    %v2263 = vld [vmem:[#allocation5] sm:$0xff]
    %v2264 = vld [vmem:[#allocation5 + $0x8] sm:$0xff]
    %v2265 = vld [vmem:[#allocation5 + $0x10] sm:$0xff]
    %v2266 = vld [vmem:[#allocation5 + $0x18] sm:$0xff]
    %v2267 = vld [vmem:[#allocation7] sm:$0xff]
    %v2268 = vld [vmem:[#allocation7 + $0x8] sm:$0xff]
    %v2269 = vld [vmem:[#allocation7 + $0x10] sm:$0xff]
    %v2270 = vld [vmem:[#allocation7 + $0x18] sm:$0xff]
    %v2271 = vld [vmem:[%s10] sm:$0x3]
    %v2273 = vlaneseq
    %v2274 = vshrl.u32 %v2273, 7
    %v2275 = vsub.s32 0, %v2274
    %v2276 = vrot.slane %v2271, %v2275
    %v2277 = vlaneseq
    %v2278 = vshrl.u32 %v2277, 7
    %v2279 = vsub.s32 1, %v2278
    %v2280 = vrot.slane %v2271, %v2279
    %vm2283 = vcmask 523264
    %v2285 = vsel %vm2283, %v2184, 0
    %v2288 = vsel %vm2283, %v2193, 0
    %v2291 = vsel %vm2283, %v2202, 0
    %v2294 = vsel %vm2283, %v2211, 0
    %v2297 = vsel %vm2283, %v2220, 0
    %v2300 = vsel %vm2283, %v2229, 0
    %v2303 = vsel %vm2283, %v2238, 0
    %v2306 = vsel %vm2283, %v2246, 0
    %2308 = vmatprep.subr.mxu0 %v2248
    %2309 = vmatpush1.msra.mxu0 %v2247
    %2310 = vmatprep.subr.mxu0 %v2250
    %2311 = vmatpush1.msra.mxu0 %v2249
    %2312 = vmatprep.subr.mxu0 %v2252
    %2313 = vmatpush1.msra.mxu0 %v2251
    %2314 = vmatprep.subr.mxu0 %v2254
    %2315 = vmatpush1.msra.mxu0 %v2253
    %2316 = vmatprep.subr.mxu0 %v2256
    %2317 = vmatpush1.msra.mxu0 %v2255
    %2318 = vmatprep.subr.mxu0 %v2258
    %2319 = vmatpush1.msra.mxu0 %v2257
    %2320 = vmatprep.subr.mxu0 %v2260
    %2321 = vmatpush1.msra.mxu0 %v2259
    %2322 = vmatprep.subr.mxu0 %v2262
    %2323 = vmatpush1.msra.mxu0 %v2261
    %2324 = vmatprep.subr.mxu0 0.0
    %2325 = vmatpush1.msra.mxu0 0.0
    %2326 = vmatprep.subr.mxu0 0.0
    %2327 = vmatpush1.msra.mxu0 0.0
    %2328 = vmatprep.subr.mxu0 0.0
    %2329 = vmatpush1.msra.mxu0 0.0
    %2330 = vmatprep.subr.mxu0 0.0
    %2331 = vmatpush1.msra.mxu0 0.0
    %2332 = vmatprep.subr.mxu0 0.0
    %2333 = vmatpush1.msra.mxu0 0.0
    %2334 = vmatprep.subr.mxu0 0.0
    %2335 = vmatpush1.msra.mxu0 0.0
    %2336 = vmatprep.subr.mxu0 0.0
    %2337 = vmatpush1.msra.mxu0 0.0
    %2338 = vmatprep.subr.mxu0 0.0
    %2339 = vmatpush1.msra.mxu0 0.0
    %2340 = vmatprep.subr.mxu0 0.0
    %2341 = vmatpush1.msra.mxu0 0.0
    %2342 = vmatprep.subr.mxu0 0.0
    %2343 = vmatpush1.msra.mxu0 0.0
    %2344 = vmatprep.subr.mxu0 0.0
    %2345 = vmatpush1.msra.mxu0 0.0
    %2346 = vmatprep.subr.mxu0 0.0
    %2347 = vmatpush1.msra.mxu0 0.0
    %2348 = vmatprep.subr.mxu0 0.0
    %2349 = vmatpush1.msra.mxu0 0.0
    %2350 = vmatprep.subr.mxu0 0.0
    %2351 = vmatpush1.msra.mxu0 0.0
    %2352 = vmatprep.subr.mxu0 0.0
    %2353 = vmatpush1.msra.mxu0 0.0
    %2354 = vmatprep.subr.mxu0 0.0
    %2355 = vmatpush1.msra.mxu0 0.0
    %2356 = vmatprep.subr.mxu0 0.0
    %2357 = vmatpush1.msra.mxu0 0.0
    %2358 = vmatprep.subr.mxu0 0.0
    %2359 = vmatpush1.msra.mxu0 0.0
    %2360 = vmatprep.subr.mxu0 0.0
    %2361 = vmatpush1.msra.mxu0 0.0
    %2362 = vmatprep.subr.mxu0 0.0
    %2363 = vmatpush1.msra.mxu0 0.0
    %2364 = vmatprep.subr.mxu0 0.0
    %2365 = vmatpush1.msra.mxu0 0.0
    %2366 = vmatprep.subr.mxu0 0.0
    %2367 = vmatpush1.msra.mxu0 0.0
    %2368 = vmatprep.subr.mxu0 0.0
    %2369 = vmatpush1.msra.mxu0 0.0
    %2370 = vmatprep.subr.mxu0 0.0
    %2371 = vmatpush1.msra.mxu0 0.0
    %2372 = vmatprep.mubr.f32.mxu0 0.0
    %2373 = vmatmul.mubr.f32.gmra.mrb[0].mxu0 %v2285
    %v2374 = vpop.f32.mrb[0].mxu0
    %v2375 = vadd.f32 %v2276, %v2374
    %v2376 = vpop.f32.mrb[0].mxu0
    %v2377 = vadd.f32 %v2280, %v2376
    %2378 = vmatprep.mubr.f32.mxu0 0.0
    %2379 = vmatmul.mubr.f32.gmra.mrb[0].mxu0 %v2288
    %v2380 = vpop.f32.mrb[0].mxu0
    %v2381 = vadd.f32 %v2276, %v2380
    %v2382 = vpop.f32.mrb[0].mxu0
    %v2383 = vadd.f32 %v2280, %v2382
    %2384 = vmatprep.mubr.f32.mxu0 0.0
    %2385 = vmatmul.mubr.f32.gmra.mrb[0].mxu0 %v2291
    %v2386 = vpop.f32.mrb[0].mxu0
    %v2387 = vadd.f32 %v2276, %v2386
    %v2388 = vpop.f32.mrb[0].mxu0
    %v2389 = vadd.f32 %v2280, %v2388
    %2390 = vmatprep.mubr.f32.mxu0 0.0
    %2391 = vmatmul.mubr.f32.gmra.mrb[0].mxu0 %v2294
    %v2392 = vpop.f32.mrb[0].mxu0
    %v2393 = vadd.f32 %v2276, %v2392
    %v2394 = vpop.f32.mrb[0].mxu0
    %v2395 = vadd.f32 %v2280, %v2394
    %2396 = vmatprep.mubr.f32.mxu0 0.0
    %2397 = vmatmul.mubr.f32.gmra.mrb[0].mxu0 %v2297
    %v2398 = vpop.f32.mrb[0].mxu0
    %v2399 = vadd.f32 %v2276, %v2398
    %v2400 = vpop.f32.mrb[0].mxu0
    %v2401 = vadd.f32 %v2280, %v2400
    %2402 = vmatprep.mubr.f32.mxu0 0.0
    %2403 = vmatmul.mubr.f32.gmra.mrb[0].mxu0 %v2300
    %v2404 = vpop.f32.mrb[0].mxu0
    %v2405 = vadd.f32 %v2276, %v2404
    %v2406 = vpop.f32.mrb[0].mxu0
    %v2407 = vadd.f32 %v2280, %v2406
    %2408 = vmatprep.mubr.f32.mxu0 0.0
    %2409 = vmatmul.mubr.f32.gmra.mrb[0].mxu0 %v2303
    %v2410 = vpop.f32.mrb[0].mxu0
    %v2411 = vadd.f32 %v2276, %v2410
    %v2412 = vpop.f32.mrb[0].mxu0
    %v2413 = vadd.f32 %v2280, %v2412
    %2414 = vmatprep.mubr.f32.mxu0 0.0
    %2415 = vmatmul.mubr.f32.gmra.mrb[0].mxu0 %v2306
    %v2416 = vpop.f32.mrb[0].mxu0
    %v2417 = vadd.f32 %v2276, %v2416
    %v2418 = vpop.f32.mrb[0].mxu0
    %v2419 = vadd.f32 %v2280, %v2418
    %2420 = vdwg.mxu0
    %2421 = vmatprep.subr.mxu0 0.0
    %2422 = vmatpush1.msra.mxu0 %v2263
    %2423 = vmatprep.subr.mxu0 0.0
    %2424 = vmatpush1.msra.mxu0 %v2264
    %2425 = vmatprep.subr.mxu0 0.0
    %2426 = vmatpush1.msra.mxu0 %v2265
    %2427 = vmatprep.subr.mxu0 0.0
    %2428 = vmatpush1.msra.mxu0 %v2266
    %2429 = vmatprep.subr.mxu0 0.0
    %2430 = vmatpush1.msra.mxu0 0.0
    %2431 = vmatprep.subr.mxu0 0.0
    %2432 = vmatpush1.msra.mxu0 0.0
    %2433 = vmatprep.subr.mxu0 0.0
    %2434 = vmatpush1.msra.mxu0 0.0
    %2435 = vmatprep.subr.mxu0 0.0
    %2436 = vmatpush1.msra.mxu0 0.0
    %2437 = vmatprep.subr.mxu0 0.0
    %2438 = vmatpush1.msra.mxu0 0.0
    %2439 = vmatprep.subr.mxu0 0.0
    %2440 = vmatpush1.msra.mxu0 0.0
    %2441 = vmatprep.subr.mxu0 0.0
    %2442 = vmatpush1.msra.mxu0 0.0
    %2443 = vmatprep.subr.mxu0 0.0
    %2444 = vmatpush1.msra.mxu0 0.0
    %2445 = vmatprep.subr.mxu0 0.0
    %2446 = vmatpush1.msra.mxu0 0.0
    %2447 = vmatprep.subr.mxu0 0.0
    %2448 = vmatpush1.msra.mxu0 0.0
    %2449 = vmatprep.subr.mxu0 0.0
    %2450 = vmatpush1.msra.mxu0 0.0
    %2451 = vmatprep.subr.mxu0 0.0
    %2452 = vmatpush1.msra.mxu0 0.0
    %2453 = vmatprep.subr.mxu0 0.0
    %2454 = vmatpush1.msra.mxu0 0.0
    %2455 = vmatprep.subr.mxu0 0.0
    %2456 = vmatpush1.msra.mxu0 0.0
    %2457 = vmatprep.subr.mxu0 0.0
    %2458 = vmatpush1.msra.mxu0 0.0
    %2459 = vmatprep.subr.mxu0 0.0
    %2460 = vmatpush1.msra.mxu0 0.0
    %2461 = vmatprep.subr.mxu0 0.0
    %2462 = vmatpush1.msra.mxu0 0.0
    %2463 = vmatprep.subr.mxu0 0.0
    %2464 = vmatpush1.msra.mxu0 0.0
    %2465 = vmatprep.subr.mxu0 0.0
    %2466 = vmatpush1.msra.mxu0 0.0
    %2467 = vmatprep.subr.mxu0 0.0
    %2468 = vmatpush1.msra.mxu0 0.0
    %2469 = vmatprep.subr.mxu0 0.0
    %2470 = vmatpush1.msra.mxu0 0.0
    %2471 = vmatprep.subr.mxu0 0.0
    %2472 = vmatpush1.msra.mxu0 0.0
    %2473 = vmatprep.subr.mxu0 0.0
    %2474 = vmatpush1.msra.mxu0 0.0
    %2475 = vmatprep.subr.mxu0 0.0
    %2476 = vmatpush1.msra.mxu0 0.0
    %2477 = vmatprep.subr.mxu0 0.0
    %2478 = vmatpush1.msra.mxu0 0.0
    %2479 = vmatprep.subr.mxu0 0.0
    %2480 = vmatpush1.msra.mxu0 0.0
    %2481 = vmatprep.subr.mxu0 0.0
    %2482 = vmatpush1.msra.mxu0 0.0
    %2483 = vmatprep.subr.mxu0 0.0
    %2484 = vmatpush1.msra.mxu0 0.0
    %2485 = vmatprep.mubr.f32.mxu0 0.0
    %2486 = vmatmul.mubr.f32.gmra.mrb[0].mxu0 %v505
    %v2487 = vpop.f32.mrb[0].mxu0
    %v2488 = vadd.f32 0.0, %v2487
    %v2489 = vpop.f32.mrb[0].mxu0
    %2490 = vdwg.mxu0
    %v2491 = vadd.f32 %v2375, %v2488
    %2492 = vmatprep.subr.mxu0 0.0
    %2493 = vmatpush1.msra.mxu0 %v2267
    %2494 = vmatprep.subr.mxu0 0.0
    %2495 = vmatpush1.msra.mxu0 %v2268
    %2496 = vmatprep.subr.mxu0 0.0
    %2497 = vmatpush1.msra.mxu0 %v2269
    %2498 = vmatprep.subr.mxu0 0.0
    %2499 = vmatpush1.msra.mxu0 %v2270
    %2500 = vmatprep.subr.mxu0 0.0
    %2501 = vmatpush1.msra.mxu0 0.0
    %2502 = vmatprep.subr.mxu0 0.0
    %2503 = vmatpush1.msra.mxu0 0.0
    %2504 = vmatprep.subr.mxu0 0.0
    %2505 = vmatpush1.msra.mxu0 0.0
    %2506 = vmatprep.subr.mxu0 0.0
    %2507 = vmatpush1.msra.mxu0 0.0
    %2508 = vmatprep.subr.mxu0 0.0
    %2509 = vmatpush1.msra.mxu0 0.0
    %2510 = vmatprep.subr.mxu0 0.0
    %2511 = vmatpush1.msra.mxu0 0.0
    %2512 = vmatprep.subr.mxu0 0.0
    %2513 = vmatpush1.msra.mxu0 0.0
    %2514 = vmatprep.subr.mxu0 0.0
    %2515 = vmatpush1.msra.mxu0 0.0
    %2516 = vmatprep.subr.mxu0 0.0
    %2517 = vmatpush1.msra.mxu0 0.0
    %2518 = vmatprep.subr.mxu0 0.0
    %2519 = vmatpush1.msra.mxu0 0.0
    %2520 = vmatprep.subr.mxu0 0.0
    %2521 = vmatpush1.msra.mxu0 0.0
    %2522 = vmatprep.subr.mxu0 0.0
    %2523 = vmatpush1.msra.mxu0 0.0
    %2524 = vmatprep.subr.mxu0 0.0
    %2525 = vmatpush1.msra.mxu0 0.0
    %2526 = vmatprep.subr.mxu0 0.0
    %2527 = vmatpush1.msra.mxu0 0.0
    %2528 = vmatprep.subr.mxu0 0.0
    %2529 = vmatpush1.msra.mxu0 0.0
    %2530 = vmatprep.subr.mxu0 0.0
    %2531 = vmatpush1.msra.mxu0 0.0
    %2532 = vmatprep.subr.mxu0 0.0
    %2533 = vmatpush1.msra.mxu0 0.0
    %2534 = vmatprep.subr.mxu0 0.0
    %2535 = vmatpush1.msra.mxu0 0.0
    %2536 = vmatprep.subr.mxu0 0.0
    %2537 = vmatpush1.msra.mxu0 0.0
    %2538 = vmatprep.subr.mxu0 0.0
    %2539 = vmatpush1.msra.mxu0 0.0
    %2540 = vmatprep.subr.mxu0 0.0
    %2541 = vmatpush1.msra.mxu0 0.0
    %2542 = vmatprep.subr.mxu0 0.0
    %2543 = vmatpush1.msra.mxu0 0.0
    %2544 = vmatprep.subr.mxu0 0.0
    %2545 = vmatpush1.msra.mxu0 0.0
    %2546 = vmatprep.subr.mxu0 0.0
    %2547 = vmatpush1.msra.mxu0 0.0
    %2548 = vmatprep.subr.mxu0 0.0
    %2549 = vmatpush1.msra.mxu0 0.0
    %2550 = vmatprep.subr.mxu0 0.0
    %2551 = vmatpush1.msra.mxu0 0.0
    %2552 = vmatprep.subr.mxu0 0.0
    %2553 = vmatpush1.msra.mxu0 0.0
    %2554 = vmatprep.subr.mxu0 0.0
    %2555 = vmatpush1.msra.mxu0 0.0
    %2556 = vmatprep.mubr.f32.mxu0 0.0
    %2557 = vmatmul.mubr.f32.gmra.mrb[0].mxu0 %v505
    %v2558 = vpop.f32.mrb[0].mxu0
    %v2559 = vadd.f32 0.0, %v2558
    %v2560 = vpop.f32.mrb[0].mxu0
    %2561 = vdwg.mxu0
    %v2562 = vadd.f32 %v2419, %v2559
    %v2563 = vxor.u32 %v2491, 2147483648
    %v2564 = vmul.f32 %v2563, 1.442695
    %v2565 = vpow.pop %v2564
    %v2566 = vadd.f32 %v2565, 1.0
    %v2567 = vrcp.pop %v2566
    %v2568 = vmul.f32 1.0, %v2567
    %v2569 = vtanh.pop %v2491
    %v2570 = vmul.f32 %v2568, 0.0
    %2572 = vrot.lane.b32.xlu0 %v2569, 64
    %v2573 = vpop.permute.xlu0 %2572
    %v2575 = vmul.f32 %v2568, %v2573
    %2577 = vrot.lane.b32.xlu0 %v2575, 32
    %v2578 = vpop.permute.xlu0 %2577
    %v2580 = vadd.f32 %v2570, %v2578
    %v2581 = vtanh.pop %v2580
    %2583 = vrot.lane.b32.xlu0 %v2581, 64
    %v2584 = vpop.permute.xlu0 %2583
    %v2586 = vmul.f32 %v2568, %v2584
    %v2587 = vsel %vm677, %v2580, 0.0
    %v2588 = vsel %vm677, %v2586, 0.0
    %v2589 = vxor.u32 %v2562, 2147483648
    %v2590 = vmul.f32 %v2589, 1.442695
    %v2591 = vpow.pop %v2590
    %v2592 = vadd.f32 %v2591, 1.0
    %v2593 = vrcp.pop %v2592
    %v2594 = vmul.f32 1.0, %v2593
    %v2595 = vtanh.pop %v2562
    %v2596 = vmul.f32 %v2594, 0.0
    %2598 = vrot.lane.b32.xlu0 %v2595, 64
    %v2599 = vpop.permute.xlu0 %2598
    %v2601 = vmul.f32 %v2594, %v2599
    %2603 = vrot.lane.b32.xlu0 %v2601, 32
    %v2604 = vpop.permute.xlu0 %2603
    %v2606 = vadd.f32 %v2596, %v2604
    %v2607 = vtanh.pop %v2606
    %2609 = vrot.lane.b32.xlu0 %v2607, 64
    %v2610 = vpop.permute.xlu0 %2609
    %v2612 = vmul.f32 %v2594, %v2610
    %v2613 = vsel %vm708, %v2606, 0.0
    %v2614 = vsel %vm708, %v2612, 0.0
    %2616 = vrot.lane.b32.xlu0 %v2588, 32
    %v2617 = vpop.permute.xlu0 %2616
    %v2618 = vsel %vm366, %v2617, 0
    %2620 = vmatprep.subr.mxu0 0.0
    %2621 = vmatpush1.msra.mxu0 %v2263
    %2622 = vmatprep.subr.mxu0 0.0
    %2623 = vmatpush1.msra.mxu0 %v2264
    %2624 = vmatprep.subr.mxu0 0.0
    %2625 = vmatpush1.msra.mxu0 %v2265
    %2626 = vmatprep.subr.mxu0 0.0
    %2627 = vmatpush1.msra.mxu0 %v2266
    %2628 = vmatprep.subr.mxu0 0.0
    %2629 = vmatpush1.msra.mxu0 0.0
    %2630 = vmatprep.subr.mxu0 0.0
    %2631 = vmatpush1.msra.mxu0 0.0
    %2632 = vmatprep.subr.mxu0 0.0
    %2633 = vmatpush1.msra.mxu0 0.0
    %2634 = vmatprep.subr.mxu0 0.0
    %2635 = vmatpush1.msra.mxu0 0.0
    %2636 = vmatprep.subr.mxu0 0.0
    %2637 = vmatpush1.msra.mxu0 0.0
    %2638 = vmatprep.subr.mxu0 0.0
    %2639 = vmatpush1.msra.mxu0 0.0
    %2640 = vmatprep.subr.mxu0 0.0
    %2641 = vmatpush1.msra.mxu0 0.0
    %2642 = vmatprep.subr.mxu0 0.0
    %2643 = vmatpush1.msra.mxu0 0.0
    %2644 = vmatprep.subr.mxu0 0.0
    %2645 = vmatpush1.msra.mxu0 0.0
    %2646 = vmatprep.subr.mxu0 0.0
    %2647 = vmatpush1.msra.mxu0 0.0
    %2648 = vmatprep.subr.mxu0 0.0
    %2649 = vmatpush1.msra.mxu0 0.0
    %2650 = vmatprep.subr.mxu0 0.0
    %2651 = vmatpush1.msra.mxu0 0.0
    %2652 = vmatprep.subr.mxu0 0.0
    %2653 = vmatpush1.msra.mxu0 0.0
    %2654 = vmatprep.subr.mxu0 0.0
    %2655 = vmatpush1.msra.mxu0 0.0
    %2656 = vmatprep.subr.mxu0 0.0
    %2657 = vmatpush1.msra.mxu0 0.0
    %2658 = vmatprep.subr.mxu0 0.0
    %2659 = vmatpush1.msra.mxu0 0.0
    %2660 = vmatprep.subr.mxu0 0.0
    %2661 = vmatpush1.msra.mxu0 0.0
    %2662 = vmatprep.subr.mxu0 0.0
    %2663 = vmatpush1.msra.mxu0 0.0
    %2664 = vmatprep.subr.mxu0 0.0
    %2665 = vmatpush1.msra.mxu0 0.0
    %2666 = vmatprep.subr.mxu0 0.0
    %2667 = vmatpush1.msra.mxu0 0.0
    %2668 = vmatprep.subr.mxu0 0.0
    %2669 = vmatpush1.msra.mxu0 0.0
    %2670 = vmatprep.subr.mxu0 0.0
    %2671 = vmatpush1.msra.mxu0 0.0
    %2672 = vmatprep.subr.mxu0 0.0
    %2673 = vmatpush1.msra.mxu0 0.0
    %2674 = vmatprep.subr.mxu0 0.0
    %2675 = vmatpush1.msra.mxu0 0.0
    %2676 = vmatprep.subr.mxu0 0.0
    %2677 = vmatpush1.msra.mxu0 0.0
    %2678 = vmatprep.subr.mxu0 0.0
    %2679 = vmatpush1.msra.mxu0 0.0
    %2680 = vmatprep.subr.mxu0 0.0
    %2681 = vmatpush1.msra.mxu0 0.0
    %2682 = vmatprep.subr.mxu0 0.0
    %2683 = vmatpush1.msra.mxu0 0.0
    %2684 = vmatprep.mubr.f32.mxu0 0.0
    %2685 = vmatmul.mubr.f32.gmra.mrb[0].mxu0 %v2618
    %v2686 = vpop.f32.mrb[0].mxu0
    %v2687 = vadd.f32 0.0, %v2686
    %v2688 = vpop.f32.mrb[0].mxu0
    %2689 = vdwg.mxu0
    %v2690 = vadd.f32 %v2381, %v2687
    %2692 = vrot.lane.b32.xlu0 %v2614, 32
    %v2693 = vpop.permute.xlu0 %2692
    %v2694 = vsel %vm366, %v2693, 0
    %2696 = vmatprep.subr.mxu0 0.0
    %2697 = vmatpush1.msra.mxu0 %v2267
    %2698 = vmatprep.subr.mxu0 0.0
    %2699 = vmatpush1.msra.mxu0 %v2268
    %2700 = vmatprep.subr.mxu0 0.0
    %2701 = vmatpush1.msra.mxu0 %v2269
    %2702 = vmatprep.subr.mxu0 0.0
    %2703 = vmatpush1.msra.mxu0 %v2270
    %2704 = vmatprep.subr.mxu0 0.0
    %2705 = vmatpush1.msra.mxu0 0.0
    %2706 = vmatprep.subr.mxu0 0.0
    %2707 = vmatpush1.msra.mxu0 0.0
    %2708 = vmatprep.subr.mxu0 0.0
    %2709 = vmatpush1.msra.mxu0 0.0
    %2710 = vmatprep.subr.mxu0 0.0
    %2711 = vmatpush1.msra.mxu0 0.0
    %2712 = vmatprep.subr.mxu0 0.0
    %2713 = vmatpush1.msra.mxu0 0.0
    %2714 = vmatprep.subr.mxu0 0.0
    %2715 = vmatpush1.msra.mxu0 0.0
    %2716 = vmatprep.subr.mxu0 0.0
    %2717 = vmatpush1.msra.mxu0 0.0
    %2718 = vmatprep.subr.mxu0 0.0
    %2719 = vmatpush1.msra.mxu0 0.0
    %2720 = vmatprep.subr.mxu0 0.0
    %2721 = vmatpush1.msra.mxu0 0.0
    %2722 = vmatprep.subr.mxu0 0.0
    %2723 = vmatpush1.msra.mxu0 0.0
    %2724 = vmatprep.subr.mxu0 0.0
    %2725 = vmatpush1.msra.mxu0 0.0
    %2726 = vmatprep.subr.mxu0 0.0
    %2727 = vmatpush1.msra.mxu0 0.0
    %2728 = vmatprep.subr.mxu0 0.0
    %2729 = vmatpush1.msra.mxu0 0.0
    %2730 = vmatprep.subr.mxu0 0.0
    %2731 = vmatpush1.msra.mxu0 0.0
    %2732 = vmatprep.subr.mxu0 0.0
    %2733 = vmatpush1.msra.mxu0 0.0
    %2734 = vmatprep.subr.mxu0 0.0
    %2735 = vmatpush1.msra.mxu0 0.0
    %2736 = vmatprep.subr.mxu0 0.0
    %2737 = vmatpush1.msra.mxu0 0.0
    %2738 = vmatprep.subr.mxu0 0.0
    %2739 = vmatpush1.msra.mxu0 0.0
    %2740 = vmatprep.subr.mxu0 0.0
    %2741 = vmatpush1.msra.mxu0 0.0
    %2742 = vmatprep.subr.mxu0 0.0
    %2743 = vmatpush1.msra.mxu0 0.0
    %2744 = vmatprep.subr.mxu0 0.0
    %2745 = vmatpush1.msra.mxu0 0.0
    %2746 = vmatprep.subr.mxu0 0.0
    %2747 = vmatpush1.msra.mxu0 0.0
    %2748 = vmatprep.subr.mxu0 0.0
    %2749 = vmatpush1.msra.mxu0 0.0
    %2750 = vmatprep.subr.mxu0 0.0
    %2751 = vmatpush1.msra.mxu0 0.0
    %2752 = vmatprep.subr.mxu0 0.0
    %2753 = vmatpush1.msra.mxu0 0.0
    %2754 = vmatprep.subr.mxu0 0.0
    %2755 = vmatpush1.msra.mxu0 0.0
    %2756 = vmatprep.subr.mxu0 0.0
    %2757 = vmatpush1.msra.mxu0 0.0
    %2758 = vmatprep.subr.mxu0 0.0
    %2759 = vmatpush1.msra.mxu0 0.0
    %2760 = vmatprep.mubr.f32.mxu0 0.0
    %2761 = vmatmul.mubr.f32.gmra.mrb[0].mxu0 %v2694
    %v2762 = vpop.f32.mrb[0].mxu0
    %v2763 = vadd.f32 0.0, %v2762
    %v2764 = vpop.f32.mrb[0].mxu0
    %2765 = vdwg.mxu0
    %v2766 = vadd.f32 %v2413, %v2763
    %v2767 = vxor.u32 %v2690, 2147483648
    %v2768 = vmul.f32 %v2767, 1.442695
    %v2769 = vpow.pop %v2768
    %v2770 = vadd.f32 %v2769, 1.0
    %v2771 = vrcp.pop %v2770
    %v2772 = vmul.f32 1.0, %v2771
    %v2773 = vtanh.pop %v2690
    %v2774 = vmul.f32 %v2772, %v2587
    %2776 = vrot.lane.b32.xlu0 %v2773, 64
    %v2777 = vpop.permute.xlu0 %2776
    %v2779 = vmul.f32 %v2772, %v2777
    %2781 = vrot.lane.b32.xlu0 %v2779, 32
    %v2782 = vpop.permute.xlu0 %2781
    %v2784 = vadd.f32 %v2774, %v2782
    %v2785 = vtanh.pop %v2784
    %2787 = vrot.lane.b32.xlu0 %v2785, 64
    %v2788 = vpop.permute.xlu0 %2787
    %v2790 = vmul.f32 %v2772, %v2788
    %v2791 = vsel %vm891, %v2784, %v2587
    %v2792 = vsel %vm891, %v2790, %v2588
    %v2793 = vxor.u32 %v2766, 2147483648
    %v2794 = vmul.f32 %v2793, 1.442695
    %v2795 = vpow.pop %v2794
    %v2796 = vadd.f32 %v2795, 1.0
    %v2797 = vrcp.pop %v2796
    %v2798 = vmul.f32 1.0, %v2797
    %v2799 = vtanh.pop %v2766
    %v2800 = vmul.f32 %v2798, %v2613
    %2802 = vrot.lane.b32.xlu0 %v2799, 64
    %v2803 = vpop.permute.xlu0 %2802
    %v2805 = vmul.f32 %v2798, %v2803
    %2807 = vrot.lane.b32.xlu0 %v2805, 32
    %v2808 = vpop.permute.xlu0 %2807
    %v2810 = vadd.f32 %v2800, %v2808
    %v2811 = vtanh.pop %v2810
    %2813 = vrot.lane.b32.xlu0 %v2811, 64
    %v2814 = vpop.permute.xlu0 %2813
    %v2816 = vmul.f32 %v2798, %v2814
    %v2817 = vsel %vm923, %v2810, %v2613
    %v2818 = vsel %vm923, %v2816, %v2614
    %2820 = vrot.lane.b32.xlu0 %v2792, 32
    %v2821 = vpop.permute.xlu0 %2820
    %v2822 = vsel %vm366, %v2821, 0
    %2824 = vmatprep.subr.mxu0 0.0
    %2825 = vmatpush1.msra.mxu0 %v2263
    %2826 = vmatprep.subr.mxu0 0.0
    %2827 = vmatpush1.msra.mxu0 %v2264
    %2828 = vmatprep.subr.mxu0 0.0
    %2829 = vmatpush1.msra.mxu0 %v2265
    %2830 = vmatprep.subr.mxu0 0.0
    %2831 = vmatpush1.msra.mxu0 %v2266
    %2832 = vmatprep.subr.mxu0 0.0
    %2833 = vmatpush1.msra.mxu0 0.0
    %2834 = vmatprep.subr.mxu0 0.0
    %2835 = vmatpush1.msra.mxu0 0.0
    %2836 = vmatprep.subr.mxu0 0.0
    %2837 = vmatpush1.msra.mxu0 0.0
    %2838 = vmatprep.subr.mxu0 0.0
    %2839 = vmatpush1.msra.mxu0 0.0
    %2840 = vmatprep.subr.mxu0 0.0
    %2841 = vmatpush1.msra.mxu0 0.0
    %2842 = vmatprep.subr.mxu0 0.0
    %2843 = vmatpush1.msra.mxu0 0.0
    %2844 = vmatprep.subr.mxu0 0.0
    %2845 = vmatpush1.msra.mxu0 0.0
    %2846 = vmatprep.subr.mxu0 0.0
    %2847 = vmatpush1.msra.mxu0 0.0
    %2848 = vmatprep.subr.mxu0 0.0
    %2849 = vmatpush1.msra.mxu0 0.0
    %2850 = vmatprep.subr.mxu0 0.0
    %2851 = vmatpush1.msra.mxu0 0.0
    %2852 = vmatprep.subr.mxu0 0.0
    %2853 = vmatpush1.msra.mxu0 0.0
    %2854 = vmatprep.subr.mxu0 0.0
    %2855 = vmatpush1.msra.mxu0 0.0
    %2856 = vmatprep.subr.mxu0 0.0
    %2857 = vmatpush1.msra.mxu0 0.0
    %2858 = vmatprep.subr.mxu0 0.0
    %2859 = vmatpush1.msra.mxu0 0.0
    %2860 = vmatprep.subr.mxu0 0.0
    %2861 = vmatpush1.msra.mxu0 0.0
    %2862 = vmatprep.subr.mxu0 0.0
    %2863 = vmatpush1.msra.mxu0 0.0
    %2864 = vmatprep.subr.mxu0 0.0
    %2865 = vmatpush1.msra.mxu0 0.0
    %2866 = vmatprep.subr.mxu0 0.0
    %2867 = vmatpush1.msra.mxu0 0.0
    %2868 = vmatprep.subr.mxu0 0.0
    %2869 = vmatpush1.msra.mxu0 0.0
    %2870 = vmatprep.subr.mxu0 0.0
    %2871 = vmatpush1.msra.mxu0 0.0
    %2872 = vmatprep.subr.mxu0 0.0
    %2873 = vmatpush1.msra.mxu0 0.0
    %2874 = vmatprep.subr.mxu0 0.0
    %2875 = vmatpush1.msra.mxu0 0.0
    %2876 = vmatprep.subr.mxu0 0.0
    %2877 = vmatpush1.msra.mxu0 0.0
    %2878 = vmatprep.subr.mxu0 0.0
    %2879 = vmatpush1.msra.mxu0 0.0
    %2880 = vmatprep.subr.mxu0 0.0
    %2881 = vmatpush1.msra.mxu0 0.0
    %2882 = vmatprep.subr.mxu0 0.0
    %2883 = vmatpush1.msra.mxu0 0.0
    %2884 = vmatprep.subr.mxu0 0.0
    %2885 = vmatpush1.msra.mxu0 0.0
    %2886 = vmatprep.subr.mxu0 0.0
    %2887 = vmatpush1.msra.mxu0 0.0
    %2888 = vmatprep.mubr.f32.mxu0 0.0
    %2889 = vmatmul.mubr.f32.gmra.mrb[0].mxu0 %v2822
    %v2890 = vpop.f32.mrb[0].mxu0
    %v2891 = vadd.f32 0.0, %v2890
    %v2892 = vpop.f32.mrb[0].mxu0
    %2893 = vdwg.mxu0
    %v2894 = vadd.f32 %v2387, %v2891
    %2896 = vrot.lane.b32.xlu0 %v2818, 32
    %v2897 = vpop.permute.xlu0 %2896
    %v2898 = vsel %vm366, %v2897, 0
    %2900 = vmatprep.subr.mxu0 0.0
    %2901 = vmatpush1.msra.mxu0 %v2267
    %2902 = vmatprep.subr.mxu0 0.0
    %2903 = vmatpush1.msra.mxu0 %v2268
    %2904 = vmatprep.subr.mxu0 0.0
    %2905 = vmatpush1.msra.mxu0 %v2269
    %2906 = vmatprep.subr.mxu0 0.0
    %2907 = vmatpush1.msra.mxu0 %v2270
    %2908 = vmatprep.subr.mxu0 0.0
    %2909 = vmatpush1.msra.mxu0 0.0
    %2910 = vmatprep.subr.mxu0 0.0
    %2911 = vmatpush1.msra.mxu0 0.0
    %2912 = vmatprep.subr.mxu0 0.0
    %2913 = vmatpush1.msra.mxu0 0.0
    %2914 = vmatprep.subr.mxu0 0.0
    %2915 = vmatpush1.msra.mxu0 0.0
    %2916 = vmatprep.subr.mxu0 0.0
    %2917 = vmatpush1.msra.mxu0 0.0
    %2918 = vmatprep.subr.mxu0 0.0
    %2919 = vmatpush1.msra.mxu0 0.0
    %2920 = vmatprep.subr.mxu0 0.0
    %2921 = vmatpush1.msra.mxu0 0.0
    %2922 = vmatprep.subr.mxu0 0.0
    %2923 = vmatpush1.msra.mxu0 0.0
    %2924 = vmatprep.subr.mxu0 0.0
    %2925 = vmatpush1.msra.mxu0 0.0
    %2926 = vmatprep.subr.mxu0 0.0
    %2927 = vmatpush1.msra.mxu0 0.0
    %2928 = vmatprep.subr.mxu0 0.0
    %2929 = vmatpush1.msra.mxu0 0.0
    %2930 = vmatprep.subr.mxu0 0.0
    %2931 = vmatpush1.msra.mxu0 0.0
    %2932 = vmatprep.subr.mxu0 0.0
    %2933 = vmatpush1.msra.mxu0 0.0
    %2934 = vmatprep.subr.mxu0 0.0
    %2935 = vmatpush1.msra.mxu0 0.0
    %2936 = vmatprep.subr.mxu0 0.0
    %2937 = vmatpush1.msra.mxu0 0.0
    %2938 = vmatprep.subr.mxu0 0.0
    %2939 = vmatpush1.msra.mxu0 0.0
    %2940 = vmatprep.subr.mxu0 0.0
    %2941 = vmatpush1.msra.mxu0 0.0
    %2942 = vmatprep.subr.mxu0 0.0
    %2943 = vmatpush1.msra.mxu0 0.0
    %2944 = vmatprep.subr.mxu0 0.0
    %2945 = vmatpush1.msra.mxu0 0.0
    %2946 = vmatprep.subr.mxu0 0.0
    %2947 = vmatpush1.msra.mxu0 0.0
    %2948 = vmatprep.subr.mxu0 0.0
    %2949 = vmatpush1.msra.mxu0 0.0
    %2950 = vmatprep.subr.mxu0 0.0
    %2951 = vmatpush1.msra.mxu0 0.0
    %2952 = vmatprep.subr.mxu0 0.0
    %2953 = vmatpush1.msra.mxu0 0.0
    %2954 = vmatprep.subr.mxu0 0.0
    %2955 = vmatpush1.msra.mxu0 0.0
    %2956 = vmatprep.subr.mxu0 0.0
    %2957 = vmatpush1.msra.mxu0 0.0
    %2958 = vmatprep.subr.mxu0 0.0
    %2959 = vmatpush1.msra.mxu0 0.0
    %2960 = vmatprep.subr.mxu0 0.0
    %2961 = vmatpush1.msra.mxu0 0.0
    %2962 = vmatprep.subr.mxu0 0.0
    %2963 = vmatpush1.msra.mxu0 0.0
    %2964 = vmatprep.mubr.f32.mxu0 0.0
    %2965 = vmatmul.mubr.f32.gmra.mrb[0].mxu0 %v2898
    %v2966 = vpop.f32.mrb[0].mxu0
    %v2967 = vadd.f32 0.0, %v2966
    %v2968 = vpop.f32.mrb[0].mxu0
    %2969 = vdwg.mxu0
    %v2970 = vadd.f32 %v2407, %v2967
    %v2971 = vxor.u32 %v2894, 2147483648
    %v2972 = vmul.f32 %v2971, 1.442695
    %v2973 = vpow.pop %v2972
    %v2974 = vadd.f32 %v2973, 1.0
    %v2975 = vrcp.pop %v2974
    %v2976 = vmul.f32 1.0, %v2975
    %v2977 = vtanh.pop %v2894
    %v2978 = vmul.f32 %v2976, %v2791
    %2980 = vrot.lane.b32.xlu0 %v2977, 64
    %v2981 = vpop.permute.xlu0 %2980
    %v2983 = vmul.f32 %v2976, %v2981
    %2985 = vrot.lane.b32.xlu0 %v2983, 32
    %v2986 = vpop.permute.xlu0 %2985
    %v2988 = vadd.f32 %v2978, %v2986
    %v2989 = vtanh.pop %v2988
    %2991 = vrot.lane.b32.xlu0 %v2989, 64
    %v2992 = vpop.permute.xlu0 %2991
    %v2994 = vmul.f32 %v2976, %v2992
    %v2995 = vsel %vm1107, %v2988, %v2791
    %v2996 = vsel %vm1107, %v2994, %v2792
    %v2997 = vxor.u32 %v2970, 2147483648
    %v2998 = vmul.f32 %v2997, 1.442695
    %v2999 = vpow.pop %v2998
    %v3000 = vadd.f32 %v2999, 1.0
    %v3001 = vrcp.pop %v3000
    %v3002 = vmul.f32 1.0, %v3001
    %v3003 = vtanh.pop %v2970
    %v3004 = vmul.f32 %v3002, %v2817
    %3006 = vrot.lane.b32.xlu0 %v3003, 64
    %v3007 = vpop.permute.xlu0 %3006
    %v3009 = vmul.f32 %v3002, %v3007
    %3011 = vrot.lane.b32.xlu0 %v3009, 32
    %v3012 = vpop.permute.xlu0 %3011
    %v3014 = vadd.f32 %v3004, %v3012
    %v3015 = vtanh.pop %v3014
    %3017 = vrot.lane.b32.xlu0 %v3015, 64
    %v3018 = vpop.permute.xlu0 %3017
    %v3020 = vmul.f32 %v3002, %v3018
    %v3021 = vsel %vm1139, %v3014, %v2817
    %v3022 = vsel %vm1139, %v3020, %v2818
    %3024 = vrot.lane.b32.xlu0 %v2996, 32
    %v3025 = vpop.permute.xlu0 %3024
    %v3026 = vsel %vm366, %v3025, 0
    %3028 = vmatprep.subr.mxu0 0.0
    %3029 = vmatpush1.msra.mxu0 %v2263
    %3030 = vmatprep.subr.mxu0 0.0
    %3031 = vmatpush1.msra.mxu0 %v2264
    %3032 = vmatprep.subr.mxu0 0.0
    %3033 = vmatpush1.msra.mxu0 %v2265
    %3034 = vmatprep.subr.mxu0 0.0
    %3035 = vmatpush1.msra.mxu0 %v2266
    %3036 = vmatprep.subr.mxu0 0.0
    %3037 = vmatpush1.msra.mxu0 0.0
    %3038 = vmatprep.subr.mxu0 0.0
    %3039 = vmatpush1.msra.mxu0 0.0
    %3040 = vmatprep.subr.mxu0 0.0
    %3041 = vmatpush1.msra.mxu0 0.0
    %3042 = vmatprep.subr.mxu0 0.0
    %3043 = vmatpush1.msra.mxu0 0.0
    %3044 = vmatprep.subr.mxu0 0.0
    %3045 = vmatpush1.msra.mxu0 0.0
    %3046 = vmatprep.subr.mxu0 0.0
    %3047 = vmatpush1.msra.mxu0 0.0
    %3048 = vmatprep.subr.mxu0 0.0
    %3049 = vmatpush1.msra.mxu0 0.0
    %3050 = vmatprep.subr.mxu0 0.0
    %3051 = vmatpush1.msra.mxu0 0.0
    %3052 = vmatprep.subr.mxu0 0.0
    %3053 = vmatpush1.msra.mxu0 0.0
    %3054 = vmatprep.subr.mxu0 0.0
    %3055 = vmatpush1.msra.mxu0 0.0
    %3056 = vmatprep.subr.mxu0 0.0
    %3057 = vmatpush1.msra.mxu0 0.0
    %3058 = vmatprep.subr.mxu0 0.0
    %3059 = vmatpush1.msra.mxu0 0.0
    %3060 = vmatprep.subr.mxu0 0.0
    %3061 = vmatpush1.msra.mxu0 0.0
    %3062 = vmatprep.subr.mxu0 0.0
    %3063 = vmatpush1.msra.mxu0 0.0
    %3064 = vmatprep.subr.mxu0 0.0
    %3065 = vmatpush1.msra.mxu0 0.0
    %3066 = vmatprep.subr.mxu0 0.0
    %3067 = vmatpush1.msra.mxu0 0.0
    %3068 = vmatprep.subr.mxu0 0.0
    %3069 = vmatpush1.msra.mxu0 0.0
    %3070 = vmatprep.subr.mxu0 0.0
    %3071 = vmatpush1.msra.mxu0 0.0
    %3072 = vmatprep.subr.mxu0 0.0
    %3073 = vmatpush1.msra.mxu0 0.0
    %3074 = vmatprep.subr.mxu0 0.0
    %3075 = vmatpush1.msra.mxu0 0.0
    %3076 = vmatprep.subr.mxu0 0.0
    %3077 = vmatpush1.msra.mxu0 0.0
    %3078 = vmatprep.subr.mxu0 0.0
    %3079 = vmatpush1.msra.mxu0 0.0
    %3080 = vmatprep.subr.mxu0 0.0
    %3081 = vmatpush1.msra.mxu0 0.0
    %3082 = vmatprep.subr.mxu0 0.0
    %3083 = vmatpush1.msra.mxu0 0.0
    %3084 = vmatprep.subr.mxu0 0.0
    %3085 = vmatpush1.msra.mxu0 0.0
    %3086 = vmatprep.subr.mxu0 0.0
    %3087 = vmatpush1.msra.mxu0 0.0
    %3088 = vmatprep.subr.mxu0 0.0
    %3089 = vmatpush1.msra.mxu0 0.0
    %3090 = vmatprep.subr.mxu0 0.0
    %3091 = vmatpush1.msra.mxu0 0.0
    %3092 = vmatprep.mubr.f32.mxu0 0.0
    %3093 = vmatmul.mubr.f32.gmra.mrb[0].mxu0 %v3026
    %v3094 = vpop.f32.mrb[0].mxu0
    %v3095 = vadd.f32 0.0, %v3094
    %v3096 = vpop.f32.mrb[0].mxu0
    %3097 = vdwg.mxu0
    %v3098 = vadd.f32 %v2393, %v3095
    %3100 = vrot.lane.b32.xlu0 %v3022, 32
    %v3101 = vpop.permute.xlu0 %3100
    %v3102 = vsel %vm366, %v3101, 0
    %3104 = vmatprep.subr.mxu0 0.0
    %3105 = vmatpush1.msra.mxu0 %v2267
    %3106 = vmatprep.subr.mxu0 0.0
    %3107 = vmatpush1.msra.mxu0 %v2268
    %3108 = vmatprep.subr.mxu0 0.0
    %3109 = vmatpush1.msra.mxu0 %v2269
    %3110 = vmatprep.subr.mxu0 0.0
    %3111 = vmatpush1.msra.mxu0 %v2270
    %3112 = vmatprep.subr.mxu0 0.0
    %3113 = vmatpush1.msra.mxu0 0.0
    %3114 = vmatprep.subr.mxu0 0.0
    %3115 = vmatpush1.msra.mxu0 0.0
    %3116 = vmatprep.subr.mxu0 0.0
    %3117 = vmatpush1.msra.mxu0 0.0
    %3118 = vmatprep.subr.mxu0 0.0
    %3119 = vmatpush1.msra.mxu0 0.0
    %3120 = vmatprep.subr.mxu0 0.0
    %3121 = vmatpush1.msra.mxu0 0.0
    %3122 = vmatprep.subr.mxu0 0.0
    %3123 = vmatpush1.msra.mxu0 0.0
    %3124 = vmatprep.subr.mxu0 0.0
    %3125 = vmatpush1.msra.mxu0 0.0
    %3126 = vmatprep.subr.mxu0 0.0
    %3127 = vmatpush1.msra.mxu0 0.0
    %3128 = vmatprep.subr.mxu0 0.0
    %3129 = vmatpush1.msra.mxu0 0.0
    %3130 = vmatprep.subr.mxu0 0.0
    %3131 = vmatpush1.msra.mxu0 0.0
    %3132 = vmatprep.subr.mxu0 0.0
    %3133 = vmatpush1.msra.mxu0 0.0
    %3134 = vmatprep.subr.mxu0 0.0
    %3135 = vmatpush1.msra.mxu0 0.0
    %3136 = vmatprep.subr.mxu0 0.0
    %3137 = vmatpush1.msra.mxu0 0.0
    %3138 = vmatprep.subr.mxu0 0.0
    %3139 = vmatpush1.msra.mxu0 0.0
    %3140 = vmatprep.subr.mxu0 0.0
    %3141 = vmatpush1.msra.mxu0 0.0
    %3142 = vmatprep.subr.mxu0 0.0
    %3143 = vmatpush1.msra.mxu0 0.0
    %3144 = vmatprep.subr.mxu0 0.0
    %3145 = vmatpush1.msra.mxu0 0.0
    %3146 = vmatprep.subr.mxu0 0.0
    %3147 = vmatpush1.msra.mxu0 0.0
    %3148 = vmatprep.subr.mxu0 0.0
    %3149 = vmatpush1.msra.mxu0 0.0
    %3150 = vmatprep.subr.mxu0 0.0
    %3151 = vmatpush1.msra.mxu0 0.0
    %3152 = vmatprep.subr.mxu0 0.0
    %3153 = vmatpush1.msra.mxu0 0.0
    %3154 = vmatprep.subr.mxu0 0.0
    %3155 = vmatpush1.msra.mxu0 0.0
    %3156 = vmatprep.subr.mxu0 0.0
    %3157 = vmatpush1.msra.mxu0 0.0
    %3158 = vmatprep.subr.mxu0 0.0
    %3159 = vmatpush1.msra.mxu0 0.0
    %3160 = vmatprep.subr.mxu0 0.0
    %3161 = vmatpush1.msra.mxu0 0.0
    %3162 = vmatprep.subr.mxu0 0.0
    %3163 = vmatpush1.msra.mxu0 0.0
    %3164 = vmatprep.subr.mxu0 0.0
    %3165 = vmatpush1.msra.mxu0 0.0
    %3166 = vmatprep.subr.mxu0 0.0
    %3167 = vmatpush1.msra.mxu0 0.0
    %3168 = vmatprep.mubr.f32.mxu0 0.0
    %3169 = vmatmul.mubr.f32.gmra.mrb[0].mxu0 %v3102
    %v3170 = vpop.f32.mrb[0].mxu0
    %v3171 = vadd.f32 0.0, %v3170
    %v3172 = vpop.f32.mrb[0].mxu0
    %3173 = vdwg.mxu0
    %v3174 = vadd.f32 %v2401, %v3171
    %v3175 = vxor.u32 %v3098, 2147483648
    %v3176 = vmul.f32 %v3175, 1.442695
    %v3177 = vpow.pop %v3176
    %v3178 = vadd.f32 %v3177, 1.0
    %v3179 = vrcp.pop %v3178
    %v3180 = vmul.f32 1.0, %v3179
    %v3181 = vtanh.pop %v3098
    %v3182 = vmul.f32 %v3180, %v2995
    %3184 = vrot.lane.b32.xlu0 %v3181, 64
    %v3185 = vpop.permute.xlu0 %3184
    %v3187 = vmul.f32 %v3180, %v3185
    %3189 = vrot.lane.b32.xlu0 %v3187, 32
    %v3190 = vpop.permute.xlu0 %3189
    %v3192 = vadd.f32 %v3182, %v3190
    %v3193 = vtanh.pop %v3192
    %3195 = vrot.lane.b32.xlu0 %v3193, 64
    %v3196 = vpop.permute.xlu0 %3195
    %v3198 = vmul.f32 %v3180, %v3196
    %v3199 = vsel %vm1323, %v3192, %v2995
    %v3200 = vsel %vm1323, %v3198, %v2996
    %v3201 = vxor.u32 %v3174, 2147483648
    %v3202 = vmul.f32 %v3201, 1.442695
    %v3203 = vpow.pop %v3202
    %v3204 = vadd.f32 %v3203, 1.0
    %v3205 = vrcp.pop %v3204
    %v3206 = vmul.f32 1.0, %v3205
    %v3207 = vtanh.pop %v3174
    %v3208 = vmul.f32 %v3206, %v3021
    %3210 = vrot.lane.b32.xlu0 %v3207, 64
    %v3211 = vpop.permute.xlu0 %3210
    %v3213 = vmul.f32 %v3206, %v3211
    %3215 = vrot.lane.b32.xlu0 %v3213, 32
    %v3216 = vpop.permute.xlu0 %3215
    %v3218 = vadd.f32 %v3208, %v3216
    %v3219 = vtanh.pop %v3218
    %3221 = vrot.lane.b32.xlu0 %v3219, 64
    %v3222 = vpop.permute.xlu0 %3221
    %v3224 = vmul.f32 %v3206, %v3222
    %v3225 = vsel %vm1355, %v3218, %v3021
    %v3226 = vsel %vm1355, %v3224, %v3022
    %3228 = vrot.lane.b32.xlu0 %v3200, 32
    %v3229 = vpop.permute.xlu0 %3228
    %v3230 = vsel %vm366, %v3229, 0
    %3232 = vmatprep.subr.mxu0 0.0
    %3233 = vmatpush1.msra.mxu0 %v2263
    %3234 = vmatprep.subr.mxu0 0.0
    %3235 = vmatpush1.msra.mxu0 %v2264
    %3236 = vmatprep.subr.mxu0 0.0
    %3237 = vmatpush1.msra.mxu0 %v2265
    %3238 = vmatprep.subr.mxu0 0.0
    %3239 = vmatpush1.msra.mxu0 %v2266
    %3240 = vmatprep.subr.mxu0 0.0
    %3241 = vmatpush1.msra.mxu0 0.0
    %3242 = vmatprep.subr.mxu0 0.0
    %3243 = vmatpush1.msra.mxu0 0.0
    %3244 = vmatprep.subr.mxu0 0.0
    %3245 = vmatpush1.msra.mxu0 0.0
    %3246 = vmatprep.subr.mxu0 0.0
    %3247 = vmatpush1.msra.mxu0 0.0
    %3248 = vmatprep.subr.mxu0 0.0
    %3249 = vmatpush1.msra.mxu0 0.0
    %3250 = vmatprep.subr.mxu0 0.0
    %3251 = vmatpush1.msra.mxu0 0.0
    %3252 = vmatprep.subr.mxu0 0.0
    %3253 = vmatpush1.msra.mxu0 0.0
    %3254 = vmatprep.subr.mxu0 0.0
    %3255 = vmatpush1.msra.mxu0 0.0
    %3256 = vmatprep.subr.mxu0 0.0
    %3257 = vmatpush1.msra.mxu0 0.0
    %3258 = vmatprep.subr.mxu0 0.0
    %3259 = vmatpush1.msra.mxu0 0.0
    %3260 = vmatprep.subr.mxu0 0.0
    %3261 = vmatpush1.msra.mxu0 0.0
    %3262 = vmatprep.subr.mxu0 0.0
    %3263 = vmatpush1.msra.mxu0 0.0
    %3264 = vmatprep.subr.mxu0 0.0
    %3265 = vmatpush1.msra.mxu0 0.0
    %3266 = vmatprep.subr.mxu0 0.0
    %3267 = vmatpush1.msra.mxu0 0.0
    %3268 = vmatprep.subr.mxu0 0.0
    %3269 = vmatpush1.msra.mxu0 0.0
    %3270 = vmatprep.subr.mxu0 0.0
    %3271 = vmatpush1.msra.mxu0 0.0
    %3272 = vmatprep.subr.mxu0 0.0
    %3273 = vmatpush1.msra.mxu0 0.0
    %3274 = vmatprep.subr.mxu0 0.0
    %3275 = vmatpush1.msra.mxu0 0.0
    %3276 = vmatprep.subr.mxu0 0.0
    %3277 = vmatpush1.msra.mxu0 0.0
    %3278 = vmatprep.subr.mxu0 0.0
    %3279 = vmatpush1.msra.mxu0 0.0
    %3280 = vmatprep.subr.mxu0 0.0
    %3281 = vmatpush1.msra.mxu0 0.0
    %3282 = vmatprep.subr.mxu0 0.0
    %3283 = vmatpush1.msra.mxu0 0.0
    %3284 = vmatprep.subr.mxu0 0.0
    %3285 = vmatpush1.msra.mxu0 0.0
    %3286 = vmatprep.subr.mxu0 0.0
    %3287 = vmatpush1.msra.mxu0 0.0
    %3288 = vmatprep.subr.mxu0 0.0
    %3289 = vmatpush1.msra.mxu0 0.0
    %3290 = vmatprep.subr.mxu0 0.0
    %3291 = vmatpush1.msra.mxu0 0.0
    %3292 = vmatprep.subr.mxu0 0.0
    %3293 = vmatpush1.msra.mxu0 0.0
    %3294 = vmatprep.subr.mxu0 0.0
    %3295 = vmatpush1.msra.mxu0 0.0
    %3296 = vmatprep.mubr.f32.mxu0 0.0
    %3297 = vmatmul.mubr.f32.gmra.mrb[0].mxu0 %v3230
    %v3298 = vpop.f32.mrb[0].mxu0
    %v3299 = vadd.f32 0.0, %v3298
    %v3300 = vpop.f32.mrb[0].mxu0
    %3301 = vdwg.mxu0
    %v3302 = vadd.f32 %v2399, %v3299
    %3304 = vrot.lane.b32.xlu0 %v3226, 32
    %v3305 = vpop.permute.xlu0 %3304
    %v3306 = vsel %vm366, %v3305, 0
    %3308 = vmatprep.subr.mxu0 0.0
    %3309 = vmatpush1.msra.mxu0 %v2267
    %3310 = vmatprep.subr.mxu0 0.0
    %3311 = vmatpush1.msra.mxu0 %v2268
    %3312 = vmatprep.subr.mxu0 0.0
    %3313 = vmatpush1.msra.mxu0 %v2269
    %3314 = vmatprep.subr.mxu0 0.0
    %3315 = vmatpush1.msra.mxu0 %v2270
    %3316 = vmatprep.subr.mxu0 0.0
    %3317 = vmatpush1.msra.mxu0 0.0
    %3318 = vmatprep.subr.mxu0 0.0
    %3319 = vmatpush1.msra.mxu0 0.0
    %3320 = vmatprep.subr.mxu0 0.0
    %3321 = vmatpush1.msra.mxu0 0.0
    %3322 = vmatprep.subr.mxu0 0.0
    %3323 = vmatpush1.msra.mxu0 0.0
    %3324 = vmatprep.subr.mxu0 0.0
    %3325 = vmatpush1.msra.mxu0 0.0
    %3326 = vmatprep.subr.mxu0 0.0
    %3327 = vmatpush1.msra.mxu0 0.0
    %3328 = vmatprep.subr.mxu0 0.0
    %3329 = vmatpush1.msra.mxu0 0.0
    %3330 = vmatprep.subr.mxu0 0.0
    %3331 = vmatpush1.msra.mxu0 0.0
    %3332 = vmatprep.subr.mxu0 0.0
    %3333 = vmatpush1.msra.mxu0 0.0
    %3334 = vmatprep.subr.mxu0 0.0
    %3335 = vmatpush1.msra.mxu0 0.0
    %3336 = vmatprep.subr.mxu0 0.0
    %3337 = vmatpush1.msra.mxu0 0.0
    %3338 = vmatprep.subr.mxu0 0.0
    %3339 = vmatpush1.msra.mxu0 0.0
    %3340 = vmatprep.subr.mxu0 0.0
    %3341 = vmatpush1.msra.mxu0 0.0
    %3342 = vmatprep.subr.mxu0 0.0
    %3343 = vmatpush1.msra.mxu0 0.0
    %3344 = vmatprep.subr.mxu0 0.0
    %3345 = vmatpush1.msra.mxu0 0.0
    %3346 = vmatprep.subr.mxu0 0.0
    %3347 = vmatpush1.msra.mxu0 0.0
    %3348 = vmatprep.subr.mxu0 0.0
    %3349 = vmatpush1.msra.mxu0 0.0
    %3350 = vmatprep.subr.mxu0 0.0
    %3351 = vmatpush1.msra.mxu0 0.0
    %3352 = vmatprep.subr.mxu0 0.0
    %3353 = vmatpush1.msra.mxu0 0.0
    %3354 = vmatprep.subr.mxu0 0.0
    %3355 = vmatpush1.msra.mxu0 0.0
    %3356 = vmatprep.subr.mxu0 0.0
    %3357 = vmatpush1.msra.mxu0 0.0
    %3358 = vmatprep.subr.mxu0 0.0
    %3359 = vmatpush1.msra.mxu0 0.0
    %3360 = vmatprep.subr.mxu0 0.0
    %3361 = vmatpush1.msra.mxu0 0.0
    %3362 = vmatprep.subr.mxu0 0.0
    %3363 = vmatpush1.msra.mxu0 0.0
    %3364 = vmatprep.subr.mxu0 0.0
    %3365 = vmatpush1.msra.mxu0 0.0
    %3366 = vmatprep.subr.mxu0 0.0
    %3367 = vmatpush1.msra.mxu0 0.0
    %3368 = vmatprep.subr.mxu0 0.0
    %3369 = vmatpush1.msra.mxu0 0.0
    %3370 = vmatprep.subr.mxu0 0.0
    %3371 = vmatpush1.msra.mxu0 0.0
    %3372 = vmatprep.mubr.f32.mxu0 0.0
    %3373 = vmatmul.mubr.f32.gmra.mrb[0].mxu0 %v3306
    %v3374 = vpop.f32.mrb[0].mxu0
    %v3375 = vadd.f32 0.0, %v3374
    %v3376 = vpop.f32.mrb[0].mxu0
    %3377 = vdwg.mxu0
    %v3378 = vadd.f32 %v2395, %v3375
    %v3379 = vxor.u32 %v3302, 2147483648
    %v3380 = vmul.f32 %v3379, 1.442695
    %v3381 = vpow.pop %v3380
    %v3382 = vadd.f32 %v3381, 1.0
    %v3383 = vrcp.pop %v3382
    %v3384 = vmul.f32 1.0, %v3383
    %v3385 = vtanh.pop %v3302
    %v3386 = vmul.f32 %v3384, %v3199
    %3388 = vrot.lane.b32.xlu0 %v3385, 64
    %v3389 = vpop.permute.xlu0 %3388
    %v3391 = vmul.f32 %v3384, %v3389
    %3393 = vrot.lane.b32.xlu0 %v3391, 32
    %v3394 = vpop.permute.xlu0 %3393
    %v3396 = vadd.f32 %v3386, %v3394
    %v3397 = vtanh.pop %v3396
    %3399 = vrot.lane.b32.xlu0 %v3397, 64
    %v3400 = vpop.permute.xlu0 %3399
    %v3402 = vmul.f32 %v3384, %v3400
    %v3403 = vsel %vm1355, %v3396, %v3199
    %v3404 = vsel %vm1355, %v3402, %v3200
    %v3405 = vxor.u32 %v3378, 2147483648
    %v3406 = vmul.f32 %v3405, 1.442695
    %v3407 = vpow.pop %v3406
    %v3408 = vadd.f32 %v3407, 1.0
    %v3409 = vrcp.pop %v3408
    %v3410 = vmul.f32 1.0, %v3409
    %v3411 = vtanh.pop %v3378
    %v3412 = vmul.f32 %v3410, %v3225
    %3414 = vrot.lane.b32.xlu0 %v3411, 64
    %v3415 = vpop.permute.xlu0 %3414
    %v3417 = vmul.f32 %v3410, %v3415
    %3419 = vrot.lane.b32.xlu0 %v3417, 32
    %v3420 = vpop.permute.xlu0 %3419
    %v3422 = vadd.f32 %v3412, %v3420
    %v3423 = vtanh.pop %v3422
    %3425 = vrot.lane.b32.xlu0 %v3423, 64
    %v3426 = vpop.permute.xlu0 %3425
    %v3428 = vmul.f32 %v3410, %v3426
    %v3429 = vsel %vm1323, %v3422, %v3225
    %v3430 = vsel %vm1323, %v3428, %v3226
    %3432 = vrot.lane.b32.xlu0 %v3404, 32
    %v3433 = vpop.permute.xlu0 %3432
    %v3434 = vsel %vm366, %v3433, 0
    %3436 = vmatprep.subr.mxu0 0.0
    %3437 = vmatpush1.msra.mxu0 %v2263
    %3438 = vmatprep.subr.mxu0 0.0
    %3439 = vmatpush1.msra.mxu0 %v2264
    %3440 = vmatprep.subr.mxu0 0.0
    %3441 = vmatpush1.msra.mxu0 %v2265
    %3442 = vmatprep.subr.mxu0 0.0
    %3443 = vmatpush1.msra.mxu0 %v2266
    %3444 = vmatprep.subr.mxu0 0.0
    %3445 = vmatpush1.msra.mxu0 0.0
    %3446 = vmatprep.subr.mxu0 0.0
    %3447 = vmatpush1.msra.mxu0 0.0
    %3448 = vmatprep.subr.mxu0 0.0
    %3449 = vmatpush1.msra.mxu0 0.0
    %3450 = vmatprep.subr.mxu0 0.0
    %3451 = vmatpush1.msra.mxu0 0.0
    %3452 = vmatprep.subr.mxu0 0.0
    %3453 = vmatpush1.msra.mxu0 0.0
    %3454 = vmatprep.subr.mxu0 0.0
    %3455 = vmatpush1.msra.mxu0 0.0
    %3456 = vmatprep.subr.mxu0 0.0
    %3457 = vmatpush1.msra.mxu0 0.0
    %3458 = vmatprep.subr.mxu0 0.0
    %3459 = vmatpush1.msra.mxu0 0.0
    %3460 = vmatprep.subr.mxu0 0.0
    %3461 = vmatpush1.msra.mxu0 0.0
    %3462 = vmatprep.subr.mxu0 0.0
    %3463 = vmatpush1.msra.mxu0 0.0
    %3464 = vmatprep.subr.mxu0 0.0
    %3465 = vmatpush1.msra.mxu0 0.0
    %3466 = vmatprep.subr.mxu0 0.0
    %3467 = vmatpush1.msra.mxu0 0.0
    %3468 = vmatprep.subr.mxu0 0.0
    %3469 = vmatpush1.msra.mxu0 0.0
    %3470 = vmatprep.subr.mxu0 0.0
    %3471 = vmatpush1.msra.mxu0 0.0
    %3472 = vmatprep.subr.mxu0 0.0
    %3473 = vmatpush1.msra.mxu0 0.0
    %3474 = vmatprep.subr.mxu0 0.0
    %3475 = vmatpush1.msra.mxu0 0.0
    %3476 = vmatprep.subr.mxu0 0.0
    %3477 = vmatpush1.msra.mxu0 0.0
    %3478 = vmatprep.subr.mxu0 0.0
    %3479 = vmatpush1.msra.mxu0 0.0
    %3480 = vmatprep.subr.mxu0 0.0
    %3481 = vmatpush1.msra.mxu0 0.0
    %3482 = vmatprep.subr.mxu0 0.0
    %3483 = vmatpush1.msra.mxu0 0.0
    %3484 = vmatprep.subr.mxu0 0.0
    %3485 = vmatpush1.msra.mxu0 0.0
    %3486 = vmatprep.subr.mxu0 0.0
    %3487 = vmatpush1.msra.mxu0 0.0
    %3488 = vmatprep.subr.mxu0 0.0
    %3489 = vmatpush1.msra.mxu0 0.0
    %3490 = vmatprep.subr.mxu0 0.0
    %3491 = vmatpush1.msra.mxu0 0.0
    %3492 = vmatprep.subr.mxu0 0.0
    %3493 = vmatpush1.msra.mxu0 0.0
    %3494 = vmatprep.subr.mxu0 0.0
    %3495 = vmatpush1.msra.mxu0 0.0
    %3496 = vmatprep.subr.mxu0 0.0
    %3497 = vmatpush1.msra.mxu0 0.0
    %3498 = vmatprep.subr.mxu0 0.0
    %3499 = vmatpush1.msra.mxu0 0.0
    %3500 = vmatprep.mubr.f32.mxu0 0.0
    %3501 = vmatmul.mubr.f32.gmra.mrb[0].mxu0 %v3434
    %v3502 = vpop.f32.mrb[0].mxu0
    %v3503 = vadd.f32 0.0, %v3502
    %v3504 = vpop.f32.mrb[0].mxu0
    %3505 = vdwg.mxu0
    %v3506 = vadd.f32 %v2405, %v3503
    %3508 = vrot.lane.b32.xlu0 %v3430, 32
    %v3509 = vpop.permute.xlu0 %3508
    %v3510 = vsel %vm366, %v3509, 0
    %3512 = vmatprep.subr.mxu0 0.0
    %3513 = vmatpush1.msra.mxu0 %v2267
    %3514 = vmatprep.subr.mxu0 0.0
    %3515 = vmatpush1.msra.mxu0 %v2268
    %3516 = vmatprep.subr.mxu0 0.0
    %3517 = vmatpush1.msra.mxu0 %v2269
    %3518 = vmatprep.subr.mxu0 0.0
    %3519 = vmatpush1.msra.mxu0 %v2270
    %3520 = vmatprep.subr.mxu0 0.0
    %3521 = vmatpush1.msra.mxu0 0.0
    %3522 = vmatprep.subr.mxu0 0.0
    %3523 = vmatpush1.msra.mxu0 0.0
    %3524 = vmatprep.subr.mxu0 0.0
    %3525 = vmatpush1.msra.mxu0 0.0
    %3526 = vmatprep.subr.mxu0 0.0
    %3527 = vmatpush1.msra.mxu0 0.0
    %3528 = vmatprep.subr.mxu0 0.0
    %3529 = vmatpush1.msra.mxu0 0.0
    %3530 = vmatprep.subr.mxu0 0.0
    %3531 = vmatpush1.msra.mxu0 0.0
    %3532 = vmatprep.subr.mxu0 0.0
    %3533 = vmatpush1.msra.mxu0 0.0
    %3534 = vmatprep.subr.mxu0 0.0
    %3535 = vmatpush1.msra.mxu0 0.0
    %3536 = vmatprep.subr.mxu0 0.0
    %3537 = vmatpush1.msra.mxu0 0.0
    %3538 = vmatprep.subr.mxu0 0.0
    %3539 = vmatpush1.msra.mxu0 0.0
    %3540 = vmatprep.subr.mxu0 0.0
    %3541 = vmatpush1.msra.mxu0 0.0
    %3542 = vmatprep.subr.mxu0 0.0
    %3543 = vmatpush1.msra.mxu0 0.0
    %3544 = vmatprep.subr.mxu0 0.0
    %3545 = vmatpush1.msra.mxu0 0.0
    %3546 = vmatprep.subr.mxu0 0.0
    %3547 = vmatpush1.msra.mxu0 0.0
    %3548 = vmatprep.subr.mxu0 0.0
    %3549 = vmatpush1.msra.mxu0 0.0
    %3550 = vmatprep.subr.mxu0 0.0
    %3551 = vmatpush1.msra.mxu0 0.0
    %3552 = vmatprep.subr.mxu0 0.0
    %3553 = vmatpush1.msra.mxu0 0.0
    %3554 = vmatprep.subr.mxu0 0.0
    %3555 = vmatpush1.msra.mxu0 0.0
    %3556 = vmatprep.subr.mxu0 0.0
    %3557 = vmatpush1.msra.mxu0 0.0
    %3558 = vmatprep.subr.mxu0 0.0
    %3559 = vmatpush1.msra.mxu0 0.0
    %3560 = vmatprep.subr.mxu0 0.0
    %3561 = vmatpush1.msra.mxu0 0.0
    %3562 = vmatprep.subr.mxu0 0.0
    %3563 = vmatpush1.msra.mxu0 0.0
    %3564 = vmatprep.subr.mxu0 0.0
    %3565 = vmatpush1.msra.mxu0 0.0
    %3566 = vmatprep.subr.mxu0 0.0
    %3567 = vmatpush1.msra.mxu0 0.0
    %3568 = vmatprep.subr.mxu0 0.0
    %3569 = vmatpush1.msra.mxu0 0.0
    %3570 = vmatprep.subr.mxu0 0.0
    %3571 = vmatpush1.msra.mxu0 0.0
    %3572 = vmatprep.subr.mxu0 0.0
    %3573 = vmatpush1.msra.mxu0 0.0
    %3574 = vmatprep.subr.mxu0 0.0
    %3575 = vmatpush1.msra.mxu0 0.0
    %3576 = vmatprep.mubr.f32.mxu0 0.0
    %3577 = vmatmul.mubr.f32.gmra.mrb[0].mxu0 %v3510
    %v3578 = vpop.f32.mrb[0].mxu0
    %v3579 = vadd.f32 0.0, %v3578
    %v3580 = vpop.f32.mrb[0].mxu0
    %3581 = vdwg.mxu0
    %v3582 = vadd.f32 %v2389, %v3579
    %v3583 = vxor.u32 %v3506, 2147483648
    %v3584 = vmul.f32 %v3583, 1.442695
    %v3585 = vpow.pop %v3584
    %v3586 = vadd.f32 %v3585, 1.0
    %v3587 = vrcp.pop %v3586
    %v3588 = vmul.f32 1.0, %v3587
    %v3589 = vtanh.pop %v3506
    %v3590 = vmul.f32 %v3588, %v3403
    %3592 = vrot.lane.b32.xlu0 %v3589, 64
    %v3593 = vpop.permute.xlu0 %3592
    %v3595 = vmul.f32 %v3588, %v3593
    %3597 = vrot.lane.b32.xlu0 %v3595, 32
    %v3598 = vpop.permute.xlu0 %3597
    %v3600 = vadd.f32 %v3590, %v3598
    %v3601 = vtanh.pop %v3600
    %3603 = vrot.lane.b32.xlu0 %v3601, 64
    %v3604 = vpop.permute.xlu0 %3603
    %v3606 = vmul.f32 %v3588, %v3604
    %v3607 = vsel %vm1139, %v3600, %v3403
    %v3608 = vsel %vm1139, %v3606, %v3404
    %v3609 = vxor.u32 %v3582, 2147483648
    %v3610 = vmul.f32 %v3609, 1.442695
    %v3611 = vpow.pop %v3610
    %v3612 = vadd.f32 %v3611, 1.0
    %v3613 = vrcp.pop %v3612
    %v3614 = vmul.f32 1.0, %v3613
    %v3615 = vtanh.pop %v3582
    %v3616 = vmul.f32 %v3614, %v3429
    %3618 = vrot.lane.b32.xlu0 %v3615, 64
    %v3619 = vpop.permute.xlu0 %3618
    %v3621 = vmul.f32 %v3614, %v3619
    %3623 = vrot.lane.b32.xlu0 %v3621, 32
    %v3624 = vpop.permute.xlu0 %3623
    %v3626 = vadd.f32 %v3616, %v3624
    %v3627 = vtanh.pop %v3626
    %3629 = vrot.lane.b32.xlu0 %v3627, 64
    %v3630 = vpop.permute.xlu0 %3629
    %v3632 = vmul.f32 %v3614, %v3630
    %v3633 = vsel %vm1107, %v3626, %v3429
    %v3634 = vsel %vm1107, %v3632, %v3430
    %3636 = vrot.lane.b32.xlu0 %v3608, 32
    %v3637 = vpop.permute.xlu0 %3636
    %v3638 = vsel %vm366, %v3637, 0
    %3640 = vmatprep.subr.mxu0 0.0
    %3641 = vmatpush1.msra.mxu0 %v2263
    %3642 = vmatprep.subr.mxu0 0.0
    %3643 = vmatpush1.msra.mxu0 %v2264
    %3644 = vmatprep.subr.mxu0 0.0
    %3645 = vmatpush1.msra.mxu0 %v2265
    %3646 = vmatprep.subr.mxu0 0.0
    %3647 = vmatpush1.msra.mxu0 %v2266
    %3648 = vmatprep.subr.mxu0 0.0
    %3649 = vmatpush1.msra.mxu0 0.0
    %3650 = vmatprep.subr.mxu0 0.0
    %3651 = vmatpush1.msra.mxu0 0.0
    %3652 = vmatprep.subr.mxu0 0.0
    %3653 = vmatpush1.msra.mxu0 0.0
    %3654 = vmatprep.subr.mxu0 0.0
    %3655 = vmatpush1.msra.mxu0 0.0
    %3656 = vmatprep.subr.mxu0 0.0
    %3657 = vmatpush1.msra.mxu0 0.0
    %3658 = vmatprep.subr.mxu0 0.0
    %3659 = vmatpush1.msra.mxu0 0.0
    %3660 = vmatprep.subr.mxu0 0.0
    %3661 = vmatpush1.msra.mxu0 0.0
    %3662 = vmatprep.subr.mxu0 0.0
    %3663 = vmatpush1.msra.mxu0 0.0
    %3664 = vmatprep.subr.mxu0 0.0
    %3665 = vmatpush1.msra.mxu0 0.0
    %3666 = vmatprep.subr.mxu0 0.0
    %3667 = vmatpush1.msra.mxu0 0.0
    %3668 = vmatprep.subr.mxu0 0.0
    %3669 = vmatpush1.msra.mxu0 0.0
    %3670 = vmatprep.subr.mxu0 0.0
    %3671 = vmatpush1.msra.mxu0 0.0
    %3672 = vmatprep.subr.mxu0 0.0
    %3673 = vmatpush1.msra.mxu0 0.0
    %3674 = vmatprep.subr.mxu0 0.0
    %3675 = vmatpush1.msra.mxu0 0.0
    %3676 = vmatprep.subr.mxu0 0.0
    %3677 = vmatpush1.msra.mxu0 0.0
    %3678 = vmatprep.subr.mxu0 0.0
    %3679 = vmatpush1.msra.mxu0 0.0
    %3680 = vmatprep.subr.mxu0 0.0
    %3681 = vmatpush1.msra.mxu0 0.0
    %3682 = vmatprep.subr.mxu0 0.0
    %3683 = vmatpush1.msra.mxu0 0.0
    %3684 = vmatprep.subr.mxu0 0.0
    %3685 = vmatpush1.msra.mxu0 0.0
    %3686 = vmatprep.subr.mxu0 0.0
    %3687 = vmatpush1.msra.mxu0 0.0
    %3688 = vmatprep.subr.mxu0 0.0
    %3689 = vmatpush1.msra.mxu0 0.0
    %3690 = vmatprep.subr.mxu0 0.0
    %3691 = vmatpush1.msra.mxu0 0.0
    %3692 = vmatprep.subr.mxu0 0.0
    %3693 = vmatpush1.msra.mxu0 0.0
    %3694 = vmatprep.subr.mxu0 0.0
    %3695 = vmatpush1.msra.mxu0 0.0
    %3696 = vmatprep.subr.mxu0 0.0
    %3697 = vmatpush1.msra.mxu0 0.0
    %3698 = vmatprep.subr.mxu0 0.0
    %3699 = vmatpush1.msra.mxu0 0.0
    %3700 = vmatprep.subr.mxu0 0.0
    %3701 = vmatpush1.msra.mxu0 0.0
    %3702 = vmatprep.subr.mxu0 0.0
    %3703 = vmatpush1.msra.mxu0 0.0
    %3704 = vmatprep.mubr.f32.mxu0 0.0
    %3705 = vmatmul.mubr.f32.gmra.mrb[0].mxu0 %v3638
    %v3706 = vpop.f32.mrb[0].mxu0
    %v3707 = vadd.f32 0.0, %v3706
    %v3708 = vpop.f32.mrb[0].mxu0
    %3709 = vdwg.mxu0
    %v3710 = vadd.f32 %v2411, %v3707
    %3712 = vrot.lane.b32.xlu0 %v3634, 32
    %v3713 = vpop.permute.xlu0 %3712
    %v3714 = vsel %vm366, %v3713, 0
    %3716 = vmatprep.subr.mxu0 0.0
    %3717 = vmatpush1.msra.mxu0 %v2267
    %3718 = vmatprep.subr.mxu0 0.0
    %3719 = vmatpush1.msra.mxu0 %v2268
    %3720 = vmatprep.subr.mxu0 0.0
    %3721 = vmatpush1.msra.mxu0 %v2269
    %3722 = vmatprep.subr.mxu0 0.0
    %3723 = vmatpush1.msra.mxu0 %v2270
    %3724 = vmatprep.subr.mxu0 0.0
    %3725 = vmatpush1.msra.mxu0 0.0
    %3726 = vmatprep.subr.mxu0 0.0
    %3727 = vmatpush1.msra.mxu0 0.0
    %3728 = vmatprep.subr.mxu0 0.0
    %3729 = vmatpush1.msra.mxu0 0.0
    %3730 = vmatprep.subr.mxu0 0.0
    %3731 = vmatpush1.msra.mxu0 0.0
    %3732 = vmatprep.subr.mxu0 0.0
    %3733 = vmatpush1.msra.mxu0 0.0
    %3734 = vmatprep.subr.mxu0 0.0
    %3735 = vmatpush1.msra.mxu0 0.0
    %3736 = vmatprep.subr.mxu0 0.0
    %3737 = vmatpush1.msra.mxu0 0.0
    %3738 = vmatprep.subr.mxu0 0.0
    %3739 = vmatpush1.msra.mxu0 0.0
    %3740 = vmatprep.subr.mxu0 0.0
    %3741 = vmatpush1.msra.mxu0 0.0
    %3742 = vmatprep.subr.mxu0 0.0
    %3743 = vmatpush1.msra.mxu0 0.0
    %3744 = vmatprep.subr.mxu0 0.0
    %3745 = vmatpush1.msra.mxu0 0.0
    %3746 = vmatprep.subr.mxu0 0.0
    %3747 = vmatpush1.msra.mxu0 0.0
    %3748 = vmatprep.subr.mxu0 0.0
    %3749 = vmatpush1.msra.mxu0 0.0
    %3750 = vmatprep.subr.mxu0 0.0
    %3751 = vmatpush1.msra.mxu0 0.0
    %3752 = vmatprep.subr.mxu0 0.0
    %3753 = vmatpush1.msra.mxu0 0.0
    %3754 = vmatprep.subr.mxu0 0.0
    %3755 = vmatpush1.msra.mxu0 0.0
    %3756 = vmatprep.subr.mxu0 0.0
    %3757 = vmatpush1.msra.mxu0 0.0
    %3758 = vmatprep.subr.mxu0 0.0
    %3759 = vmatpush1.msra.mxu0 0.0
    %3760 = vmatprep.subr.mxu0 0.0
    %3761 = vmatpush1.msra.mxu0 0.0
    %3762 = vmatprep.subr.mxu0 0.0
    %3763 = vmatpush1.msra.mxu0 0.0
    %3764 = vmatprep.subr.mxu0 0.0
    %3765 = vmatpush1.msra.mxu0 0.0
    %3766 = vmatprep.subr.mxu0 0.0
    %3767 = vmatpush1.msra.mxu0 0.0
    %3768 = vmatprep.subr.mxu0 0.0
    %3769 = vmatpush1.msra.mxu0 0.0
    %3770 = vmatprep.subr.mxu0 0.0
    %3771 = vmatpush1.msra.mxu0 0.0
    %3772 = vmatprep.subr.mxu0 0.0
    %3773 = vmatpush1.msra.mxu0 0.0
    %3774 = vmatprep.subr.mxu0 0.0
    %3775 = vmatpush1.msra.mxu0 0.0
    %3776 = vmatprep.subr.mxu0 0.0
    %3777 = vmatpush1.msra.mxu0 0.0
    %3778 = vmatprep.subr.mxu0 0.0
    %3779 = vmatpush1.msra.mxu0 0.0
    %3780 = vmatprep.mubr.f32.mxu0 0.0
    %3781 = vmatmul.mubr.f32.gmra.mrb[0].mxu0 %v3714
    %v3782 = vpop.f32.mrb[0].mxu0
    %v3783 = vadd.f32 0.0, %v3782
    %v3784 = vpop.f32.mrb[0].mxu0
    %3785 = vdwg.mxu0
    %v3786 = vadd.f32 %v2383, %v3783
    %v3787 = vxor.u32 %v3710, 2147483648
    %v3788 = vmul.f32 %v3787, 1.442695
    %v3789 = vpow.pop %v3788
    %v3790 = vadd.f32 %v3789, 1.0
    %v3791 = vrcp.pop %v3790
    %v3792 = vmul.f32 1.0, %v3791
    %v3793 = vtanh.pop %v3710
    %v3794 = vmul.f32 %v3792, %v3607
    %3796 = vrot.lane.b32.xlu0 %v3793, 64
    %v3797 = vpop.permute.xlu0 %3796
    %v3799 = vmul.f32 %v3792, %v3797
    %3801 = vrot.lane.b32.xlu0 %v3799, 32
    %v3802 = vpop.permute.xlu0 %3801
    %v3804 = vadd.f32 %v3794, %v3802
    %v3805 = vtanh.pop %v3804
    %3807 = vrot.lane.b32.xlu0 %v3805, 64
    %v3808 = vpop.permute.xlu0 %3807
    %v3810 = vmul.f32 %v3792, %v3808
    %v3811 = vsel %vm923, %v3804, %v3607
    %v3812 = vsel %vm923, %v3810, %v3608
    %v3813 = vxor.u32 %v3786, 2147483648
    %v3814 = vmul.f32 %v3813, 1.442695
    %v3815 = vpow.pop %v3814
    %v3816 = vadd.f32 %v3815, 1.0
    %v3817 = vrcp.pop %v3816
    %v3818 = vmul.f32 1.0, %v3817
    %v3819 = vtanh.pop %v3786
    %v3820 = vmul.f32 %v3818, %v3633
    %3822 = vrot.lane.b32.xlu0 %v3819, 64
    %v3823 = vpop.permute.xlu0 %3822
    %v3825 = vmul.f32 %v3818, %v3823
    %3827 = vrot.lane.b32.xlu0 %v3825, 32
    %v3828 = vpop.permute.xlu0 %3827
    %v3830 = vadd.f32 %v3820, %v3828
    %v3831 = vtanh.pop %v3830
    %3833 = vrot.lane.b32.xlu0 %v3831, 64
    %v3834 = vpop.permute.xlu0 %3833
    %v3836 = vmul.f32 %v3818, %v3834
    %v3837 = vsel %vm891, %v3830, %v3633
    %v3838 = vsel %vm891, %v3836, %v3634
    %3840 = vrot.lane.b32.xlu0 %v3812, 32
    %v3841 = vpop.permute.xlu0 %3840
    %v3842 = vsel %vm366, %v3841, 0
    %3844 = vmatprep.subr.mxu0 0.0
    %3845 = vmatpush1.msra.mxu0 %v2263
    %3846 = vmatprep.subr.mxu0 0.0
    %3847 = vmatpush1.msra.mxu0 %v2264
    %3848 = vmatprep.subr.mxu0 0.0
    %3849 = vmatpush1.msra.mxu0 %v2265
    %3850 = vmatprep.subr.mxu0 0.0
    %3851 = vmatpush1.msra.mxu0 %v2266
    %3852 = vmatprep.subr.mxu0 0.0
    %3853 = vmatpush1.msra.mxu0 0.0
    %3854 = vmatprep.subr.mxu0 0.0
    %3855 = vmatpush1.msra.mxu0 0.0
    %3856 = vmatprep.subr.mxu0 0.0
    %3857 = vmatpush1.msra.mxu0 0.0
    %3858 = vmatprep.subr.mxu0 0.0
    %3859 = vmatpush1.msra.mxu0 0.0
    %3860 = vmatprep.subr.mxu0 0.0
    %3861 = vmatpush1.msra.mxu0 0.0
    %3862 = vmatprep.subr.mxu0 0.0
    %3863 = vmatpush1.msra.mxu0 0.0
    %3864 = vmatprep.subr.mxu0 0.0
    %3865 = vmatpush1.msra.mxu0 0.0
    %3866 = vmatprep.subr.mxu0 0.0
    %3867 = vmatpush1.msra.mxu0 0.0
    %3868 = vmatprep.subr.mxu0 0.0
    %3869 = vmatpush1.msra.mxu0 0.0
    %3870 = vmatprep.subr.mxu0 0.0
    %3871 = vmatpush1.msra.mxu0 0.0
    %3872 = vmatprep.subr.mxu0 0.0
    %3873 = vmatpush1.msra.mxu0 0.0
    %3874 = vmatprep.subr.mxu0 0.0
    %3875 = vmatpush1.msra.mxu0 0.0
    %3876 = vmatprep.subr.mxu0 0.0
    %3877 = vmatpush1.msra.mxu0 0.0
    %3878 = vmatprep.subr.mxu0 0.0
    %3879 = vmatpush1.msra.mxu0 0.0
    %3880 = vmatprep.subr.mxu0 0.0
    %3881 = vmatpush1.msra.mxu0 0.0
    %3882 = vmatprep.subr.mxu0 0.0
    %3883 = vmatpush1.msra.mxu0 0.0
    %3884 = vmatprep.subr.mxu0 0.0
    %3885 = vmatpush1.msra.mxu0 0.0
    %3886 = vmatprep.subr.mxu0 0.0
    %3887 = vmatpush1.msra.mxu0 0.0
    %3888 = vmatprep.subr.mxu0 0.0
    %3889 = vmatpush1.msra.mxu0 0.0
    %3890 = vmatprep.subr.mxu0 0.0
    %3891 = vmatpush1.msra.mxu0 0.0
    %3892 = vmatprep.subr.mxu0 0.0
    %3893 = vmatpush1.msra.mxu0 0.0
    %3894 = vmatprep.subr.mxu0 0.0
    %3895 = vmatpush1.msra.mxu0 0.0
    %3896 = vmatprep.subr.mxu0 0.0
    %3897 = vmatpush1.msra.mxu0 0.0
    %3898 = vmatprep.subr.mxu0 0.0
    %3899 = vmatpush1.msra.mxu0 0.0
    %3900 = vmatprep.subr.mxu0 0.0
    %3901 = vmatpush1.msra.mxu0 0.0
    %3902 = vmatprep.subr.mxu0 0.0
    %3903 = vmatpush1.msra.mxu0 0.0
    %3904 = vmatprep.subr.mxu0 0.0
    %3905 = vmatpush1.msra.mxu0 0.0
    %3906 = vmatprep.subr.mxu0 0.0
    %3907 = vmatpush1.msra.mxu0 0.0
    %3908 = vmatprep.mubr.f32.mxu0 0.0
    %3909 = vmatmul.mubr.f32.gmra.mrb[0].mxu0 %v3842
    %v3910 = vpop.f32.mrb[0].mxu0
    %v3911 = vadd.f32 0.0, %v3910
    %v3912 = vpop.f32.mrb[0].mxu0
    %3913 = vdwg.mxu0
    %v3914 = vadd.f32 %v2417, %v3911
    %3916 = vrot.lane.b32.xlu0 %v3838, 32
    %v3917 = vpop.permute.xlu0 %3916
    %v3918 = vsel %vm366, %v3917, 0
    %3920 = vmatprep.subr.mxu0 0.0
    %3921 = vmatpush1.msra.mxu0 %v2267
    %3922 = vmatprep.subr.mxu0 0.0
    %3923 = vmatpush1.msra.mxu0 %v2268
    %3924 = vmatprep.subr.mxu0 0.0
    %3925 = vmatpush1.msra.mxu0 %v2269
    %3926 = vmatprep.subr.mxu0 0.0
    %3927 = vmatpush1.msra.mxu0 %v2270
    %3928 = vmatprep.subr.mxu0 0.0
    %3929 = vmatpush1.msra.mxu0 0.0
    %3930 = vmatprep.subr.mxu0 0.0
    %3931 = vmatpush1.msra.mxu0 0.0
    %3932 = vmatprep.subr.mxu0 0.0
    %3933 = vmatpush1.msra.mxu0 0.0
    %3934 = vmatprep.subr.mxu0 0.0
    %3935 = vmatpush1.msra.mxu0 0.0
    %3936 = vmatprep.subr.mxu0 0.0
    %3937 = vmatpush1.msra.mxu0 0.0
    %3938 = vmatprep.subr.mxu0 0.0
    %3939 = vmatpush1.msra.mxu0 0.0
    %3940 = vmatprep.subr.mxu0 0.0
    %3941 = vmatpush1.msra.mxu0 0.0
    %3942 = vmatprep.subr.mxu0 0.0
    %3943 = vmatpush1.msra.mxu0 0.0
    %3944 = vmatprep.subr.mxu0 0.0
    %3945 = vmatpush1.msra.mxu0 0.0
    %3946 = vmatprep.subr.mxu0 0.0
    %3947 = vmatpush1.msra.mxu0 0.0
    %3948 = vmatprep.subr.mxu0 0.0
    %3949 = vmatpush1.msra.mxu0 0.0
    %3950 = vmatprep.subr.mxu0 0.0
    %3951 = vmatpush1.msra.mxu0 0.0
    %3952 = vmatprep.subr.mxu0 0.0
    %3953 = vmatpush1.msra.mxu0 0.0
    %3954 = vmatprep.subr.mxu0 0.0
    %3955 = vmatpush1.msra.mxu0 0.0
    %3956 = vmatprep.subr.mxu0 0.0
    %3957 = vmatpush1.msra.mxu0 0.0
    %3958 = vmatprep.subr.mxu0 0.0
    %3959 = vmatpush1.msra.mxu0 0.0
    %3960 = vmatprep.subr.mxu0 0.0
    %3961 = vmatpush1.msra.mxu0 0.0
    %3962 = vmatprep.subr.mxu0 0.0
    %3963 = vmatpush1.msra.mxu0 0.0
    %3964 = vmatprep.subr.mxu0 0.0
    %3965 = vmatpush1.msra.mxu0 0.0
    %3966 = vmatprep.subr.mxu0 0.0
    %3967 = vmatpush1.msra.mxu0 0.0
    %3968 = vmatprep.subr.mxu0 0.0
    %3969 = vmatpush1.msra.mxu0 0.0
    %3970 = vmatprep.subr.mxu0 0.0
    %3971 = vmatpush1.msra.mxu0 0.0
    %3972 = vmatprep.subr.mxu0 0.0
    %3973 = vmatpush1.msra.mxu0 0.0
    %3974 = vmatprep.subr.mxu0 0.0
    %3975 = vmatpush1.msra.mxu0 0.0
    %3976 = vmatprep.subr.mxu0 0.0
    %3977 = vmatpush1.msra.mxu0 0.0
    %3978 = vmatprep.subr.mxu0 0.0
    %3979 = vmatpush1.msra.mxu0 0.0
    %3980 = vmatprep.subr.mxu0 0.0
    %3981 = vmatpush1.msra.mxu0 0.0
    %3982 = vmatprep.subr.mxu0 0.0
    %3983 = vmatpush1.msra.mxu0 0.0
    %3984 = vmatprep.mubr.f32.mxu0 0.0
    %3985 = vmatmul.mubr.f32.gmra.mrb[0].mxu0 %v3918
    %v3986 = vpop.f32.mrb[0].mxu0
    %v3987 = vadd.f32 0.0, %v3986
    %v3988 = vpop.f32.mrb[0].mxu0
    %3989 = vdwg.mxu0
    %v3990 = vadd.f32 %v2377, %v3987
    %v3991 = vxor.u32 %v3914, 2147483648
    %v3992 = vmul.f32 %v3991, 1.442695
    %v3993 = vpow.pop %v3992
    %v3994 = vadd.f32 %v3993, 1.0
    %v3995 = vrcp.pop %v3994
    %v3996 = vmul.f32 1.0, %v3995
    %v3997 = vtanh.pop %v3914
    %v3998 = vmul.f32 %v3996, %v3811
    %4000 = vrot.lane.b32.xlu0 %v3997, 64
    %v4001 = vpop.permute.xlu0 %4000
    %v4003 = vmul.f32 %v3996, %v4001
    %4005 = vrot.lane.b32.xlu0 %v4003, 32
    %v4006 = vpop.permute.xlu0 %4005
    %v4008 = vadd.f32 %v3998, %v4006
    %v4009 = vtanh.pop %v4008
    %4011 = vrot.lane.b32.xlu0 %v4009, 64
    %v4012 = vpop.permute.xlu0 %4011
    %v4014 = vmul.f32 %v3996, %v4012
    %v4015 = vsel %vm708, %v4014, %v3812
    %v4016 = vxor.u32 %v3990, 2147483648
    %v4017 = vmul.f32 %v4016, 1.442695
    %v4018 = vpow.pop %v4017
    %v4019 = vadd.f32 %v4018, 1.0
    %v4020 = vrcp.pop %v4019
    %v4021 = vmul.f32 1.0, %v4020
    %v4022 = vtanh.pop %v3990
    %v4023 = vmul.f32 %v4021, %v3837
    %4025 = vrot.lane.b32.xlu0 %v4022, 64
    %v4026 = vpop.permute.xlu0 %4025
    %v4028 = vmul.f32 %v4021, %v4026
    %4030 = vrot.lane.b32.xlu0 %v4028, 32
    %v4031 = vpop.permute.xlu0 %4030
    %v4033 = vadd.f32 %v4023, %v4031
    %v4034 = vtanh.pop %v4033
    %4036 = vrot.lane.b32.xlu0 %v4034, 64
    %v4037 = vpop.permute.xlu0 %4036
    %v4039 = vmul.f32 %v4021, %v4037
    %v4040 = vsel %vm677, %v4039, %v3838
    %4042 = vrot.lane.b32.xlu0 %v4015, 32
    %v4043 = vpop.permute.xlu0 %4042
    %4046 = vrot.lane.b32.xlu0 %v4040, 64
    %v4047 = vpop.permute.xlu0 %4046
    %v4049 = vsel %vm366, %v4043, %v4047
    %v4050 = vld [vmem:[%s11] sm:$0xff]
    %v4051 = vld [vmem:[%s11 + $0x8] sm:$0xff]
    %v4052 = vld [vmem:[%s11 + $0x10] sm:$0xff]
    %v4053 = vld [vmem:[%s11 + $0x18] sm:$0xff]
    %v4054 = vld [vmem:[%s11 + $0x20] sm:$0xff]
    %v4055 = vld [vmem:[%s11 + $0x28] sm:$0xff]
    %v4056 = vld [vmem:[%s11 + $0x30] sm:$0xff]
    %v4057 = vld [vmem:[%s11 + $0x38] sm:$0xff]
    %v4058 = vld [vmem:[#allocation8] sm:$0x1]
    %v4060 = vlaneseq
    %v4061 = vshrl.u32 %v4060, 7
    %v4062 = vsub.s32 0, %v4061
    %v4063 = vrot.slane %v4058, %v4062
    %v4066 = vsel %vm2283, %v4049, 0
    %4068 = vmatprep.subr.mxu0 0.0
    %4069 = vmatpush1.msra.mxu0 %v4050
    %4070 = vmatprep.subr.mxu0 0.0
    %4071 = vmatpush1.msra.mxu0 %v4051
    %4072 = vmatprep.subr.mxu0 0.0
    %4073 = vmatpush1.msra.mxu0 %v4052
    %4074 = vmatprep.subr.mxu0 0.0
    %4075 = vmatpush1.msra.mxu0 %v4053
    %4076 = vmatprep.subr.mxu0 0.0
    %4077 = vmatpush1.msra.mxu0 %v4054
    %4078 = vmatprep.subr.mxu0 0.0
    %4079 = vmatpush1.msra.mxu0 %v4055
    %4080 = vmatprep.subr.mxu0 0.0
    %4081 = vmatpush1.msra.mxu0 %v4056
    %4082 = vmatprep.subr.mxu0 0.0
    %4083 = vmatpush1.msra.mxu0 %v4057
    %4084 = vmatprep.subr.mxu0 0.0
    %4085 = vmatpush1.msra.mxu0 0.0
    %4086 = vmatprep.subr.mxu0 0.0
    %4087 = vmatpush1.msra.mxu0 0.0
    %4088 = vmatprep.subr.mxu0 0.0
    %4089 = vmatpush1.msra.mxu0 0.0
    %4090 = vmatprep.subr.mxu0 0.0
    %4091 = vmatpush1.msra.mxu0 0.0
    %4092 = vmatprep.subr.mxu0 0.0
    %4093 = vmatpush1.msra.mxu0 0.0
    %4094 = vmatprep.subr.mxu0 0.0
    %4095 = vmatpush1.msra.mxu0 0.0
    %4096 = vmatprep.subr.mxu0 0.0
    %4097 = vmatpush1.msra.mxu0 0.0
    %4098 = vmatprep.subr.mxu0 0.0
    %4099 = vmatpush1.msra.mxu0 0.0
    %4100 = vmatprep.subr.mxu0 0.0
    %4101 = vmatpush1.msra.mxu0 0.0
    %4102 = vmatprep.subr.mxu0 0.0
    %4103 = vmatpush1.msra.mxu0 0.0
    %4104 = vmatprep.subr.mxu0 0.0
    %4105 = vmatpush1.msra.mxu0 0.0
    %4106 = vmatprep.subr.mxu0 0.0
    %4107 = vmatpush1.msra.mxu0 0.0
    %4108 = vmatprep.subr.mxu0 0.0
    %4109 = vmatpush1.msra.mxu0 0.0
    %4110 = vmatprep.subr.mxu0 0.0
    %4111 = vmatpush1.msra.mxu0 0.0
    %4112 = vmatprep.subr.mxu0 0.0
    %4113 = vmatpush1.msra.mxu0 0.0
    %4114 = vmatprep.subr.mxu0 0.0
    %4115 = vmatpush1.msra.mxu0 0.0
    %4116 = vmatprep.subr.mxu0 0.0
    %4117 = vmatpush1.msra.mxu0 0.0
    %4118 = vmatprep.subr.mxu0 0.0
    %4119 = vmatpush1.msra.mxu0 0.0
    %4120 = vmatprep.subr.mxu0 0.0
    %4121 = vmatpush1.msra.mxu0 0.0
    %4122 = vmatprep.subr.mxu0 0.0
    %4123 = vmatpush1.msra.mxu0 0.0
    %4124 = vmatprep.subr.mxu0 0.0
    %4125 = vmatpush1.msra.mxu0 0.0
    %4126 = vmatprep.subr.mxu0 0.0
    %4127 = vmatpush1.msra.mxu0 0.0
    %4128 = vmatprep.subr.mxu0 0.0
    %4129 = vmatpush1.msra.mxu0 0.0
    %4130 = vmatprep.subr.mxu0 0.0
    %4131 = vmatpush1.msra.mxu0 0.0
    %4132 = vmatprep.mubr.f32.mxu0 0.0
    %4133 = vmatmul.mubr.f32.gmra.mrb[0].mxu0 %v4066
    %v4134 = vpop.f32.mrb[0].mxu0
    %v4135 = vadd.f32 %v4063, %v4134
    %v4136 = vpop.f32.mrb[0].mxu0
    %4137 = vdwg.mxu0
    %v4138 = vld [vmem:[%s13] sm:$0xff]
    %v4139 = vld [vmem:[%s13 + $0x8] sm:$0xff]
    %v4140 = vld [vmem:[%s13 + $0x10] sm:$0xff]
    %v4141 = vld [vmem:[%s13 + $0x18] sm:$0xff]
    %v4142 = vld [vmem:[#allocation2] sm:$0x1]
    %v4144 = vlaneseq
    %v4145 = vshrl.u32 %v4144, 7
    %v4146 = vsub.s32 0, %v4145
    %v4147 = vrot.slane %v4142, %v4146
    %v4150 = vsel %vm366, %v4135, 0
    %4152 = vmatprep.subr.mxu0 0.0
    %4153 = vmatpush1.msra.mxu0 %v4138
    %4154 = vmatprep.subr.mxu0 0.0
    %4155 = vmatpush1.msra.mxu0 %v4139
    %4156 = vmatprep.subr.mxu0 0.0
    %4157 = vmatpush1.msra.mxu0 %v4140
    %4158 = vmatprep.subr.mxu0 0.0
    %4159 = vmatpush1.msra.mxu0 %v4141
    %4160 = vmatprep.subr.mxu0 0.0
    %4161 = vmatpush1.msra.mxu0 0.0
    %4162 = vmatprep.subr.mxu0 0.0
    %4163 = vmatpush1.msra.mxu0 0.0
    %4164 = vmatprep.subr.mxu0 0.0
    %4165 = vmatpush1.msra.mxu0 0.0
    %4166 = vmatprep.subr.mxu0 0.0
    %4167 = vmatpush1.msra.mxu0 0.0
    %4168 = vmatprep.subr.mxu0 0.0
    %4169 = vmatpush1.msra.mxu0 0.0
    %4170 = vmatprep.subr.mxu0 0.0
    %4171 = vmatpush1.msra.mxu0 0.0
    %4172 = vmatprep.subr.mxu0 0.0
    %4173 = vmatpush1.msra.mxu0 0.0
    %4174 = vmatprep.subr.mxu0 0.0
    %4175 = vmatpush1.msra.mxu0 0.0
    %4176 = vmatprep.subr.mxu0 0.0
    %4177 = vmatpush1.msra.mxu0 0.0
    %4178 = vmatprep.subr.mxu0 0.0
    %4179 = vmatpush1.msra.mxu0 0.0
    %4180 = vmatprep.subr.mxu0 0.0
    %4181 = vmatpush1.msra.mxu0 0.0
    %4182 = vmatprep.subr.mxu0 0.0
    %4183 = vmatpush1.msra.mxu0 0.0
    %4184 = vmatprep.subr.mxu0 0.0
    %4185 = vmatpush1.msra.mxu0 0.0
    %4186 = vmatprep.subr.mxu0 0.0
    %4187 = vmatpush1.msra.mxu0 0.0
    %4188 = vmatprep.subr.mxu0 0.0
    %4189 = vmatpush1.msra.mxu0 0.0
    %4190 = vmatprep.subr.mxu0 0.0
    %4191 = vmatpush1.msra.mxu0 0.0
    %4192 = vmatprep.subr.mxu0 0.0
    %4193 = vmatpush1.msra.mxu0 0.0
    %4194 = vmatprep.subr.mxu0 0.0
    %4195 = vmatpush1.msra.mxu0 0.0
    %4196 = vmatprep.subr.mxu0 0.0
    %4197 = vmatpush1.msra.mxu0 0.0
    %4198 = vmatprep.subr.mxu0 0.0
    %4199 = vmatpush1.msra.mxu0 0.0
    %4200 = vmatprep.subr.mxu0 0.0
    %4201 = vmatpush1.msra.mxu0 0.0
    %4202 = vmatprep.subr.mxu0 0.0
    %4203 = vmatpush1.msra.mxu0 0.0
    %4204 = vmatprep.subr.mxu0 0.0
    %4205 = vmatpush1.msra.mxu0 0.0
    %4206 = vmatprep.subr.mxu0 0.0
    %4207 = vmatpush1.msra.mxu0 0.0
    %4208 = vmatprep.subr.mxu0 0.0
    %4209 = vmatpush1.msra.mxu0 0.0
    %4210 = vmatprep.subr.mxu0 0.0
    %4211 = vmatpush1.msra.mxu0 0.0
    %4212 = vmatprep.subr.mxu0 0.0
    %4213 = vmatpush1.msra.mxu0 0.0
    %4214 = vmatprep.subr.mxu0 0.0
    %4215 = vmatpush1.msra.mxu0 0.0
    %4216 = vmatprep.mubr.f32.mxu0 0.0
    %4217 = vmatmul.mubr.f32.gmra.mrb[0].mxu0 %v4150
    %v4218 = vpop.f32.mrb[0].mxu0
    %v4219 = vadd.f32 %v4147, %v4218
    %v4220 = vpop.f32.mrb[0].mxu0
    %4221 = vdwg.mxu0
    %vm4222 = vcmask 7168
    %4223 = vst.msk [vmem:[%s15] sm:$0xff] %vm4222, %v4219
    // Predicated region
    $region78: #{_lambda_.1} parent=1 // pred_check
      _
    $region79: #{_lambda_.1} parent=1 // pred_check_branch
      %4225 = sbr.rel (0) target = $region81
    $region80: #{_lambda_.1} parent=1 // pred_region
      _
    $region81: #{_lambda_.1} parent=1 // pred_fallthru
      _
    // Predicated region
    $region82: #{_lambda_.1} parent=1 // pred_check
      _
    $region83: #{_lambda_.1} parent=1 // pred_check_branch
      %4227 = sbr.rel (0) target = $region85
    $region84: #{_lambda_.1} parent=1 // pred_region
      _
    $region85: #{_lambda_.1} parent=1 // pred_fallthru
      _
    %4228 = vsyncpa [#allocation4], 1
    %4229 = vsyncpa [#allocation6], 1
    %4230 = vsyncpa [#allocation9], 1

</llo_original>
